<compile_context>
chip_gen: v6e
topology: v6e:2x2x1
jax: 0.10.0
libtpu: 0.0.40
codegen_flags: <defaults>
</compile_context>

<pallas_src>
import functools

import jax
import jax.numpy as jnp
from jax import lax
from jax.experimental import pallas as pl
from jax.experimental.pallas import tpu as pltpu

LANE = 128
NEG_INF = -1e30


def _pad_to(n, m):
    return ((n + m - 1) // m) * m


# --------------------------------- kernel ------------------------------------
def vqa_kernel(emb_q_ref, img_ref,
               enc_wih_ref, enc_whh_ref, enc_b_ref,
               img_w_ref, img_b_ref,
               headq_w_ref, headi_w_ref, head_b_ref,
               dec_tab_ref, dec_whh_ref,
               out_w_ref, out_b_ref,
               ans_ref, prog_ref,
               xg_ref,
               *, q_len, prog_len, hidden, c_pad, sos_token):
    f32 = jnp.float32
    bf16 = jnp.bfloat16
    TB = img_ref.shape[0]
    H = hidden
    H4 = 4 * H

    # ---------------- question encoder LSTM ----------------
    # Input projection hoisted out of the recurrence: ONE fused (Sq*TB,E)x(E,4H)
    # matmul over the whole sequence, staged into a single lane-dense scratch.
    x2 = emb_q_ref[0]                                     # (Sq*TB, E) bf16
    xg_ref[...] = jnp.dot(
        x2, enc_wih_ref[...], preferred_element_type=f32
    ).reshape(q_len, TB, H4)

    enc_whh = enc_whh_ref[...]                            # (H, 4H) bf16
    enc_b = enc_b_ref[...]                                # (1, 4H) f32 (b_ih + b_hh)

    def gates(pre, c):
        # fused preactivation (TB, 4H); static lane slices, gate order i|f|g|o
        i = jax.nn.sigmoid(pre[:, 0:H])
        f = jax.nn.sigmoid(pre[:, H:2 * H])
        g = jnp.tanh(pre[:, 2 * H:3 * H])
        o = jax.nn.sigmoid(pre[:, 3 * H:4 * H])
        c_new = f * c + i * g
        h_new = o * jnp.tanh(c_new)
        return h_new, c_new

    def enc_step(t, carry):
        h, c = carry
        pre = (xg_ref[t]
               + jnp.dot(h.astype(bf16), enc_whh, preferred_element_type=f32)
               + enc_b)
        return gates(pre, c)

    h0 = jnp.zeros((TB, H), f32)
    c0 = jnp.zeros((TB, H), f32)
    h_n, _ = lax.fori_loop(0, q_len, enc_step, (h0, c0), unroll=True)

    # ---------------- image branch ----------------
    img_enc = jnp.maximum(
        jnp.dot(img_ref[...], img_w_ref[...], preferred_element_type=f32)
        + img_b_ref[...], 0.0)
    # TODO(synk): nn.Dropout(0.5) reproduced as identity (inference semantics).

    h_nb = h_n.astype(bf16)
    img_encb = img_enc.astype(bf16)

    # ---------------- fused classifier + program_decoder_fc head ----------------
    # one pair of matmuls on concat([h_n, img_enc]); lanes [0:C_pad] = classifier,
    # lanes [C_pad:] = decoder h0 (ReLU only on the fc half).
    head = (jnp.dot(h_nb, headq_w_ref[...], preferred_element_type=f32)
            + jnp.dot(img_encb, headi_w_ref[...], preferred_element_type=f32)
            + head_b_ref[...])                            # (TB, C_pad + H)
    ans_ref[...] = head[:, :c_pad]
    dec_h0 = jnp.maximum(head[:, c_pad:], 0.0)            # (TB, H), stays in VMEM

    # ---------------- greedy program decoder ----------------
    dec_tab = dec_tab_ref[...]                            # (P_pad, 4H) bf16, bias folded
    dec_whh = dec_whh_ref[...]                            # (H, 4H) bf16
    out_w = out_w_ref[...]                                # (H, P_pad) bf16
    out_b = out_b_ref[...]                                # (1, P_pad) f32, pads = -1e30
    p_pad = out_w.shape[1]

    iota_out = lax.broadcasted_iota(jnp.int32, (TB, p_pad), 1)
    sel0 = (iota_out == sos_token).astype(bf16)           # one-hot SOS selector

    def dec_step(t, carry):
        h, c, sel = carry
        # gate preact = table[token] (embed->proj->W_ih + bias, precomputed) + h @ W_hh
        pre = (jnp.dot(sel, dec_tab, preferred_element_type=f32)
               + jnp.dot(h.astype(bf16), dec_whh, preferred_element_type=f32))
        h_new, c_new = gates(pre, c)

        logits = (jnp.dot(h_new.astype(bf16), out_w, preferred_element_type=f32)
                  + out_b)                                # (TB, P_pad) lane-dense store
        prog_ref[t] = logits

        # greedy argmax feedback as a direct one-hot: padded lanes at -1e30 never win;
        # exact float ties would select multiple rows, but never occur in practice.
        mx = jnp.max(logits, axis=1, keepdims=True)
        sel_new = (logits == mx).astype(bf16)
        return h_new, c_new, sel_new

    c0d = jnp.zeros((TB, H), f32)
    lax.fori_loop(0, prog_len, dec_step, (dec_h0, c0d, sel0), unroll=True)


# --------------------------------- wrapper -----------------------------------
def init_params(key, *, vocab, emb_dim, hidden, img_dim, num_classes, pvocab):
    ks = iter(jax.random.split(key, 32))

    def normal(shape, scale=0.1):
        return scale * jax.random.normal(next(ks), shape, jnp.float32)

    p = {}
    emb = normal((vocab, emb_dim))
    p["embedding"] = emb.at[0].set(0.0)                  # padding_idx=0
    # encoder LSTM
    p["enc_w_ih"] = normal((4 * hidden, emb_dim))
    p["enc_w_hh"] = normal((4 * hidden, hidden))
    p["enc_b"] = normal((4 * hidden,)) + normal((4 * hidden,))   # b_ih + b_hh
    # image fc
    p["img_w"] = normal((hidden, img_dim))
    p["img_b"] = normal((hidden,))
    # classifier
    p["cls_w"] = normal((num_classes, 2 * hidden))
    p["cls_b"] = normal((num_classes,))
    # program decoder fc
    p["fc_w"] = normal((hidden, 2 * hidden))
    p["fc_b"] = normal((hidden,))
    # program decoder projection (emb_dim -> 512)
    p["proj_w"] = normal((512, emb_dim))
    p["proj_b"] = normal((512,))
    # program decoder LSTM
    p["dec_w_ih"] = normal((4 * hidden, 512))
    p["dec_w_hh"] = normal((4 * hidden, hidden))
    p["dec_b"] = normal((4 * hidden,)) + normal((4 * hidden,))
    # program output head
    p["out_w"] = normal((pvocab, hidden))
    p["out_b"] = normal((pvocab,))
    return p


def vqa_forward(params, image_features, questions, *, hidden, pvocab,
                prog_seq_len, sos_token, batch_tile=8):
    # batch_tile: for large batches prefer a multiple of 16 (bf16 sublane packing)
    # and enough tiles (>=2) to shard across v7x's two TensorCores; on v5e/v6e use
    # the largest single tile that fits VMEM.
    f32 = jnp.float32
    bf16 = jnp.bfloat16
    B0, Sq = questions.shape
    V, E = params["embedding"].shape
    H = hidden
    H4 = 4 * H
    F = image_features.shape[1]
    C = params["cls_w"].shape[0]
    PV = pvocab
    T = prog_seq_len

    TB = batch_tile
    B_pad = _pad_to(max(B0, TB), TB)
    nT = B_pad // TB
    C_pad = _pad_to(C, LANE)                     # lane-dense classifier output
    P_pad = _pad_to(PV, LANE)                    # lane-dense program logits

    # ---- activation glue: embedding lookup, bf16, per-tile time-major flatten ----
    emb_q = jnp.take(params["embedding"], questions, axis=0)        # (B0, Sq, E)
    emb_tm = jnp.zeros((Sq, B_pad, E), bf16).at[:, :B0, :].set(
        jnp.transpose(emb_q, (1, 0, 2)).astype(bf16))
    # pre-flatten per batch tile so the kernel does one (Sq*TB,E)x(E,4H) matmul
    # with no in-kernel cast or relayout
    emb_flat = emb_tm.reshape(Sq, nT, TB, E).transpose(1, 0, 2, 3).reshape(
        nT, Sq * TB, E)
    img_p = jnp.zeros((B_pad, F), bf16).at[:B0].set(image_features.astype(bf16))

    # ---- weight prep: fused gates [in, 4H] (order i|f|g|o), bf16 dot operands ----
    enc_wih = params["enc_w_ih"].T.astype(bf16)                      # (E, 4H)
    enc_whh = params["enc_w_hh"].T.astype(bf16)                      # (H, 4H)
    enc_b = params["enc_b"].reshape(1, H4).astype(f32)               # (1, 4H)

    img_w = params["img_w"].T.astype(bf16)                           # (F, H)
    img_b = params["img_b"][None, :].astype(f32)

    # fused classifier || program_decoder_fc head: lanes [0:C]=cls, [C_pad:]=fc
    headq_w = jnp.zeros((H, C_pad + H), f32)
    headq_w = headq_w.at[:, :C].set(params["cls_w"][:, :H].T)
    headq_w = headq_w.at[:, C_pad:].set(params["fc_w"][:, :H].T)
    headi_w = jnp.zeros((H, C_pad + H), f32)
    headi_w = headi_w.at[:, :C].set(params["cls_w"][:, H:].T)
    headi_w = headi_w.at[:, C_pad:].set(params["fc_w"][:, H:].T)
    head_b = jnp.zeros((1, C_pad + H), f32)
    head_b = head_b.at[0, :C].set(params["cls_b"])
    head_b = head_b.at[0, C_pad:].set(params["fc_b"])
    headq_w = headq_w.astype(bf16)
    headi_w = headi_w.astype(bf16)

    # Decoder per-token fused-gate table: embedding[:PV] -> projection -> LSTM input
    # weights with (b_ih + b_hh) folded in.  Exact: the in-kernel one-hot matmul is
    # pure row selection.  Padded rows (>= PV) are zero and never selected.
    proj_tab = params["embedding"][:PV] @ params["proj_w"].T + params["proj_b"]
    dec_tab = jnp.zeros((P_pad, H4), f32).at[:PV].set(
        proj_tab @ params["dec_w_ih"].T + params["dec_b"]).astype(bf16)  # (P_pad, 4H)
    dec_whh = params["dec_w_hh"].T.astype(bf16)                      # (H, 4H)

    out_w = jnp.zeros((H, P_pad), f32).at[:, :PV].set(
        params["out_w"].T).astype(bf16)
    out_b = jnp.full((1, P_pad), NEG_INF, f32).at[0, :PV].set(params["out_b"])

    # ---- fused encoder+decoder kernel, parallel grid over batch tiles ----
    grid = (nT,)
    rep2 = lambda i: (0, 0)
    tile2 = lambda i: (i, 0)
    tile3 = lambda i: (0, i, 0)

    in_specs = [
        pl.BlockSpec((1, Sq * TB, E), lambda i: (i, 0, 0)),  # question embeddings
        pl.BlockSpec((TB, F), tile2),            # image features
        pl.BlockSpec((E, H4), rep2),             # enc W_ih (fused gates)
        pl.BlockSpec((H, H4), rep2),             # enc W_hh (fused gates)
        pl.BlockSpec((1, H4), rep2),             # enc bias (fused gates)
        pl.BlockSpec((F, H), rep2),              # image fc W
        pl.BlockSpec((1, H), rep2),              # image fc b
        pl.BlockSpec((H, C_pad + H), rep2),      # fused head W (question half)
        pl.BlockSpec((H, C_pad + H), rep2),      # fused head W (image half)
        pl.BlockSpec((1, C_pad + H), rep2),      # fused head bias
        pl.BlockSpec((P_pad, H4), rep2),         # decoder per-token gate table
        pl.BlockSpec((H, H4), rep2),             # decoder W_hh (fused gates)
        pl.BlockSpec((H, P_pad), rep2),          # program output W (padded)
        pl.BlockSpec((1, P_pad), rep2),          # program output b (pads = -1e30)
    ]
    out_specs = (
        pl.BlockSpec((TB, C_pad), tile2),
        pl.BlockSpec((T, TB, P_pad), tile3),
    )
    out_shape = (
        jax.ShapeDtypeStruct((B_pad, C_pad), f32),
        jax.ShapeDtypeStruct((T, B_pad, P_pad), f32),
    )

    ans_pad, prog_pad = pl.pallas_call(
        functools.partial(vqa_kernel, q_len=Sq, prog_len=T, hidden=H,
                          c_pad=C_pad, sos_token=sos_token),
        grid=grid,
        in_specs=in_specs,
        out_specs=out_specs,
        out_shape=out_shape,
        scratch_shapes=[pltpu.VMEM((Sq, TB, H4), f32)],   # merged xg scratch
        compiler_params=pltpu.CompilerParams(
            dimension_semantics=("parallel",),
            vmem_limit_bytes=32 * 1024 * 1024),
    )(emb_flat, img_p,
      enc_wih, enc_whh, enc_b,
      img_w, img_b,
      headq_w, headi_w, head_b,
      dec_tab, dec_whh,
      out_w, out_b)

    answer_output = ans_pad[:B0, :C]
    program_outputs = jnp.transpose(prog_pad, (1, 0, 2))[:B0, :, :PV]
    return answer_output, program_outputs


# ----------------------------------- main -------------------------------------
if __name__ == "__main__":
    B = 2
    vocab_size = 32
    embedding_dim = 16
    lstm_hidden_dim = 32
    image_feature_dim = 64
    num_classes = 16
    program_vocab_size = 32       # <= vocab_size so argmax tokens are valid emb ids
    program_seq_len = 8
    question_seq_len = 8
    sos_token, eos_token = 1, 2

    key = jax.random.PRNGKey(0)
    k_p, k_img, k_q = jax.random.split(key, 3)

    params = init_params(k_p, vocab=vocab_size, emb_dim=embedding_dim,
                         hidden=lstm_hidden_dim, img_dim=image_feature_dim,
                         num_classes=num_classes, pvocab=program_vocab_size)

    image_features = jax.random.normal(k_img, (B, image_feature_dim), jnp.float32)
    questions = jax.random.randint(k_q, (B, question_seq_len), 1, vocab_size,
                                   dtype=jnp.int32)

    fwd = jax.jit(functools.partial(vqa_forward,
                                    hidden=lstm_hidden_dim,
                                    pvocab=program_vocab_size,
                                    prog_seq_len=program_seq_len,
                                    sos_token=sos_token))
    answer_output, program_outputs = fwd(params, image_features, questions)
    jax.block_until_ready((answer_output, program_outputs))

    assert answer_output.shape == (B, num_classes)
    assert program_outputs.shape == (B, program_seq_len, program_vocab_size)
    print("KERNEL_OK")
</pallas_src>

<mosaic_0001>
module attributes {stable_mosaic.version = 11 : i64} {
  func.func @vqa_kernel(%arg0: i32, %arg1: memref<1x64x16xbf16, #tpu.memory_space<vmem>>, %arg2: memref<8x64xbf16, #tpu.memory_space<vmem>>, %arg3: memref<16x128xbf16, #tpu.memory_space<vmem>>, %arg4: memref<32x128xbf16, #tpu.memory_space<vmem>>, %arg5: memref<1x128xf32, #tpu.memory_space<vmem>>, %arg6: memref<64x32xbf16, #tpu.memory_space<vmem>>, %arg7: memref<1x32xf32, #tpu.memory_space<vmem>>, %arg8: memref<32x160xbf16, #tpu.memory_space<vmem>>, %arg9: memref<32x160xbf16, #tpu.memory_space<vmem>>, %arg10: memref<1x160xf32, #tpu.memory_space<vmem>>, %arg11: memref<128x128xbf16, #tpu.memory_space<vmem>>, %arg12: memref<32x128xbf16, #tpu.memory_space<vmem>>, %arg13: memref<32x128xbf16, #tpu.memory_space<vmem>>, %arg14: memref<1x128xf32, #tpu.memory_space<vmem>>, %arg15: memref<8x128xf32, #tpu.memory_space<vmem>>, %arg16: memref<8x8x128xf32, #tpu.memory_space<vmem>>, %arg17: memref<8x8x128xf32, #tpu.memory_space<vmem>>) attributes {dimension_semantics = [#tpu.dimension_semantics<parallel>], iteration_bounds = array<i64: 1>, scalar_prefetch = 0 : i64, scratch_operands = 1 : i64, tpu.core_type = #tpu.core_type<tc>, window_params = [{transform_indices = @transform_0, window_bounds = array<i64: 1, 64, 16>}, {transform_indices = @transform_1, window_bounds = array<i64: 8, 64>}, {pipeline_mode = #tpu.pipeline_mode<synchronous>, transform_indices = @transform_2, window_bounds = array<i64: 16, 128>}, {pipeline_mode = #tpu.pipeline_mode<synchronous>, transform_indices = @transform_3, window_bounds = array<i64: 32, 128>}, {pipeline_mode = #tpu.pipeline_mode<synchronous>, transform_indices = @transform_4, window_bounds = array<i64: 1, 128>}, {pipeline_mode = #tpu.pipeline_mode<synchronous>, transform_indices = @transform_5, window_bounds = array<i64: 64, 32>}, {pipeline_mode = #tpu.pipeline_mode<synchronous>, transform_indices = @transform_6, window_bounds = array<i64: 1, 32>}, {pipeline_mode = #tpu.pipeline_mode<synchronous>, transform_indices = @transform_7, window_bounds = array<i64: 32, 160>}, {pipeline_mode = #tpu.pipeline_mode<synchronous>, transform_indices = @transform_8, window_bounds = array<i64: 32, 160>}, {pipeline_mode = #tpu.pipeline_mode<synchronous>, transform_indices = @transform_9, window_bounds = array<i64: 1, 160>}, {pipeline_mode = #tpu.pipeline_mode<synchronous>, transform_indices = @transform_10, window_bounds = array<i64: 128, 128>}, {pipeline_mode = #tpu.pipeline_mode<synchronous>, transform_indices = @transform_11, window_bounds = array<i64: 32, 128>}, {pipeline_mode = #tpu.pipeline_mode<synchronous>, transform_indices = @transform_12, window_bounds = array<i64: 32, 128>}, {pipeline_mode = #tpu.pipeline_mode<synchronous>, transform_indices = @transform_13, window_bounds = array<i64: 1, 128>}, {transform_indices = @transform_14, window_bounds = array<i64: 8, 128>}, {transform_indices = @transform_15, window_bounds = array<i64: 8, 8, 128>}]} {
    %c0 = arith.constant 0 : index
    %c0_0 = arith.constant 0 : index
    %c0_1 = arith.constant 0 : index
    %0 = vector.load %arg1[%c0, %c0_0, %c0_1] : memref<1x64x16xbf16, #tpu.memory_space<vmem>>, vector<1x64x16xbf16>
    %1 = vector.shape_cast %0 : vector<1x64x16xbf16> to vector<64x16xbf16>
    %c0_2 = arith.constant 0 : index
    %c0_3 = arith.constant 0 : index
    %2 = vector.load %arg3[%c0_2, %c0_3] : memref<16x128xbf16, #tpu.memory_space<vmem>>, vector<16x128xbf16>
    %cst = arith.constant dense<0.000000e+00> : vector<64x128xf32>
    %3 = tpu.matmul %1, %2, %cst {dimension_numbers = #tpu.dot_dimension_numbers<[1], [0], [0], [1], [0, 0, 1, 1], [], []>} : vector<64x16xbf16>, vector<16x128xbf16>, vector<64x128xf32> -> vector<64x128xf32>
    %4 = vector.shape_cast %3 : vector<64x128xf32> to vector<8x8x128xf32>
    %c0_4 = arith.constant 0 : index
    %c0_5 = arith.constant 0 : index
    %c0_6 = arith.constant 0 : index
    %5 = vector.load %arg17[%c0_4, %c0_5, %c0_6] : memref<8x8x128xf32, #tpu.memory_space<vmem>>, vector<8x8x128xf32>
    tpu.vector_store %arg17[%c0_4, %c0_5, %c0_6], %4 {strides = array<i32>} : memref<8x8x128xf32, #tpu.memory_space<vmem>>, vector<8x8x128xf32>,
    %c0_7 = arith.constant 0 : index
    %c0_8 = arith.constant 0 : index
    %6 = vector.load %arg4[%c0_7, %c0_8] : memref<32x128xbf16, #tpu.memory_space<vmem>>, vector<32x128xbf16>
    %c0_9 = arith.constant 0 : index
    %c0_10 = arith.constant 0 : index
    %7 = vector.load %arg5[%c0_9, %c0_10] : memref<1x128xf32, #tpu.memory_space<vmem>>, vector<1x128xf32>
    %cst_11 = arith.constant 0.000000e+00 : f32
    %8 = vector.broadcast %cst_11 : f32 to vector<8x32xf32>
    %cst_12 = arith.constant 0.000000e+00 : f32
    %9 = vector.broadcast %cst_12 : f32 to vector<8x32xf32>
    %c0_i32 = arith.constant 0 : i32
    %10 = arith.index_cast %c0_i32 : i32 to index
    %c0_13 = arith.constant 0 : index
    %c0_14 = arith.constant 0 : index
    %11 = vector.load %arg17[%10, %c0_13, %c0_14] : memref<8x8x128xf32, #tpu.memory_space<vmem>>, vector<1x8x128xf32>
    %12 = vector.shape_cast %11 : vector<1x8x128xf32> to vector<8x128xf32>
    %13 = arith.truncf %8 : vector<8x32xf32> to vector<8x32xbf16>
    %cst_15 = arith.constant dense<0.000000e+00> : vector<8x128xf32>
    %14 = tpu.matmul %13, %6, %cst_15 {dimension_numbers = #tpu.dot_dimension_numbers<[1], [0], [0], [1], [0, 0, 1, 1], [], []>} : vector<8x32xbf16>, vector<32x128xbf16>, vector<8x128xf32> -> vector<8x128xf32>
    %15 = arith.addf %12, %14 : vector<8x128xf32>
    %16 = vector.broadcast %7 : vector<1x128xf32> to vector<8x128xf32>
    %17 = arith.addf %15, %16 : vector<8x128xf32>
    %18 = vector.extract_strided_slice %17 {offsets = [0, 0], sizes = [8, 32], strides = [1, 1]} : vector<8x128xf32> to vector<8x32xf32>
    %19 = arith.negf %18 : vector<8x32xf32>
    %20 = math.exp %19 : vector<8x32xf32>
    %cst_16 = arith.constant 1.000000e+00 : f32
    %21 = vector.broadcast %cst_16 : f32 to vector<8x32xf32>
    %22 = arith.addf %21, %20 : vector<8x32xf32>
    %23 = arith.divf %21, %22 : vector<8x32xf32>
    %24 = vector.extract_strided_slice %17 {offsets = [0, 32], sizes = [8, 32], strides = [1, 1]} : vector<8x128xf32> to vector<8x32xf32>
    %25 = arith.negf %24 : vector<8x32xf32>
    %26 = math.exp %25 : vector<8x32xf32>
    %cst_17 = arith.constant 1.000000e+00 : f32
    %27 = vector.broadcast %cst_17 : f32 to vector<8x32xf32>
    %28 = arith.addf %27, %26 : vector<8x32xf32>
    %29 = arith.divf %27, %28 : vector<8x32xf32>
    %30 = vector.extract_strided_slice %17 {offsets = [0, 64], sizes = [8, 32], strides = [1, 1]} : vector<8x128xf32> to vector<8x32xf32>
    %31 = math.tanh %30 : vector<8x32xf32>
    %32 = vector.extract_strided_slice %17 {offsets = [0, 96], sizes = [8, 32], strides = [1, 1]} : vector<8x128xf32> to vector<8x32xf32>
    %33 = arith.negf %32 : vector<8x32xf32>
    %34 = math.exp %33 : vector<8x32xf32>
    %cst_18 = arith.constant 1.000000e+00 : f32
    %35 = vector.broadcast %cst_18 : f32 to vector<8x32xf32>
    %36 = arith.addf %35, %34 : vector<8x32xf32>
    %37 = arith.divf %35, %36 : vector<8x32xf32>
    %38 = arith.mulf %29, %9 : vector<8x32xf32>
    %39 = arith.mulf %23, %31 : vector<8x32xf32>
    %40 = arith.addf %38, %39 : vector<8x32xf32>
    %41 = math.tanh %40 : vector<8x32xf32>
    %42 = arith.mulf %37, %41 : vector<8x32xf32>
    %c1_i32 = arith.constant 1 : i32
    %43 = arith.index_cast %c1_i32 : i32 to index
    %c0_19 = arith.constant 0 : index
    %c0_20 = arith.constant 0 : index
    %44 = vector.load %arg17[%43, %c0_19, %c0_20] : memref<8x8x128xf32, #tpu.memory_space<vmem>>, vector<1x8x128xf32>
    %45 = vector.shape_cast %44 : vector<1x8x128xf32> to vector<8x128xf32>
    %46 = arith.truncf %42 : vector<8x32xf32> to vector<8x32xbf16>
    %cst_21 = arith.constant dense<0.000000e+00> : vector<8x128xf32>
    %47 = tpu.matmul %46, %6, %cst_21 {dimension_numbers = #tpu.dot_dimension_numbers<[1], [0], [0], [1], [0, 0, 1, 1], [], []>} : vector<8x32xbf16>, vector<32x128xbf16>, vector<8x128xf32> -> vector<8x128xf32>
    %48 = arith.addf %45, %47 : vector<8x128xf32>
    %49 = vector.broadcast %7 : vector<1x128xf32> to vector<8x128xf32>
    %50 = arith.addf %48, %49 : vector<8x128xf32>
    %51 = vector.extract_strided_slice %50 {offsets = [0, 0], sizes = [8, 32], strides = [1, 1]} : vector<8x128xf32> to vector<8x32xf32>
    %52 = arith.negf %51 : vector<8x32xf32>
    %53 = math.exp %52 : vector<8x32xf32>
    %cst_22 = arith.constant 1.000000e+00 : f32
    %54 = vector.broadcast %cst_22 : f32 to vector<8x32xf32>
    %55 = arith.addf %54, %53 : vector<8x32xf32>
    %56 = arith.divf %54, %55 : vector<8x32xf32>
    %57 = vector.extract_strided_slice %50 {offsets = [0, 32], sizes = [8, 32], strides = [1, 1]} : vector<8x128xf32> to vector<8x32xf32>
    %58 = arith.negf %57 : vector<8x32xf32>
    %59 = math.exp %58 : vector<8x32xf32>
    %cst_23 = arith.constant 1.000000e+00 : f32
    %60 = vector.broadcast %cst_23 : f32 to vector<8x32xf32>
    %61 = arith.addf %60, %59 : vector<8x32xf32>
    %62 = arith.divf %60, %61 : vector<8x32xf32>
    %63 = vector.extract_strided_slice %50 {offsets = [0, 64], sizes = [8, 32], strides = [1, 1]} : vector<8x128xf32> to vector<8x32xf32>
    %64 = math.tanh %63 : vector<8x32xf32>
    %65 = vector.extract_strided_slice %50 {offsets = [0, 96], sizes = [8, 32], strides = [1, 1]} : vector<8x128xf32> to vector<8x32xf32>
    %66 = arith.negf %65 : vector<8x32xf32>
    %67 = math.exp %66 : vector<8x32xf32>
    %cst_24 = arith.constant 1.000000e+00 : f32
    %68 = vector.broadcast %cst_24 : f32 to vector<8x32xf32>
    %69 = arith.addf %68, %67 : vector<8x32xf32>
    %70 = arith.divf %68, %69 : vector<8x32xf32>
    %71 = arith.mulf %62, %40 : vector<8x32xf32>
    %72 = arith.mulf %56, %64 : vector<8x32xf32>
    %73 = arith.addf %71, %72 : vector<8x32xf32>
    %74 = math.tanh %73 : vector<8x32xf32>
    %75 = arith.mulf %70, %74 : vector<8x32xf32>
    %c2_i32 = arith.constant 2 : i32
    %76 = arith.index_cast %c2_i32 : i32 to index
    %c0_25 = arith.constant 0 : index
    %c0_26 = arith.constant 0 : index
    %77 = vector.load %arg17[%76, %c0_25, %c0_26] : memref<8x8x128xf32, #tpu.memory_space<vmem>>, vector<1x8x128xf32>
    %78 = vector.shape_cast %77 : vector<1x8x128xf32> to vector<8x128xf32>
    %79 = arith.truncf %75 : vector<8x32xf32> to vector<8x32xbf16>
    %cst_27 = arith.constant dense<0.000000e+00> : vector<8x128xf32>
    %80 = tpu.matmul %79, %6, %cst_27 {dimension_numbers = #tpu.dot_dimension_numbers<[1], [0], [0], [1], [0, 0, 1, 1], [], []>} : vector<8x32xbf16>, vector<32x128xbf16>, vector<8x128xf32> -> vector<8x128xf32>
    %81 = arith.addf %78, %80 : vector<8x128xf32>
    %82 = vector.broadcast %7 : vector<1x128xf32> to vector<8x128xf32>
    %83 = arith.addf %81, %82 : vector<8x128xf32>
    %84 = vector.extract_strided_slice %83 {offsets = [0, 0], sizes = [8, 32], strides = [1, 1]} : vector<8x128xf32> to vector<8x32xf32>
    %85 = arith.negf %84 : vector<8x32xf32>
    %86 = math.exp %85 : vector<8x32xf32>
    %cst_28 = arith.constant 1.000000e+00 : f32
    %87 = vector.broadcast %cst_28 : f32 to vector<8x32xf32>
    %88 = arith.addf %87, %86 : vector<8x32xf32>
    %89 = arith.divf %87, %88 : vector<8x32xf32>
    %90 = vector.extract_strided_slice %83 {offsets = [0, 32], sizes = [8, 32], strides = [1, 1]} : vector<8x128xf32> to vector<8x32xf32>
    %91 = arith.negf %90 : vector<8x32xf32>
    %92 = math.exp %91 : vector<8x32xf32>
    %cst_29 = arith.constant 1.000000e+00 : f32
    %93 = vector.broadcast %cst_29 : f32 to vector<8x32xf32>
    %94 = arith.addf %93, %92 : vector<8x32xf32>
    %95 = arith.divf %93, %94 : vector<8x32xf32>
    %96 = vector.extract_strided_slice %83 {offsets = [0, 64], sizes = [8, 32], strides = [1, 1]} : vector<8x128xf32> to vector<8x32xf32>
    %97 = math.tanh %96 : vector<8x32xf32>
    %98 = vector.extract_strided_slice %83 {offsets = [0, 96], sizes = [8, 32], strides = [1, 1]} : vector<8x128xf32> to vector<8x32xf32>
    %99 = arith.negf %98 : vector<8x32xf32>
    %100 = math.exp %99 : vector<8x32xf32>
    %cst_30 = arith.constant 1.000000e+00 : f32
    %101 = vector.broadcast %cst_30 : f32 to vector<8x32xf32>
    %102 = arith.addf %101, %100 : vector<8x32xf32>
    %103 = arith.divf %101, %102 : vector<8x32xf32>
    %104 = arith.mulf %95, %73 : vector<8x32xf32>
    %105 = arith.mulf %89, %97 : vector<8x32xf32>
    %106 = arith.addf %104, %105 : vector<8x32xf32>
    %107 = math.tanh %106 : vector<8x32xf32>
    %108 = arith.mulf %103, %107 : vector<8x32xf32>
    %c3_i32 = arith.constant 3 : i32
    %109 = arith.index_cast %c3_i32 : i32 to index
    %c0_31 = arith.constant 0 : index
    %c0_32 = arith.constant 0 : index
    %110 = vector.load %arg17[%109, %c0_31, %c0_32] : memref<8x8x128xf32, #tpu.memory_space<vmem>>, vector<1x8x128xf32>
    %111 = vector.shape_cast %110 : vector<1x8x128xf32> to vector<8x128xf32>
    %112 = arith.truncf %108 : vector<8x32xf32> to vector<8x32xbf16>
    %cst_33 = arith.constant dense<0.000000e+00> : vector<8x128xf32>
    %113 = tpu.matmul %112, %6, %cst_33 {dimension_numbers = #tpu.dot_dimension_numbers<[1], [0], [0], [1], [0, 0, 1, 1], [], []>} : vector<8x32xbf16>, vector<32x128xbf16>, vector<8x128xf32> -> vector<8x128xf32>
    %114 = arith.addf %111, %113 : vector<8x128xf32>
    %115 = vector.broadcast %7 : vector<1x128xf32> to vector<8x128xf32>
    %116 = arith.addf %114, %115 : vector<8x128xf32>
    %117 = vector.extract_strided_slice %116 {offsets = [0, 0], sizes = [8, 32], strides = [1, 1]} : vector<8x128xf32> to vector<8x32xf32>
    %118 = arith.negf %117 : vector<8x32xf32>
    %119 = math.exp %118 : vector<8x32xf32>
    %cst_34 = arith.constant 1.000000e+00 : f32
    %120 = vector.broadcast %cst_34 : f32 to vector<8x32xf32>
    %121 = arith.addf %120, %119 : vector<8x32xf32>
    %122 = arith.divf %120, %121 : vector<8x32xf32>
    %123 = vector.extract_strided_slice %116 {offsets = [0, 32], sizes = [8, 32], strides = [1, 1]} : vector<8x128xf32> to vector<8x32xf32>
    %124 = arith.negf %123 : vector<8x32xf32>
    %125 = math.exp %124 : vector<8x32xf32>
    %cst_35 = arith.constant 1.000000e+00 : f32
    %126 = vector.broadcast %cst_35 : f32 to vector<8x32xf32>
    %127 = arith.addf %126, %125 : vector<8x32xf32>
    %128 = arith.divf %126, %127 : vector<8x32xf32>
    %129 = vector.extract_strided_slice %116 {offsets = [0, 64], sizes = [8, 32], strides = [1, 1]} : vector<8x128xf32> to vector<8x32xf32>
    %130 = math.tanh %129 : vector<8x32xf32>
    %131 = vector.extract_strided_slice %116 {offsets = [0, 96], sizes = [8, 32], strides = [1, 1]} : vector<8x128xf32> to vector<8x32xf32>
    %132 = arith.negf %131 : vector<8x32xf32>
    %133 = math.exp %132 : vector<8x32xf32>
    %cst_36 = arith.constant 1.000000e+00 : f32
    %134 = vector.broadcast %cst_36 : f32 to vector<8x32xf32>
    %135 = arith.addf %134, %133 : vector<8x32xf32>
    %136 = arith.divf %134, %135 : vector<8x32xf32>
    %137 = arith.mulf %128, %106 : vector<8x32xf32>
    %138 = arith.mulf %122, %130 : vector<8x32xf32>
    %139 = arith.addf %137, %138 : vector<8x32xf32>
    %140 = math.tanh %139 : vector<8x32xf32>
    %141 = arith.mulf %136, %140 : vector<8x32xf32>
    %c4_i32 = arith.constant 4 : i32
    %142 = arith.index_cast %c4_i32 : i32 to index
    %c0_37 = arith.constant 0 : index
    %c0_38 = arith.constant 0 : index
    %143 = vector.load %arg17[%142, %c0_37, %c0_38] : memref<8x8x128xf32, #tpu.memory_space<vmem>>, vector<1x8x128xf32>
    %144 = vector.shape_cast %143 : vector<1x8x128xf32> to vector<8x128xf32>
    %145 = arith.truncf %141 : vector<8x32xf32> to vector<8x32xbf16>
    %cst_39 = arith.constant dense<0.000000e+00> : vector<8x128xf32>
    %146 = tpu.matmul %145, %6, %cst_39 {dimension_numbers = #tpu.dot_dimension_numbers<[1], [0], [0], [1], [0, 0, 1, 1], [], []>} : vector<8x32xbf16>, vector<32x128xbf16>, vector<8x128xf32> -> vector<8x128xf32>
    %147 = arith.addf %144, %146 : vector<8x128xf32>
    %148 = vector.broadcast %7 : vector<1x128xf32> to vector<8x128xf32>
    %149 = arith.addf %147, %148 : vector<8x128xf32>
    %150 = vector.extract_strided_slice %149 {offsets = [0, 0], sizes = [8, 32], strides = [1, 1]} : vector<8x128xf32> to vector<8x32xf32>
    %151 = arith.negf %150 : vector<8x32xf32>
    %152 = math.exp %151 : vector<8x32xf32>
    %cst_40 = arith.constant 1.000000e+00 : f32
    %153 = vector.broadcast %cst_40 : f32 to vector<8x32xf32>
    %154 = arith.addf %153, %152 : vector<8x32xf32>
    %155 = arith.divf %153, %154 : vector<8x32xf32>
    %156 = vector.extract_strided_slice %149 {offsets = [0, 32], sizes = [8, 32], strides = [1, 1]} : vector<8x128xf32> to vector<8x32xf32>
    %157 = arith.negf %156 : vector<8x32xf32>
    %158 = math.exp %157 : vector<8x32xf32>
    %cst_41 = arith.constant 1.000000e+00 : f32
    %159 = vector.broadcast %cst_41 : f32 to vector<8x32xf32>
    %160 = arith.addf %159, %158 : vector<8x32xf32>
    %161 = arith.divf %159, %160 : vector<8x32xf32>
    %162 = vector.extract_strided_slice %149 {offsets = [0, 64], sizes = [8, 32], strides = [1, 1]} : vector<8x128xf32> to vector<8x32xf32>
    %163 = math.tanh %162 : vector<8x32xf32>
    %164 = vector.extract_strided_slice %149 {offsets = [0, 96], sizes = [8, 32], strides = [1, 1]} : vector<8x128xf32> to vector<8x32xf32>
    %165 = arith.negf %164 : vector<8x32xf32>
    %166 = math.exp %165 : vector<8x32xf32>
    %cst_42 = arith.constant 1.000000e+00 : f32
    %167 = vector.broadcast %cst_42 : f32 to vector<8x32xf32>
    %168 = arith.addf %167, %166 : vector<8x32xf32>
    %169 = arith.divf %167, %168 : vector<8x32xf32>
    %170 = arith.mulf %161, %139 : vector<8x32xf32>
    %171 = arith.mulf %155, %163 : vector<8x32xf32>
    %172 = arith.addf %170, %171 : vector<8x32xf32>
    %173 = math.tanh %172 : vector<8x32xf32>
    %174 = arith.mulf %169, %173 : vector<8x32xf32>
    %c5_i32 = arith.constant 5 : i32
    %175 = arith.index_cast %c5_i32 : i32 to index
    %c0_43 = arith.constant 0 : index
    %c0_44 = arith.constant 0 : index
    %176 = vector.load %arg17[%175, %c0_43, %c0_44] : memref<8x8x128xf32, #tpu.memory_space<vmem>>, vector<1x8x128xf32>
    %177 = vector.shape_cast %176 : vector<1x8x128xf32> to vector<8x128xf32>
    %178 = arith.truncf %174 : vector<8x32xf32> to vector<8x32xbf16>
    %cst_45 = arith.constant dense<0.000000e+00> : vector<8x128xf32>
    %179 = tpu.matmul %178, %6, %cst_45 {dimension_numbers = #tpu.dot_dimension_numbers<[1], [0], [0], [1], [0, 0, 1, 1], [], []>} : vector<8x32xbf16>, vector<32x128xbf16>, vector<8x128xf32> -> vector<8x128xf32>
    %180 = arith.addf %177, %179 : vector<8x128xf32>
    %181 = vector.broadcast %7 : vector<1x128xf32> to vector<8x128xf32>
    %182 = arith.addf %180, %181 : vector<8x128xf32>
    %183 = vector.extract_strided_slice %182 {offsets = [0, 0], sizes = [8, 32], strides = [1, 1]} : vector<8x128xf32> to vector<8x32xf32>
    %184 = arith.negf %183 : vector<8x32xf32>
    %185 = math.exp %184 : vector<8x32xf32>
    %cst_46 = arith.constant 1.000000e+00 : f32
    %186 = vector.broadcast %cst_46 : f32 to vector<8x32xf32>
    %187 = arith.addf %186, %185 : vector<8x32xf32>
    %188 = arith.divf %186, %187 : vector<8x32xf32>
    %189 = vector.extract_strided_slice %182 {offsets = [0, 32], sizes = [8, 32], strides = [1, 1]} : vector<8x128xf32> to vector<8x32xf32>
    %190 = arith.negf %189 : vector<8x32xf32>
    %191 = math.exp %190 : vector<8x32xf32>
    %cst_47 = arith.constant 1.000000e+00 : f32
    %192 = vector.broadcast %cst_47 : f32 to vector<8x32xf32>
    %193 = arith.addf %192, %191 : vector<8x32xf32>
    %194 = arith.divf %192, %193 : vector<8x32xf32>
    %195 = vector.extract_strided_slice %182 {offsets = [0, 64], sizes = [8, 32], strides = [1, 1]} : vector<8x128xf32> to vector<8x32xf32>
    %196 = math.tanh %195 : vector<8x32xf32>
    %197 = vector.extract_strided_slice %182 {offsets = [0, 96], sizes = [8, 32], strides = [1, 1]} : vector<8x128xf32> to vector<8x32xf32>
    %198 = arith.negf %197 : vector<8x32xf32>
    %199 = math.exp %198 : vector<8x32xf32>
    %cst_48 = arith.constant 1.000000e+00 : f32
    %200 = vector.broadcast %cst_48 : f32 to vector<8x32xf32>
    %201 = arith.addf %200, %199 : vector<8x32xf32>
    %202 = arith.divf %200, %201 : vector<8x32xf32>
    %203 = arith.mulf %194, %172 : vector<8x32xf32>
    %204 = arith.mulf %188, %196 : vector<8x32xf32>
    %205 = arith.addf %203, %204 : vector<8x32xf32>
    %206 = math.tanh %205 : vector<8x32xf32>
    %207 = arith.mulf %202, %206 : vector<8x32xf32>
    %c6_i32 = arith.constant 6 : i32
    %208 = arith.index_cast %c6_i32 : i32 to index
    %c0_49 = arith.constant 0 : index
    %c0_50 = arith.constant 0 : index
    %209 = vector.load %arg17[%208, %c0_49, %c0_50] : memref<8x8x128xf32, #tpu.memory_space<vmem>>, vector<1x8x128xf32>
    %210 = vector.shape_cast %209 : vector<1x8x128xf32> to vector<8x128xf32>
    %211 = arith.truncf %207 : vector<8x32xf32> to vector<8x32xbf16>
    %cst_51 = arith.constant dense<0.000000e+00> : vector<8x128xf32>
    %212 = tpu.matmul %211, %6, %cst_51 {dimension_numbers = #tpu.dot_dimension_numbers<[1], [0], [0], [1], [0, 0, 1, 1], [], []>} : vector<8x32xbf16>, vector<32x128xbf16>, vector<8x128xf32> -> vector<8x128xf32>
    %213 = arith.addf %210, %212 : vector<8x128xf32>
    %214 = vector.broadcast %7 : vector<1x128xf32> to vector<8x128xf32>
    %215 = arith.addf %213, %214 : vector<8x128xf32>
    %216 = vector.extract_strided_slice %215 {offsets = [0, 0], sizes = [8, 32], strides = [1, 1]} : vector<8x128xf32> to vector<8x32xf32>
    %217 = arith.negf %216 : vector<8x32xf32>
    %218 = math.exp %217 : vector<8x32xf32>
    %cst_52 = arith.constant 1.000000e+00 : f32
    %219 = vector.broadcast %cst_52 : f32 to vector<8x32xf32>
    %220 = arith.addf %219, %218 : vector<8x32xf32>
    %221 = arith.divf %219, %220 : vector<8x32xf32>
    %222 = vector.extract_strided_slice %215 {offsets = [0, 32], sizes = [8, 32], strides = [1, 1]} : vector<8x128xf32> to vector<8x32xf32>
    %223 = arith.negf %222 : vector<8x32xf32>
    %224 = math.exp %223 : vector<8x32xf32>
    %cst_53 = arith.constant 1.000000e+00 : f32
    %225 = vector.broadcast %cst_53 : f32 to vector<8x32xf32>
    %226 = arith.addf %225, %224 : vector<8x32xf32>
    %227 = arith.divf %225, %226 : vector<8x32xf32>
    %228 = vector.extract_strided_slice %215 {offsets = [0, 64], sizes = [8, 32], strides = [1, 1]} : vector<8x128xf32> to vector<8x32xf32>
    %229 = math.tanh %228 : vector<8x32xf32>
    %230 = vector.extract_strided_slice %215 {offsets = [0, 96], sizes = [8, 32], strides = [1, 1]} : vector<8x128xf32> to vector<8x32xf32>
    %231 = arith.negf %230 : vector<8x32xf32>
    %232 = math.exp %231 : vector<8x32xf32>
    %cst_54 = arith.constant 1.000000e+00 : f32
    %233 = vector.broadcast %cst_54 : f32 to vector<8x32xf32>
    %234 = arith.addf %233, %232 : vector<8x32xf32>
    %235 = arith.divf %233, %234 : vector<8x32xf32>
    %236 = arith.mulf %227, %205 : vector<8x32xf32>
    %237 = arith.mulf %221, %229 : vector<8x32xf32>
    %238 = arith.addf %236, %237 : vector<8x32xf32>
    %239 = math.tanh %238 : vector<8x32xf32>
    %240 = arith.mulf %235, %239 : vector<8x32xf32>
    %c7_i32 = arith.constant 7 : i32
    %241 = arith.index_cast %c7_i32 : i32 to index
    %c0_55 = arith.constant 0 : index
    %c0_56 = arith.constant 0 : index
    %242 = vector.load %arg17[%241, %c0_55, %c0_56] : memref<8x8x128xf32, #tpu.memory_space<vmem>>, vector<1x8x128xf32>
    %243 = vector.shape_cast %242 : vector<1x8x128xf32> to vector<8x128xf32>
    %244 = arith.truncf %240 : vector<8x32xf32> to vector<8x32xbf16>
    %cst_57 = arith.constant dense<0.000000e+00> : vector<8x128xf32>
    %245 = tpu.matmul %244, %6, %cst_57 {dimension_numbers = #tpu.dot_dimension_numbers<[1], [0], [0], [1], [0, 0, 1, 1], [], []>} : vector<8x32xbf16>, vector<32x128xbf16>, vector<8x128xf32> -> vector<8x128xf32>
    %246 = arith.addf %243, %245 : vector<8x128xf32>
    %247 = vector.broadcast %7 : vector<1x128xf32> to vector<8x128xf32>
    %248 = arith.addf %246, %247 : vector<8x128xf32>
    %249 = vector.extract_strided_slice %248 {offsets = [0, 0], sizes = [8, 32], strides = [1, 1]} : vector<8x128xf32> to vector<8x32xf32>
    %250 = arith.negf %249 : vector<8x32xf32>
    %251 = math.exp %250 : vector<8x32xf32>
    %cst_58 = arith.constant 1.000000e+00 : f32
    %252 = vector.broadcast %cst_58 : f32 to vector<8x32xf32>
    %253 = arith.addf %252, %251 : vector<8x32xf32>
    %254 = arith.divf %252, %253 : vector<8x32xf32>
    %255 = vector.extract_strided_slice %248 {offsets = [0, 32], sizes = [8, 32], strides = [1, 1]} : vector<8x128xf32> to vector<8x32xf32>
    %256 = arith.negf %255 : vector<8x32xf32>
    %257 = math.exp %256 : vector<8x32xf32>
    %cst_59 = arith.constant 1.000000e+00 : f32
    %258 = vector.broadcast %cst_59 : f32 to vector<8x32xf32>
    %259 = arith.addf %258, %257 : vector<8x32xf32>
    %260 = arith.divf %258, %259 : vector<8x32xf32>
    %261 = vector.extract_strided_slice %248 {offsets = [0, 64], sizes = [8, 32], strides = [1, 1]} : vector<8x128xf32> to vector<8x32xf32>
    %262 = math.tanh %261 : vector<8x32xf32>
    %263 = vector.extract_strided_slice %248 {offsets = [0, 96], sizes = [8, 32], strides = [1, 1]} : vector<8x128xf32> to vector<8x32xf32>
    %264 = arith.negf %263 : vector<8x32xf32>
    %265 = math.exp %264 : vector<8x32xf32>
    %cst_60 = arith.constant 1.000000e+00 : f32
    %266 = vector.broadcast %cst_60 : f32 to vector<8x32xf32>
    %267 = arith.addf %266, %265 : vector<8x32xf32>
    %268 = arith.divf %266, %267 : vector<8x32xf32>
    %269 = arith.mulf %260, %238 : vector<8x32xf32>
    %270 = arith.mulf %254, %262 : vector<8x32xf32>
    %271 = arith.addf %269, %270 : vector<8x32xf32>
    %272 = math.tanh %271 : vector<8x32xf32>
    %273 = arith.mulf %268, %272 : vector<8x32xf32>
    %c8_i32 = arith.constant 8 : i32
    %c0_61 = arith.constant 0 : index
    %c0_62 = arith.constant 0 : index
    %274 = vector.load %arg2[%c0_61, %c0_62] : memref<8x64xbf16, #tpu.memory_space<vmem>>, vector<8x64xbf16>
    %c0_63 = arith.constant 0 : index
    %c0_64 = arith.constant 0 : index
    %275 = vector.load %arg6[%c0_63, %c0_64] : memref<64x32xbf16, #tpu.memory_space<vmem>>, vector<64x32xbf16>
    %cst_65 = arith.constant dense<0.000000e+00> : vector<8x32xf32>
    %276 = tpu.matmul %274, %275, %cst_65 {dimension_numbers = #tpu.dot_dimension_numbers<[1], [0], [0], [1], [0, 0, 1, 1], [], []>} : vector<8x64xbf16>, vector<64x32xbf16>, vector<8x32xf32> -> vector<8x32xf32>
    %c0_66 = arith.constant 0 : index
    %c0_67 = arith.constant 0 : index
    %277 = vector.load %arg7[%c0_66, %c0_67] : memref<1x32xf32, #tpu.memory_space<vmem>>, vector<1x32xf32>
    %278 = vector.broadcast %277 : vector<1x32xf32> to vector<8x32xf32>
    %279 = arith.addf %276, %278 : vector<8x32xf32>
    %cst_68 = arith.constant 0.000000e+00 : f32
    %280 = vector.broadcast %cst_68 : f32 to vector<8x32xf32>
    %281 = arith.maximumf %279, %280 : vector<8x32xf32>
    %282 = arith.truncf %273 : vector<8x32xf32> to vector<8x32xbf16>
    %283 = arith.truncf %281 : vector<8x32xf32> to vector<8x32xbf16>
    %c0_69 = arith.constant 0 : index
    %c0_70 = arith.constant 0 : index
    %284 = vector.load %arg8[%c0_69, %c0_70] : memref<32x160xbf16, #tpu.memory_space<vmem>>, vector<32x160xbf16>
    %cst_71 = arith.constant dense<0.000000e+00> : vector<8x160xf32>
    %285 = tpu.matmul %282, %284, %cst_71 {dimension_numbers = #tpu.dot_dimension_numbers<[1], [0], [0], [1], [0, 0, 1, 1], [], []>} : vector<8x32xbf16>, vector<32x160xbf16>, vector<8x160xf32> -> vector<8x160xf32>
    %c0_72 = arith.constant 0 : index
    %c0_73 = arith.constant 0 : index
    %286 = vector.load %arg9[%c0_72, %c0_73] : memref<32x160xbf16, #tpu.memory_space<vmem>>, vector<32x160xbf16>
    %cst_74 = arith.constant dense<0.000000e+00> : vector<8x160xf32>
    %287 = tpu.matmul %283, %286, %cst_74 {dimension_numbers = #tpu.dot_dimension_numbers<[1], [0], [0], [1], [0, 0, 1, 1], [], []>} : vector<8x32xbf16>, vector<32x160xbf16>, vector<8x160xf32> -> vector<8x160xf32>
    %288 = arith.addf %285, %287 : vector<8x160xf32>
    %c0_75 = arith.constant 0 : index
    %c0_76 = arith.constant 0 : index
    %289 = vector.load %arg10[%c0_75, %c0_76] : memref<1x160xf32, #tpu.memory_space<vmem>>, vector<1x160xf32>
    %290 = vector.broadcast %289 : vector<1x160xf32> to vector<8x160xf32>
    %291 = arith.addf %288, %290 : vector<8x160xf32>
    %292 = vector.extract_strided_slice %291 {offsets = [0, 0], sizes = [8, 128], strides = [1, 1]} : vector<8x160xf32> to vector<8x128xf32>
    %c0_77 = arith.constant 0 : index
    %c0_78 = arith.constant 0 : index
    %293 = vector.load %arg15[%c0_77, %c0_78] : memref<8x128xf32, #tpu.memory_space<vmem>>, vector<8x128xf32>
    tpu.vector_store %arg15[%c0_77, %c0_78], %292 {strides = array<i32>} : memref<8x128xf32, #tpu.memory_space<vmem>>, vector<8x128xf32>,
    %294 = vector.extract_strided_slice %291 {offsets = [0, 128], sizes = [8, 32], strides = [1, 1]} : vector<8x160xf32> to vector<8x32xf32>
    %cst_79 = arith.constant 0.000000e+00 : f32
    %295 = vector.broadcast %cst_79 : f32 to vector<8x32xf32>
    %296 = arith.maximumf %294, %295 : vector<8x32xf32>
    %c0_80 = arith.constant 0 : index
    %c0_81 = arith.constant 0 : index
    %297 = vector.load %arg11[%c0_80, %c0_81] : memref<128x128xbf16, #tpu.memory_space<vmem>>, vector<128x128xbf16>
    %c0_82 = arith.constant 0 : index
    %c0_83 = arith.constant 0 : index
    %298 = vector.load %arg12[%c0_82, %c0_83] : memref<32x128xbf16, #tpu.memory_space<vmem>>, vector<32x128xbf16>
    %c0_84 = arith.constant 0 : index
    %c0_85 = arith.constant 0 : index
    %299 = vector.load %arg13[%c0_84, %c0_85] : memref<32x128xbf16, #tpu.memory_space<vmem>>, vector<32x128xbf16>
    %c0_86 = arith.constant 0 : index
    %c0_87 = arith.constant 0 : index
    %300 = vector.load %arg14[%c0_86, %c0_87] : memref<1x128xf32, #tpu.memory_space<vmem>>, vector<1x128xf32>
    %301 = tpu.iota {dimensions = array<i32: 1>} : vector<8x128xi32>
    %c1_i32_88 = arith.constant 1 : i32
    %302 = vector.broadcast %c1_i32_88 : i32 to vector<8x128xi32>
    %303 = arith.cmpi eq, %301, %302 : vector<8x128xi32>
    %304 = arith.extui %303 : vector<8x128xi1> to vector<8x128xi32>
    %305 = arith.sitofp %304 : vector<8x128xi32> to vector<8x128xf32>
    %306 = arith.truncf %305 : vector<8x128xf32> to vector<8x128xbf16>
    %cst_89 = arith.constant 0.000000e+00 : f32
    %307 = vector.broadcast %cst_89 : f32 to vector<8x32xf32>
    %c0_i32_90 = arith.constant 0 : i32
    %cst_91 = arith.constant dense<0.000000e+00> : vector<8x128xf32>
    %308 = tpu.matmul %306, %297, %cst_91 {dimension_numbers = #tpu.dot_dimension_numbers<[1], [0], [0], [1], [0, 0, 1, 1], [], []>} : vector<8x128xbf16>, vector<128x128xbf16>, vector<8x128xf32> -> vector<8x128xf32>
    %309 = arith.truncf %296 : vector<8x32xf32> to vector<8x32xbf16>
    %cst_92 = arith.constant dense<0.000000e+00> : vector<8x128xf32>
    %310 = tpu.matmul %309, %298, %cst_92 {dimension_numbers = #tpu.dot_dimension_numbers<[1], [0], [0], [1], [0, 0, 1, 1], [], []>} : vector<8x32xbf16>, vector<32x128xbf16>, vector<8x128xf32> -> vector<8x128xf32>
    %311 = arith.addf %308, %310 : vector<8x128xf32>
    %312 = vector.extract_strided_slice %311 {offsets = [0, 0], sizes = [8, 32], strides = [1, 1]} : vector<8x128xf32> to vector<8x32xf32>
    %313 = arith.negf %312 : vector<8x32xf32>
    %314 = math.exp %313 : vector<8x32xf32>
    %cst_93 = arith.constant 1.000000e+00 : f32
    %315 = vector.broadcast %cst_93 : f32 to vector<8x32xf32>
    %316 = arith.addf %315, %314 : vector<8x32xf32>
    %317 = arith.divf %315, %316 : vector<8x32xf32>
    %318 = vector.extract_strided_slice %311 {offsets = [0, 32], sizes = [8, 32], strides = [1, 1]} : vector<8x128xf32> to vector<8x32xf32>
    %319 = arith.negf %318 : vector<8x32xf32>
    %320 = math.exp %319 : vector<8x32xf32>
    %cst_94 = arith.constant 1.000000e+00 : f32
    %321 = vector.broadcast %cst_94 : f32 to vector<8x32xf32>
    %322 = arith.addf %321, %320 : vector<8x32xf32>
    %323 = arith.divf %321, %322 : vector<8x32xf32>
    %324 = vector.extract_strided_slice %311 {offsets = [0, 64], sizes = [8, 32], strides = [1, 1]} : vector<8x128xf32> to vector<8x32xf32>
    %325 = math.tanh %324 : vector<8x32xf32>
    %326 = vector.extract_strided_slice %311 {offsets = [0, 96], sizes = [8, 32], strides = [1, 1]} : vector<8x128xf32> to vector<8x32xf32>
    %327 = arith.negf %326 : vector<8x32xf32>
    %328 = math.exp %327 : vector<8x32xf32>
    %cst_95 = arith.constant 1.000000e+00 : f32
    %329 = vector.broadcast %cst_95 : f32 to vector<8x32xf32>
    %330 = arith.addf %329, %328 : vector<8x32xf32>
    %331 = arith.divf %329, %330 : vector<8x32xf32>
    %332 = arith.mulf %323, %307 : vector<8x32xf32>
    %333 = arith.mulf %317, %325 : vector<8x32xf32>
    %334 = arith.addf %332, %333 : vector<8x32xf32>
    %335 = math.tanh %334 : vector<8x32xf32>
    %336 = arith.mulf %331, %335 : vector<8x32xf32>
    %337 = arith.truncf %336 : vector<8x32xf32> to vector<8x32xbf16>
    %cst_96 = arith.constant dense<0.000000e+00> : vector<8x128xf32>
    %338 = tpu.matmul %337, %299, %cst_96 {dimension_numbers = #tpu.dot_dimension_numbers<[1], [0], [0], [1], [0, 0, 1, 1], [], []>} : vector<8x32xbf16>, vector<32x128xbf16>, vector<8x128xf32> -> vector<8x128xf32>
    %339 = vector.broadcast %300 : vector<1x128xf32> to vector<8x128xf32>
    %340 = arith.addf %338, %339 : vector<8x128xf32>
    %341 = arith.index_cast %c0_i32_90 : i32 to index
    %c0_97 = arith.constant 0 : index
    %c0_98 = arith.constant 0 : index
    %342 = vector.load %arg16[%341, %c0_97, %c0_98] : memref<8x8x128xf32, #tpu.memory_space<vmem>>, vector<1x8x128xf32>
    %343 = vector.shape_cast %342 : vector<1x8x128xf32> to vector<8x128xf32>
    %344 = vector.shape_cast %340 : vector<8x128xf32> to vector<1x8x128xf32>
    tpu.vector_store %arg16[%341, %c0_97, %c0_98], %344 {strides = array<i32>} : memref<8x8x128xf32, #tpu.memory_space<vmem>>, vector<1x8x128xf32>,
    %cst_99 = arith.constant dense<0xFF800000> : vector<8xf32>
    %345 = vector.multi_reduction <maximumf>, %340, %cst_99 [1] : vector<8x128xf32> to vector<8xf32>
    %346 = vector.shape_cast %345 : vector<8xf32> to vector<8x1xf32>
    %347 = vector.broadcast %346 : vector<8x1xf32> to vector<8x128xf32>
    %348 = arith.cmpf oeq, %340, %347 : vector<8x128xf32>
    %349 = arith.extui %348 : vector<8x128xi1> to vector<8x128xi32>
    %350 = arith.sitofp %349 : vector<8x128xi32> to vector<8x128xf32>
    %351 = arith.truncf %350 : vector<8x128xf32> to vector<8x128xbf16>
    %c1_i32_100 = arith.constant 1 : i32
    %cst_101 = arith.constant dense<0.000000e+00> : vector<8x128xf32>
    %352 = tpu.matmul %351, %297, %cst_101 {dimension_numbers = #tpu.dot_dimension_numbers<[1], [0], [0], [1], [0, 0, 1, 1], [], []>} : vector<8x128xbf16>, vector<128x128xbf16>, vector<8x128xf32> -> vector<8x128xf32>
    %353 = arith.truncf %336 : vector<8x32xf32> to vector<8x32xbf16>
    %cst_102 = arith.constant dense<0.000000e+00> : vector<8x128xf32>
    %354 = tpu.matmul %353, %298, %cst_102 {dimension_numbers = #tpu.dot_dimension_numbers<[1], [0], [0], [1], [0, 0, 1, 1], [], []>} : vector<8x32xbf16>, vector<32x128xbf16>, vector<8x128xf32> -> vector<8x128xf32>
    %355 = arith.addf %352, %354 : vector<8x128xf32>
    %356 = vector.extract_strided_slice %355 {offsets = [0, 0], sizes = [8, 32], strides = [1, 1]} : vector<8x128xf32> to vector<8x32xf32>
    %357 = arith.negf %356 : vector<8x32xf32>
    %358 = math.exp %357 : vector<8x32xf32>
    %cst_103 = arith.constant 1.000000e+00 : f32
    %359 = vector.broadcast %cst_103 : f32 to vector<8x32xf32>
    %360 = arith.addf %359, %358 : vector<8x32xf32>
    %361 = arith.divf %359, %360 : vector<8x32xf32>
    %362 = vector.extract_strided_slice %355 {offsets = [0, 32], sizes = [8, 32], strides = [1, 1]} : vector<8x128xf32> to vector<8x32xf32>
    %363 = arith.negf %362 : vector<8x32xf32>
    %364 = math.exp %363 : vector<8x32xf32>
    %cst_104 = arith.constant 1.000000e+00 : f32
    %365 = vector.broadcast %cst_104 : f32 to vector<8x32xf32>
    %366 = arith.addf %365, %364 : vector<8x32xf32>
    %367 = arith.divf %365, %366 : vector<8x32xf32>
    %368 = vector.extract_strided_slice %355 {offsets = [0, 64], sizes = [8, 32], strides = [1, 1]} : vector<8x128xf32> to vector<8x32xf32>
    %369 = math.tanh %368 : vector<8x32xf32>
    %370 = vector.extract_strided_slice %355 {offsets = [0, 96], sizes = [8, 32], strides = [1, 1]} : vector<8x128xf32> to vector<8x32xf32>
    %371 = arith.negf %370 : vector<8x32xf32>
    %372 = math.exp %371 : vector<8x32xf32>
    %cst_105 = arith.constant 1.000000e+00 : f32
    %373 = vector.broadcast %cst_105 : f32 to vector<8x32xf32>
    %374 = arith.addf %373, %372 : vector<8x32xf32>
    %375 = arith.divf %373, %374 : vector<8x32xf32>
    %376 = arith.mulf %367, %334 : vector<8x32xf32>
    %377 = arith.mulf %361, %369 : vector<8x32xf32>
    %378 = arith.addf %376, %377 : vector<8x32xf32>
    %379 = math.tanh %378 : vector<8x32xf32>
    %380 = arith.mulf %375, %379 : vector<8x32xf32>
    %381 = arith.truncf %380 : vector<8x32xf32> to vector<8x32xbf16>
    %cst_106 = arith.constant dense<0.000000e+00> : vector<8x128xf32>
    %382 = tpu.matmul %381, %299, %cst_106 {dimension_numbers = #tpu.dot_dimension_numbers<[1], [0], [0], [1], [0, 0, 1, 1], [], []>} : vector<8x32xbf16>, vector<32x128xbf16>, vector<8x128xf32> -> vector<8x128xf32>
    %383 = vector.broadcast %300 : vector<1x128xf32> to vector<8x128xf32>
    %384 = arith.addf %382, %383 : vector<8x128xf32>
    %385 = arith.index_cast %c1_i32_100 : i32 to index
    %c0_107 = arith.constant 0 : index
    %c0_108 = arith.constant 0 : index
    %386 = vector.load %arg16[%385, %c0_107, %c0_108] : memref<8x8x128xf32, #tpu.memory_space<vmem>>, vector<1x8x128xf32>
    %387 = vector.shape_cast %386 : vector<1x8x128xf32> to vector<8x128xf32>
    %388 = vector.shape_cast %384 : vector<8x128xf32> to vector<1x8x128xf32>
    tpu.vector_store %arg16[%385, %c0_107, %c0_108], %388 {strides = array<i32>} : memref<8x8x128xf32, #tpu.memory_space<vmem>>, vector<1x8x128xf32>,
    %cst_109 = arith.constant dense<0xFF800000> : vector<8xf32>
    %389 = vector.multi_reduction <maximumf>, %384, %cst_109 [1] : vector<8x128xf32> to vector<8xf32>
    %390 = vector.shape_cast %389 : vector<8xf32> to vector<8x1xf32>
    %391 = vector.broadcast %390 : vector<8x1xf32> to vector<8x128xf32>
    %392 = arith.cmpf oeq, %384, %391 : vector<8x128xf32>
    %393 = arith.extui %392 : vector<8x128xi1> to vector<8x128xi32>
    %394 = arith.sitofp %393 : vector<8x128xi32> to vector<8x128xf32>
    %395 = arith.truncf %394 : vector<8x128xf32> to vector<8x128xbf16>
    %c2_i32_110 = arith.constant 2 : i32
    %cst_111 = arith.constant dense<0.000000e+00> : vector<8x128xf32>
    %396 = tpu.matmul %395, %297, %cst_111 {dimension_numbers = #tpu.dot_dimension_numbers<[1], [0], [0], [1], [0, 0, 1, 1], [], []>} : vector<8x128xbf16>, vector<128x128xbf16>, vector<8x128xf32> -> vector<8x128xf32>
    %397 = arith.truncf %380 : vector<8x32xf32> to vector<8x32xbf16>
    %cst_112 = arith.constant dense<0.000000e+00> : vector<8x128xf32>
    %398 = tpu.matmul %397, %298, %cst_112 {dimension_numbers = #tpu.dot_dimension_numbers<[1], [0], [0], [1], [0, 0, 1, 1], [], []>} : vector<8x32xbf16>, vector<32x128xbf16>, vector<8x128xf32> -> vector<8x128xf32>
    %399 = arith.addf %396, %398 : vector<8x128xf32>
    %400 = vector.extract_strided_slice %399 {offsets = [0, 0], sizes = [8, 32], strides = [1, 1]} : vector<8x128xf32> to vector<8x32xf32>
    %401 = arith.negf %400 : vector<8x32xf32>
    %402 = math.exp %401 : vector<8x32xf32>
    %cst_113 = arith.constant 1.000000e+00 : f32
    %403 = vector.broadcast %cst_113 : f32 to vector<8x32xf32>
    %404 = arith.addf %403, %402 : vector<8x32xf32>
    %405 = arith.divf %403, %404 : vector<8x32xf32>
    %406 = vector.extract_strided_slice %399 {offsets = [0, 32], sizes = [8, 32], strides = [1, 1]} : vector<8x128xf32> to vector<8x32xf32>
    %407 = arith.negf %406 : vector<8x32xf32>
    %408 = math.exp %407 : vector<8x32xf32>
    %cst_114 = arith.constant 1.000000e+00 : f32
    %409 = vector.broadcast %cst_114 : f32 to vector<8x32xf32>
    %410 = arith.addf %409, %408 : vector<8x32xf32>
    %411 = arith.divf %409, %410 : vector<8x32xf32>
    %412 = vector.extract_strided_slice %399 {offsets = [0, 64], sizes = [8, 32], strides = [1, 1]} : vector<8x128xf32> to vector<8x32xf32>
    %413 = math.tanh %412 : vector<8x32xf32>
    %414 = vector.extract_strided_slice %399 {offsets = [0, 96], sizes = [8, 32], strides = [1, 1]} : vector<8x128xf32> to vector<8x32xf32>
    %415 = arith.negf %414 : vector<8x32xf32>
    %416 = math.exp %415 : vector<8x32xf32>
    %cst_115 = arith.constant 1.000000e+00 : f32
    %417 = vector.broadcast %cst_115 : f32 to vector<8x32xf32>
    %418 = arith.addf %417, %416 : vector<8x32xf32>
    %419 = arith.divf %417, %418 : vector<8x32xf32>
    %420 = arith.mulf %411, %378 : vector<8x32xf32>
    %421 = arith.mulf %405, %413 : vector<8x32xf32>
    %422 = arith.addf %420, %421 : vector<8x32xf32>
    %423 = math.tanh %422 : vector<8x32xf32>
    %424 = arith.mulf %419, %423 : vector<8x32xf32>
    %425 = arith.truncf %424 : vector<8x32xf32> to vector<8x32xbf16>
    %cst_116 = arith.constant dense<0.000000e+00> : vector<8x128xf32>
    %426 = tpu.matmul %425, %299, %cst_116 {dimension_numbers = #tpu.dot_dimension_numbers<[1], [0], [0], [1], [0, 0, 1, 1], [], []>} : vector<8x32xbf16>, vector<32x128xbf16>, vector<8x128xf32> -> vector<8x128xf32>
    %427 = vector.broadcast %300 : vector<1x128xf32> to vector<8x128xf32>
    %428 = arith.addf %426, %427 : vector<8x128xf32>
    %429 = arith.index_cast %c2_i32_110 : i32 to index
    %c0_117 = arith.constant 0 : index
    %c0_118 = arith.constant 0 : index
    %430 = vector.load %arg16[%429, %c0_117, %c0_118] : memref<8x8x128xf32, #tpu.memory_space<vmem>>, vector<1x8x128xf32>
    %431 = vector.shape_cast %430 : vector<1x8x128xf32> to vector<8x128xf32>
    %432 = vector.shape_cast %428 : vector<8x128xf32> to vector<1x8x128xf32>
    tpu.vector_store %arg16[%429, %c0_117, %c0_118], %432 {strides = array<i32>} : memref<8x8x128xf32, #tpu.memory_space<vmem>>, vector<1x8x128xf32>,
    %cst_119 = arith.constant dense<0xFF800000> : vector<8xf32>
    %433 = vector.multi_reduction <maximumf>, %428, %cst_119 [1] : vector<8x128xf32> to vector<8xf32>
    %434 = vector.shape_cast %433 : vector<8xf32> to vector<8x1xf32>
    %435 = vector.broadcast %434 : vector<8x1xf32> to vector<8x128xf32>
    %436 = arith.cmpf oeq, %428, %435 : vector<8x128xf32>
    %437 = arith.extui %436 : vector<8x128xi1> to vector<8x128xi32>
    %438 = arith.sitofp %437 : vector<8x128xi32> to vector<8x128xf32>
    %439 = arith.truncf %438 : vector<8x128xf32> to vector<8x128xbf16>
    %c3_i32_120 = arith.constant 3 : i32
    %cst_121 = arith.constant dense<0.000000e+00> : vector<8x128xf32>
    %440 = tpu.matmul %439, %297, %cst_121 {dimension_numbers = #tpu.dot_dimension_numbers<[1], [0], [0], [1], [0, 0, 1, 1], [], []>} : vector<8x128xbf16>, vector<128x128xbf16>, vector<8x128xf32> -> vector<8x128xf32>
    %441 = arith.truncf %424 : vector<8x32xf32> to vector<8x32xbf16>
    %cst_122 = arith.constant dense<0.000000e+00> : vector<8x128xf32>
    %442 = tpu.matmul %441, %298, %cst_122 {dimension_numbers = #tpu.dot_dimension_numbers<[1], [0], [0], [1], [0, 0, 1, 1], [], []>} : vector<8x32xbf16>, vector<32x128xbf16>, vector<8x128xf32> -> vector<8x128xf32>
    %443 = arith.addf %440, %442 : vector<8x128xf32>
    %444 = vector.extract_strided_slice %443 {offsets = [0, 0], sizes = [8, 32], strides = [1, 1]} : vector<8x128xf32> to vector<8x32xf32>
    %445 = arith.negf %444 : vector<8x32xf32>
    %446 = math.exp %445 : vector<8x32xf32>
    %cst_123 = arith.constant 1.000000e+00 : f32
    %447 = vector.broadcast %cst_123 : f32 to vector<8x32xf32>
    %448 = arith.addf %447, %446 : vector<8x32xf32>
    %449 = arith.divf %447, %448 : vector<8x32xf32>
    %450 = vector.extract_strided_slice %443 {offsets = [0, 32], sizes = [8, 32], strides = [1, 1]} : vector<8x128xf32> to vector<8x32xf32>
    %451 = arith.negf %450 : vector<8x32xf32>
    %452 = math.exp %451 : vector<8x32xf32>
    %cst_124 = arith.constant 1.000000e+00 : f32
    %453 = vector.broadcast %cst_124 : f32 to vector<8x32xf32>
    %454 = arith.addf %453, %452 : vector<8x32xf32>
    %455 = arith.divf %453, %454 : vector<8x32xf32>
    %456 = vector.extract_strided_slice %443 {offsets = [0, 64], sizes = [8, 32], strides = [1, 1]} : vector<8x128xf32> to vector<8x32xf32>
    %457 = math.tanh %456 : vector<8x32xf32>
    %458 = vector.extract_strided_slice %443 {offsets = [0, 96], sizes = [8, 32], strides = [1, 1]} : vector<8x128xf32> to vector<8x32xf32>
    %459 = arith.negf %458 : vector<8x32xf32>
    %460 = math.exp %459 : vector<8x32xf32>
    %cst_125 = arith.constant 1.000000e+00 : f32
    %461 = vector.broadcast %cst_125 : f32 to vector<8x32xf32>
    %462 = arith.addf %461, %460 : vector<8x32xf32>
    %463 = arith.divf %461, %462 : vector<8x32xf32>
    %464 = arith.mulf %455, %422 : vector<8x32xf32>
    %465 = arith.mulf %449, %457 : vector<8x32xf32>
    %466 = arith.addf %464, %465 : vector<8x32xf32>
    %467 = math.tanh %466 : vector<8x32xf32>
    %468 = arith.mulf %463, %467 : vector<8x32xf32>
    %469 = arith.truncf %468 : vector<8x32xf32> to vector<8x32xbf16>
    %cst_126 = arith.constant dense<0.000000e+00> : vector<8x128xf32>
    %470 = tpu.matmul %469, %299, %cst_126 {dimension_numbers = #tpu.dot_dimension_numbers<[1], [0], [0], [1], [0, 0, 1, 1], [], []>} : vector<8x32xbf16>, vector<32x128xbf16>, vector<8x128xf32> -> vector<8x128xf32>
    %471 = vector.broadcast %300 : vector<1x128xf32> to vector<8x128xf32>
    %472 = arith.addf %470, %471 : vector<8x128xf32>
    %473 = arith.index_cast %c3_i32_120 : i32 to index
    %c0_127 = arith.constant 0 : index
    %c0_128 = arith.constant 0 : index
    %474 = vector.load %arg16[%473, %c0_127, %c0_128] : memref<8x8x128xf32, #tpu.memory_space<vmem>>, vector<1x8x128xf32>
    %475 = vector.shape_cast %474 : vector<1x8x128xf32> to vector<8x128xf32>
    %476 = vector.shape_cast %472 : vector<8x128xf32> to vector<1x8x128xf32>
    tpu.vector_store %arg16[%473, %c0_127, %c0_128], %476 {strides = array<i32>} : memref<8x8x128xf32, #tpu.memory_space<vmem>>, vector<1x8x128xf32>,
    %cst_129 = arith.constant dense<0xFF800000> : vector<8xf32>
    %477 = vector.multi_reduction <maximumf>, %472, %cst_129 [1] : vector<8x128xf32> to vector<8xf32>
    %478 = vector.shape_cast %477 : vector<8xf32> to vector<8x1xf32>
    %479 = vector.broadcast %478 : vector<8x1xf32> to vector<8x128xf32>
    %480 = arith.cmpf oeq, %472, %479 : vector<8x128xf32>
    %481 = arith.extui %480 : vector<8x128xi1> to vector<8x128xi32>
    %482 = arith.sitofp %481 : vector<8x128xi32> to vector<8x128xf32>
    %483 = arith.truncf %482 : vector<8x128xf32> to vector<8x128xbf16>
    %c4_i32_130 = arith.constant 4 : i32
    %cst_131 = arith.constant dense<0.000000e+00> : vector<8x128xf32>
    %484 = tpu.matmul %483, %297, %cst_131 {dimension_numbers = #tpu.dot_dimension_numbers<[1], [0], [0], [1], [0, 0, 1, 1], [], []>} : vector<8x128xbf16>, vector<128x128xbf16>, vector<8x128xf32> -> vector<8x128xf32>
    %485 = arith.truncf %468 : vector<8x32xf32> to vector<8x32xbf16>
    %cst_132 = arith.constant dense<0.000000e+00> : vector<8x128xf32>
    %486 = tpu.matmul %485, %298, %cst_132 {dimension_numbers = #tpu.dot_dimension_numbers<[1], [0], [0], [1], [0, 0, 1, 1], [], []>} : vector<8x32xbf16>, vector<32x128xbf16>, vector<8x128xf32> -> vector<8x128xf32>
    %487 = arith.addf %484, %486 : vector<8x128xf32>
    %488 = vector.extract_strided_slice %487 {offsets = [0, 0], sizes = [8, 32], strides = [1, 1]} : vector<8x128xf32> to vector<8x32xf32>
    %489 = arith.negf %488 : vector<8x32xf32>
    %490 = math.exp %489 : vector<8x32xf32>
    %cst_133 = arith.constant 1.000000e+00 : f32
    %491 = vector.broadcast %cst_133 : f32 to vector<8x32xf32>
    %492 = arith.addf %491, %490 : vector<8x32xf32>
    %493 = arith.divf %491, %492 : vector<8x32xf32>
    %494 = vector.extract_strided_slice %487 {offsets = [0, 32], sizes = [8, 32], strides = [1, 1]} : vector<8x128xf32> to vector<8x32xf32>
    %495 = arith.negf %494 : vector<8x32xf32>
    %496 = math.exp %495 : vector<8x32xf32>
    %cst_134 = arith.constant 1.000000e+00 : f32
    %497 = vector.broadcast %cst_134 : f32 to vector<8x32xf32>
    %498 = arith.addf %497, %496 : vector<8x32xf32>
    %499 = arith.divf %497, %498 : vector<8x32xf32>
    %500 = vector.extract_strided_slice %487 {offsets = [0, 64], sizes = [8, 32], strides = [1, 1]} : vector<8x128xf32> to vector<8x32xf32>
    %501 = math.tanh %500 : vector<8x32xf32>
    %502 = vector.extract_strided_slice %487 {offsets = [0, 96], sizes = [8, 32], strides = [1, 1]} : vector<8x128xf32> to vector<8x32xf32>
    %503 = arith.negf %502 : vector<8x32xf32>
    %504 = math.exp %503 : vector<8x32xf32>
    %cst_135 = arith.constant 1.000000e+00 : f32
    %505 = vector.broadcast %cst_135 : f32 to vector<8x32xf32>
    %506 = arith.addf %505, %504 : vector<8x32xf32>
    %507 = arith.divf %505, %506 : vector<8x32xf32>
    %508 = arith.mulf %499, %466 : vector<8x32xf32>
    %509 = arith.mulf %493, %501 : vector<8x32xf32>
    %510 = arith.addf %508, %509 : vector<8x32xf32>
    %511 = math.tanh %510 : vector<8x32xf32>
    %512 = arith.mulf %507, %511 : vector<8x32xf32>
    %513 = arith.truncf %512 : vector<8x32xf32> to vector<8x32xbf16>
    %cst_136 = arith.constant dense<0.000000e+00> : vector<8x128xf32>
    %514 = tpu.matmul %513, %299, %cst_136 {dimension_numbers = #tpu.dot_dimension_numbers<[1], [0], [0], [1], [0, 0, 1, 1], [], []>} : vector<8x32xbf16>, vector<32x128xbf16>, vector<8x128xf32> -> vector<8x128xf32>
    %515 = vector.broadcast %300 : vector<1x128xf32> to vector<8x128xf32>
    %516 = arith.addf %514, %515 : vector<8x128xf32>
    %517 = arith.index_cast %c4_i32_130 : i32 to index
    %c0_137 = arith.constant 0 : index
    %c0_138 = arith.constant 0 : index
    %518 = vector.load %arg16[%517, %c0_137, %c0_138] : memref<8x8x128xf32, #tpu.memory_space<vmem>>, vector<1x8x128xf32>
    %519 = vector.shape_cast %518 : vector<1x8x128xf32> to vector<8x128xf32>
    %520 = vector.shape_cast %516 : vector<8x128xf32> to vector<1x8x128xf32>
    tpu.vector_store %arg16[%517, %c0_137, %c0_138], %520 {strides = array<i32>} : memref<8x8x128xf32, #tpu.memory_space<vmem>>, vector<1x8x128xf32>,
    %cst_139 = arith.constant dense<0xFF800000> : vector<8xf32>
    %521 = vector.multi_reduction <maximumf>, %516, %cst_139 [1] : vector<8x128xf32> to vector<8xf32>
    %522 = vector.shape_cast %521 : vector<8xf32> to vector<8x1xf32>
    %523 = vector.broadcast %522 : vector<8x1xf32> to vector<8x128xf32>
    %524 = arith.cmpf oeq, %516, %523 : vector<8x128xf32>
    %525 = arith.extui %524 : vector<8x128xi1> to vector<8x128xi32>
    %526 = arith.sitofp %525 : vector<8x128xi32> to vector<8x128xf32>
    %527 = arith.truncf %526 : vector<8x128xf32> to vector<8x128xbf16>
    %c5_i32_140 = arith.constant 5 : i32
    %cst_141 = arith.constant dense<0.000000e+00> : vector<8x128xf32>
    %528 = tpu.matmul %527, %297, %cst_141 {dimension_numbers = #tpu.dot_dimension_numbers<[1], [0], [0], [1], [0, 0, 1, 1], [], []>} : vector<8x128xbf16>, vector<128x128xbf16>, vector<8x128xf32> -> vector<8x128xf32>
    %529 = arith.truncf %512 : vector<8x32xf32> to vector<8x32xbf16>
    %cst_142 = arith.constant dense<0.000000e+00> : vector<8x128xf32>
    %530 = tpu.matmul %529, %298, %cst_142 {dimension_numbers = #tpu.dot_dimension_numbers<[1], [0], [0], [1], [0, 0, 1, 1], [], []>} : vector<8x32xbf16>, vector<32x128xbf16>, vector<8x128xf32> -> vector<8x128xf32>
    %531 = arith.addf %528, %530 : vector<8x128xf32>
    %532 = vector.extract_strided_slice %531 {offsets = [0, 0], sizes = [8, 32], strides = [1, 1]} : vector<8x128xf32> to vector<8x32xf32>
    %533 = arith.negf %532 : vector<8x32xf32>
    %534 = math.exp %533 : vector<8x32xf32>
    %cst_143 = arith.constant 1.000000e+00 : f32
    %535 = vector.broadcast %cst_143 : f32 to vector<8x32xf32>
    %536 = arith.addf %535, %534 : vector<8x32xf32>
    %537 = arith.divf %535, %536 : vector<8x32xf32>
    %538 = vector.extract_strided_slice %531 {offsets = [0, 32], sizes = [8, 32], strides = [1, 1]} : vector<8x128xf32> to vector<8x32xf32>
    %539 = arith.negf %538 : vector<8x32xf32>
    %540 = math.exp %539 : vector<8x32xf32>
    %cst_144 = arith.constant 1.000000e+00 : f32
    %541 = vector.broadcast %cst_144 : f32 to vector<8x32xf32>
    %542 = arith.addf %541, %540 : vector<8x32xf32>
    %543 = arith.divf %541, %542 : vector<8x32xf32>
    %544 = vector.extract_strided_slice %531 {offsets = [0, 64], sizes = [8, 32], strides = [1, 1]} : vector<8x128xf32> to vector<8x32xf32>
    %545 = math.tanh %544 : vector<8x32xf32>
    %546 = vector.extract_strided_slice %531 {offsets = [0, 96], sizes = [8, 32], strides = [1, 1]} : vector<8x128xf32> to vector<8x32xf32>
    %547 = arith.negf %546 : vector<8x32xf32>
    %548 = math.exp %547 : vector<8x32xf32>
    %cst_145 = arith.constant 1.000000e+00 : f32
    %549 = vector.broadcast %cst_145 : f32 to vector<8x32xf32>
    %550 = arith.addf %549, %548 : vector<8x32xf32>
    %551 = arith.divf %549, %550 : vector<8x32xf32>
    %552 = arith.mulf %543, %510 : vector<8x32xf32>
    %553 = arith.mulf %537, %545 : vector<8x32xf32>
    %554 = arith.addf %552, %553 : vector<8x32xf32>
    %555 = math.tanh %554 : vector<8x32xf32>
    %556 = arith.mulf %551, %555 : vector<8x32xf32>
    %557 = arith.truncf %556 : vector<8x32xf32> to vector<8x32xbf16>
    %cst_146 = arith.constant dense<0.000000e+00> : vector<8x128xf32>
    %558 = tpu.matmul %557, %299, %cst_146 {dimension_numbers = #tpu.dot_dimension_numbers<[1], [0], [0], [1], [0, 0, 1, 1], [], []>} : vector<8x32xbf16>, vector<32x128xbf16>, vector<8x128xf32> -> vector<8x128xf32>
    %559 = vector.broadcast %300 : vector<1x128xf32> to vector<8x128xf32>
    %560 = arith.addf %558, %559 : vector<8x128xf32>
    %561 = arith.index_cast %c5_i32_140 : i32 to index
    %c0_147 = arith.constant 0 : index
    %c0_148 = arith.constant 0 : index
    %562 = vector.load %arg16[%561, %c0_147, %c0_148] : memref<8x8x128xf32, #tpu.memory_space<vmem>>, vector<1x8x128xf32>
    %563 = vector.shape_cast %562 : vector<1x8x128xf32> to vector<8x128xf32>
    %564 = vector.shape_cast %560 : vector<8x128xf32> to vector<1x8x128xf32>
    tpu.vector_store %arg16[%561, %c0_147, %c0_148], %564 {strides = array<i32>} : memref<8x8x128xf32, #tpu.memory_space<vmem>>, vector<1x8x128xf32>,
    %cst_149 = arith.constant dense<0xFF800000> : vector<8xf32>
    %565 = vector.multi_reduction <maximumf>, %560, %cst_149 [1] : vector<8x128xf32> to vector<8xf32>
    %566 = vector.shape_cast %565 : vector<8xf32> to vector<8x1xf32>
    %567 = vector.broadcast %566 : vector<8x1xf32> to vector<8x128xf32>
    %568 = arith.cmpf oeq, %560, %567 : vector<8x128xf32>
    %569 = arith.extui %568 : vector<8x128xi1> to vector<8x128xi32>
    %570 = arith.sitofp %569 : vector<8x128xi32> to vector<8x128xf32>
    %571 = arith.truncf %570 : vector<8x128xf32> to vector<8x128xbf16>
    %c6_i32_150 = arith.constant 6 : i32
    %cst_151 = arith.constant dense<0.000000e+00> : vector<8x128xf32>
    %572 = tpu.matmul %571, %297, %cst_151 {dimension_numbers = #tpu.dot_dimension_numbers<[1], [0], [0], [1], [0, 0, 1, 1], [], []>} : vector<8x128xbf16>, vector<128x128xbf16>, vector<8x128xf32> -> vector<8x128xf32>
    %573 = arith.truncf %556 : vector<8x32xf32> to vector<8x32xbf16>
    %cst_152 = arith.constant dense<0.000000e+00> : vector<8x128xf32>
    %574 = tpu.matmul %573, %298, %cst_152 {dimension_numbers = #tpu.dot_dimension_numbers<[1], [0], [0], [1], [0, 0, 1, 1], [], []>} : vector<8x32xbf16>, vector<32x128xbf16>, vector<8x128xf32> -> vector<8x128xf32>
    %575 = arith.addf %572, %574 : vector<8x128xf32>
    %576 = vector.extract_strided_slice %575 {offsets = [0, 0], sizes = [8, 32], strides = [1, 1]} : vector<8x128xf32> to vector<8x32xf32>
    %577 = arith.negf %576 : vector<8x32xf32>
    %578 = math.exp %577 : vector<8x32xf32>
    %cst_153 = arith.constant 1.000000e+00 : f32
    %579 = vector.broadcast %cst_153 : f32 to vector<8x32xf32>
    %580 = arith.addf %579, %578 : vector<8x32xf32>
    %581 = arith.divf %579, %580 : vector<8x32xf32>
    %582 = vector.extract_strided_slice %575 {offsets = [0, 32], sizes = [8, 32], strides = [1, 1]} : vector<8x128xf32> to vector<8x32xf32>
    %583 = arith.negf %582 : vector<8x32xf32>
    %584 = math.exp %583 : vector<8x32xf32>
    %cst_154 = arith.constant 1.000000e+00 : f32
    %585 = vector.broadcast %cst_154 : f32 to vector<8x32xf32>
    %586 = arith.addf %585, %584 : vector<8x32xf32>
    %587 = arith.divf %585, %586 : vector<8x32xf32>
    %588 = vector.extract_strided_slice %575 {offsets = [0, 64], sizes = [8, 32], strides = [1, 1]} : vector<8x128xf32> to vector<8x32xf32>
    %589 = math.tanh %588 : vector<8x32xf32>
    %590 = vector.extract_strided_slice %575 {offsets = [0, 96], sizes = [8, 32], strides = [1, 1]} : vector<8x128xf32> to vector<8x32xf32>
    %591 = arith.negf %590 : vector<8x32xf32>
    %592 = math.exp %591 : vector<8x32xf32>
    %cst_155 = arith.constant 1.000000e+00 : f32
    %593 = vector.broadcast %cst_155 : f32 to vector<8x32xf32>
    %594 = arith.addf %593, %592 : vector<8x32xf32>
    %595 = arith.divf %593, %594 : vector<8x32xf32>
    %596 = arith.mulf %587, %554 : vector<8x32xf32>
    %597 = arith.mulf %581, %589 : vector<8x32xf32>
    %598 = arith.addf %596, %597 : vector<8x32xf32>
    %599 = math.tanh %598 : vector<8x32xf32>
    %600 = arith.mulf %595, %599 : vector<8x32xf32>
    %601 = arith.truncf %600 : vector<8x32xf32> to vector<8x32xbf16>
    %cst_156 = arith.constant dense<0.000000e+00> : vector<8x128xf32>
    %602 = tpu.matmul %601, %299, %cst_156 {dimension_numbers = #tpu.dot_dimension_numbers<[1], [0], [0], [1], [0, 0, 1, 1], [], []>} : vector<8x32xbf16>, vector<32x128xbf16>, vector<8x128xf32> -> vector<8x128xf32>
    %603 = vector.broadcast %300 : vector<1x128xf32> to vector<8x128xf32>
    %604 = arith.addf %602, %603 : vector<8x128xf32>
    %605 = arith.index_cast %c6_i32_150 : i32 to index
    %c0_157 = arith.constant 0 : index
    %c0_158 = arith.constant 0 : index
    %606 = vector.load %arg16[%605, %c0_157, %c0_158] : memref<8x8x128xf32, #tpu.memory_space<vmem>>, vector<1x8x128xf32>
    %607 = vector.shape_cast %606 : vector<1x8x128xf32> to vector<8x128xf32>
    %608 = vector.shape_cast %604 : vector<8x128xf32> to vector<1x8x128xf32>
    tpu.vector_store %arg16[%605, %c0_157, %c0_158], %608 {strides = array<i32>} : memref<8x8x128xf32, #tpu.memory_space<vmem>>, vector<1x8x128xf32>,
    %cst_159 = arith.constant dense<0xFF800000> : vector<8xf32>
    %609 = vector.multi_reduction <maximumf>, %604, %cst_159 [1] : vector<8x128xf32> to vector<8xf32>
    %610 = vector.shape_cast %609 : vector<8xf32> to vector<8x1xf32>
    %611 = vector.broadcast %610 : vector<8x1xf32> to vector<8x128xf32>
    %612 = arith.cmpf oeq, %604, %611 : vector<8x128xf32>
    %613 = arith.extui %612 : vector<8x128xi1> to vector<8x128xi32>
    %614 = arith.sitofp %613 : vector<8x128xi32> to vector<8x128xf32>
    %615 = arith.truncf %614 : vector<8x128xf32> to vector<8x128xbf16>
    %c7_i32_160 = arith.constant 7 : i32
    %cst_161 = arith.constant dense<0.000000e+00> : vector<8x128xf32>
    %616 = tpu.matmul %615, %297, %cst_161 {dimension_numbers = #tpu.dot_dimension_numbers<[1], [0], [0], [1], [0, 0, 1, 1], [], []>} : vector<8x128xbf16>, vector<128x128xbf16>, vector<8x128xf32> -> vector<8x128xf32>
    %617 = arith.truncf %600 : vector<8x32xf32> to vector<8x32xbf16>
    %cst_162 = arith.constant dense<0.000000e+00> : vector<8x128xf32>
    %618 = tpu.matmul %617, %298, %cst_162 {dimension_numbers = #tpu.dot_dimension_numbers<[1], [0], [0], [1], [0, 0, 1, 1], [], []>} : vector<8x32xbf16>, vector<32x128xbf16>, vector<8x128xf32> -> vector<8x128xf32>
    %619 = arith.addf %616, %618 : vector<8x128xf32>
    %620 = vector.extract_strided_slice %619 {offsets = [0, 0], sizes = [8, 32], strides = [1, 1]} : vector<8x128xf32> to vector<8x32xf32>
    %621 = arith.negf %620 : vector<8x32xf32>
    %622 = math.exp %621 : vector<8x32xf32>
    %cst_163 = arith.constant 1.000000e+00 : f32
    %623 = vector.broadcast %cst_163 : f32 to vector<8x32xf32>
    %624 = arith.addf %623, %622 : vector<8x32xf32>
    %625 = arith.divf %623, %624 : vector<8x32xf32>
    %626 = vector.extract_strided_slice %619 {offsets = [0, 32], sizes = [8, 32], strides = [1, 1]} : vector<8x128xf32> to vector<8x32xf32>
    %627 = arith.negf %626 : vector<8x32xf32>
    %628 = math.exp %627 : vector<8x32xf32>
    %cst_164 = arith.constant 1.000000e+00 : f32
    %629 = vector.broadcast %cst_164 : f32 to vector<8x32xf32>
    %630 = arith.addf %629, %628 : vector<8x32xf32>
    %631 = arith.divf %629, %630 : vector<8x32xf32>
    %632 = vector.extract_strided_slice %619 {offsets = [0, 64], sizes = [8, 32], strides = [1, 1]} : vector<8x128xf32> to vector<8x32xf32>
    %633 = math.tanh %632 : vector<8x32xf32>
    %634 = vector.extract_strided_slice %619 {offsets = [0, 96], sizes = [8, 32], strides = [1, 1]} : vector<8x128xf32> to vector<8x32xf32>
    %635 = arith.negf %634 : vector<8x32xf32>
    %636 = math.exp %635 : vector<8x32xf32>
    %cst_165 = arith.constant 1.000000e+00 : f32
    %637 = vector.broadcast %cst_165 : f32 to vector<8x32xf32>
    %638 = arith.addf %637, %636 : vector<8x32xf32>
    %639 = arith.divf %637, %638 : vector<8x32xf32>
    %640 = arith.mulf %631, %598 : vector<8x32xf32>
    %641 = arith.mulf %625, %633 : vector<8x32xf32>
    %642 = arith.addf %640, %641 : vector<8x32xf32>
    %643 = math.tanh %642 : vector<8x32xf32>
    %644 = arith.mulf %639, %643 : vector<8x32xf32>
    %645 = arith.truncf %644 : vector<8x32xf32> to vector<8x32xbf16>
    %cst_166 = arith.constant dense<0.000000e+00> : vector<8x128xf32>
    %646 = tpu.matmul %645, %299, %cst_166 {dimension_numbers = #tpu.dot_dimension_numbers<[1], [0], [0], [1], [0, 0, 1, 1], [], []>} : vector<8x32xbf16>, vector<32x128xbf16>, vector<8x128xf32> -> vector<8x128xf32>
    %647 = vector.broadcast %300 : vector<1x128xf32> to vector<8x128xf32>
    %648 = arith.addf %646, %647 : vector<8x128xf32>
    %649 = arith.index_cast %c7_i32_160 : i32 to index
    %c0_167 = arith.constant 0 : index
    %c0_168 = arith.constant 0 : index
    %650 = vector.load %arg16[%649, %c0_167, %c0_168] : memref<8x8x128xf32, #tpu.memory_space<vmem>>, vector<1x8x128xf32>
    %651 = vector.shape_cast %650 : vector<1x8x128xf32> to vector<8x128xf32>
    %652 = vector.shape_cast %648 : vector<8x128xf32> to vector<1x8x128xf32>
    tpu.vector_store %arg16[%649, %c0_167, %c0_168], %652 {strides = array<i32>} : memref<8x8x128xf32, #tpu.memory_space<vmem>>, vector<1x8x128xf32>,
    %cst_169 = arith.constant dense<0xFF800000> : vector<8xf32>
    %653 = vector.multi_reduction <maximumf>, %648, %cst_169 [1] : vector<8x128xf32> to vector<8xf32>
    %654 = vector.shape_cast %653 : vector<8xf32> to vector<8x1xf32>
    %655 = vector.broadcast %654 : vector<8x1xf32> to vector<8x128xf32>
    %656 = arith.cmpf oeq, %648, %655 : vector<8x128xf32>
    %657 = arith.extui %656 : vector<8x128xi1> to vector<8x128xi32>
    %658 = arith.sitofp %657 : vector<8x128xi32> to vector<8x128xf32>
    %659 = arith.truncf %658 : vector<8x128xf32> to vector<8x128xbf16>
    %c8_i32_170 = arith.constant 8 : i32
    return
  }
  func.func @transform_0(%arg0: i32) -> (i32, i32, i32) {
    %c0_i32 = arith.constant 0 : i32
    %c0_i32_0 = arith.constant 0 : i32
    %c0_i32_1 = arith.constant 0 : i32
    return %arg0, %c0_i32, %c0_i32_0 : i32, i32, i32
  }
  func.func @transform_1(%arg0: i32) -> (i32, i32) {
    %c0_i32 = arith.constant 0 : i32
    %c0_i32_0 = arith.constant 0 : i32
    return %arg0, %c0_i32 : i32, i32
  }
  func.func @transform_2(%arg0: i32) -> (i32, i32) {
    %c0_i32 = arith.constant 0 : i32
    %c0_i32_0 = arith.constant 0 : i32
    %c0_i32_1 = arith.constant 0 : i32
    return %c0_i32, %c0_i32_0 : i32, i32
  }
  func.func @transform_3(%arg0: i32) -> (i32, i32) {
    %c0_i32 = arith.constant 0 : i32
    %c0_i32_0 = arith.constant 0 : i32
    %c0_i32_1 = arith.constant 0 : i32
    return %c0_i32, %c0_i32_0 : i32, i32
  }
  func.func @transform_4(%arg0: i32) -> (i32, i32) {
    %c0_i32 = arith.constant 0 : i32
    %c0_i32_0 = arith.constant 0 : i32
    %c0_i32_1 = arith.constant 0 : i32
    return %c0_i32, %c0_i32_0 : i32, i32
  }
  func.func @transform_5(%arg0: i32) -> (i32, i32) {
    %c0_i32 = arith.constant 0 : i32
    %c0_i32_0 = arith.constant 0 : i32
    %c0_i32_1 = arith.constant 0 : i32
    return %c0_i32, %c0_i32_0 : i32, i32
  }
  func.func @transform_6(%arg0: i32) -> (i32, i32) {
    %c0_i32 = arith.constant 0 : i32
    %c0_i32_0 = arith.constant 0 : i32
    %c0_i32_1 = arith.constant 0 : i32
    return %c0_i32, %c0_i32_0 : i32, i32
  }
  func.func @transform_7(%arg0: i32) -> (i32, i32) {
    %c0_i32 = arith.constant 0 : i32
    %c0_i32_0 = arith.constant 0 : i32
    %c0_i32_1 = arith.constant 0 : i32
    return %c0_i32, %c0_i32_0 : i32, i32
  }
  func.func @transform_8(%arg0: i32) -> (i32, i32) {
    %c0_i32 = arith.constant 0 : i32
    %c0_i32_0 = arith.constant 0 : i32
    %c0_i32_1 = arith.constant 0 : i32
    return %c0_i32, %c0_i32_0 : i32, i32
  }
  func.func @transform_9(%arg0: i32) -> (i32, i32) {
    %c0_i32 = arith.constant 0 : i32
    %c0_i32_0 = arith.constant 0 : i32
    %c0_i32_1 = arith.constant 0 : i32
    return %c0_i32, %c0_i32_0 : i32, i32
  }
  func.func @transform_10(%arg0: i32) -> (i32, i32) {
    %c0_i32 = arith.constant 0 : i32
    %c0_i32_0 = arith.constant 0 : i32
    %c0_i32_1 = arith.constant 0 : i32
    return %c0_i32, %c0_i32_0 : i32, i32
  }
  func.func @transform_11(%arg0: i32) -> (i32, i32) {
    %c0_i32 = arith.constant 0 : i32
    %c0_i32_0 = arith.constant 0 : i32
    %c0_i32_1 = arith.constant 0 : i32
    return %c0_i32, %c0_i32_0 : i32, i32
  }
  func.func @transform_12(%arg0: i32) -> (i32, i32) {
    %c0_i32 = arith.constant 0 : i32
    %c0_i32_0 = arith.constant 0 : i32
    %c0_i32_1 = arith.constant 0 : i32
    return %c0_i32, %c0_i32_0 : i32, i32
  }
  func.func @transform_13(%arg0: i32) -> (i32, i32) {
    %c0_i32 = arith.constant 0 : i32
    %c0_i32_0 = arith.constant 0 : i32
    %c0_i32_1 = arith.constant 0 : i32
    return %c0_i32, %c0_i32_0 : i32, i32
  }
  func.func @transform_14(%arg0: i32) -> (i32, i32) {
    %c0_i32 = arith.constant 0 : i32
    %c0_i32_0 = arith.constant 0 : i32
    return %arg0, %c0_i32 : i32, i32
  }
  func.func @transform_15(%arg0: i32) -> (i32, i32, i32) {
    %c0_i32 = arith.constant 0 : i32
    %c0_i32_0 = arith.constant 0 : i32
    %c0_i32_1 = arith.constant 0 : i32
    return %c0_i32, %arg0, %c0_i32_0 : i32, i32, i32
  }
}

</mosaic_0001>

<llo_original>
// kernel: vqa_forward.1
$region0: #{vqa_forward.1}
  #allocation0 [shape = 'u32[]', space=smem, size = 0x4, offset = 0x4, fixed_abs, tag = 'smem constant byte address 0x4 - core index']
  #allocation1 [shape = 'u32[144,128]{1,0:T(1,128)}', space=vmem, size = 0x12000, scoped, tag = 'internal scratch']
  #allocation2 [shape = 'f32[8,8,128]{2,1,0:T(8,128)}', space=vmem, size = 0x8000, scoped, tag = 'scratch operand']
  %s0 = inlined_call_operand.vmem [shape: bf16[1,64,16], index: 0, kind: input, shape index: {}]
  %s1 = inlined_call_operand.vmem [shape: bf16[8,64], index: 1, kind: input, shape index: {}]
  %s2 = inlined_call_operand.vmem [shape: bf16[16,128], index: 2, kind: input, shape index: {}]
  %s3 = inlined_call_operand.vmem [shape: bf16[32,128], index: 3, kind: input, shape index: {}]
  %s4 = inlined_call_operand.vmem [shape: f32[1,128], index: 4, kind: input, shape index: {}]
  %s5 = inlined_call_operand.vmem [shape: bf16[64,32], index: 5, kind: input, shape index: {}]
  %s6 = inlined_call_operand.vmem [shape: f32[1,32], index: 6, kind: input, shape index: {}]
  %s7 = inlined_call_operand.vmem [shape: bf16[32,160], index: 7, kind: input, shape index: {}]
  %s8 = inlined_call_operand.vmem [shape: bf16[32,160], index: 8, kind: input, shape index: {}]
  %s9 = inlined_call_operand.vmem [shape: f32[1,160], index: 9, kind: input, shape index: {}]
  %s10 = inlined_call_operand.vmem [shape: bf16[128,128], index: 10, kind: input, shape index: {}]
  %s11 = inlined_call_operand.vmem [shape: bf16[32,128], index: 11, kind: input, shape index: {}]
  %s12 = inlined_call_operand.vmem [shape: bf16[32,128], index: 12, kind: input, shape index: {}]
  %s13 = inlined_call_operand.vmem [shape: f32[1,128], index: 13, kind: input, shape index: {}]
  %s14 = inlined_call_operand.vmem [shape: f32[8,128], index: 14, kind: output, shape index: {0}]
  %s15 = inlined_call_operand.vmem [shape: f32[8,8,128], index: 15, kind: output, shape index: {1}]
  %16 = xla_tuple %s14, %s15
  %s17 = sld [smem:[#allocation0]]
  $region74: #{vqa_forward.1} parent=0
    _
  %s19 = ssub.s32 1, %s17
  %s20 = scalar_select 0, %s19, %s17
  // Predicated region
  $region2: #{vqa_forward.1} parent=0 // pred_check
    _
  $region3: #{vqa_forward.1} parent=0 // pred_check_branch
    %22 = sbr.rel (0) target = $region5
  $region4: #{vqa_forward.1} parent=0 // pred_region
    _
  $region5: #{vqa_forward.1} parent=0 // pred_fallthru
    _
  // Predicated region
  $region6: #{vqa_forward.1} parent=0 // pred_check
    _
  $region7: #{vqa_forward.1} parent=0 // pred_check_branch
    %24 = sbr.rel (0) target = $region9
  $region8: #{vqa_forward.1} parent=0 // pred_region
    _
  $region9: #{vqa_forward.1} parent=0 // pred_fallthru
    _
  // Predicated region
  $region10: #{vqa_forward.1} parent=0 // pred_check
    _
  $region11: #{vqa_forward.1} parent=0 // pred_check_branch
    %26 = sbr.rel (0) target = $region13
  $region12: #{vqa_forward.1} parent=0 // pred_region
    _
  $region13: #{vqa_forward.1} parent=0 // pred_fallthru
    _
  // Predicated region
  $region14: #{vqa_forward.1} parent=0 // pred_check
    _
  $region15: #{vqa_forward.1} parent=0 // pred_check_branch
    %28 = sbr.rel (0) target = $region17
  $region16: #{vqa_forward.1} parent=0 // pred_region
    _
  $region17: #{vqa_forward.1} parent=0 // pred_fallthru
    _
  // Predicated region
  $region18: #{vqa_forward.1} parent=0 // pred_check
    _
  $region19: #{vqa_forward.1} parent=0 // pred_check_branch
    %30 = sbr.rel (0) target = $region21
  $region20: #{vqa_forward.1} parent=0 // pred_region
    _
  $region21: #{vqa_forward.1} parent=0 // pred_fallthru
    _
  // Predicated region
  $region22: #{vqa_forward.1} parent=0 // pred_check
    _
  $region23: #{vqa_forward.1} parent=0 // pred_check_branch
    %32 = sbr.rel (0) target = $region25
  $region24: #{vqa_forward.1} parent=0 // pred_region
    _
  $region25: #{vqa_forward.1} parent=0 // pred_fallthru
    _
  // Predicated region
  $region26: #{vqa_forward.1} parent=0 // pred_check
    _
  $region27: #{vqa_forward.1} parent=0 // pred_check_branch
    %34 = sbr.rel (0) target = $region29
  $region28: #{vqa_forward.1} parent=0 // pred_region
    _
  $region29: #{vqa_forward.1} parent=0 // pred_fallthru
    _
  // Predicated region
  $region30: #{vqa_forward.1} parent=0 // pred_check
    _
  $region31: #{vqa_forward.1} parent=0 // pred_check_branch
    %36 = sbr.rel (0) target = $region33
  $region32: #{vqa_forward.1} parent=0 // pred_region
    _
  $region33: #{vqa_forward.1} parent=0 // pred_fallthru
    _
  // Predicated region
  $region34: #{vqa_forward.1} parent=0 // pred_check
    _
  $region35: #{vqa_forward.1} parent=0 // pred_check_branch
    %38 = sbr.rel (0) target = $region37
  $region36: #{vqa_forward.1} parent=0 // pred_region
    _
  $region37: #{vqa_forward.1} parent=0 // pred_fallthru
    _
  // Predicated region
  $region38: #{vqa_forward.1} parent=0 // pred_check
    _
  $region39: #{vqa_forward.1} parent=0 // pred_check_branch
    %40 = sbr.rel (0) target = $region41
  $region40: #{vqa_forward.1} parent=0 // pred_region
    _
  $region41: #{vqa_forward.1} parent=0 // pred_fallthru
    _
  // Predicated region
  $region42: #{vqa_forward.1} parent=0 // pred_check
    _
  $region43: #{vqa_forward.1} parent=0 // pred_check_branch
    %42 = sbr.rel (0) target = $region45
  $region44: #{vqa_forward.1} parent=0 // pred_region
    _
  $region45: #{vqa_forward.1} parent=0 // pred_fallthru
    _
  // Predicated region
  $region46: #{vqa_forward.1} parent=0 // pred_check
    _
  $region47: #{vqa_forward.1} parent=0 // pred_check_branch
    %44 = sbr.rel (0) target = $region49
  $region48: #{vqa_forward.1} parent=0 // pred_region
    _
  $region49: #{vqa_forward.1} parent=0 // pred_fallthru
    _
  // Predicated region
  $region50: #{vqa_forward.1} parent=0 // pred_check
    _
  $region51: #{vqa_forward.1} parent=0 // pred_check_branch
    %46 = sbr.rel (0) target = $region53
  $region52: #{vqa_forward.1} parent=0 // pred_region
    _
  $region53: #{vqa_forward.1} parent=0 // pred_fallthru
    _
  // Predicated region
  $region54: #{vqa_forward.1} parent=0 // pred_check
    _
  $region55: #{vqa_forward.1} parent=0 // pred_check_branch
    %48 = sbr.rel (0) target = $region57
  $region56: #{vqa_forward.1} parent=0 // pred_region
    _
  $region57: #{vqa_forward.1} parent=0 // pred_fallthru
    _
  %v50 = vld [vmem:[%s0] sm:$0xf]
  %v51 = vld [vmem:[%s0 + $0x4] sm:$0xf]
  %v52 = vld [vmem:[%s0 + $0x8] sm:$0xf]
  %v53 = vld [vmem:[%s0 + $0xc] sm:$0xf]
  %v54 = vld [vmem:[%s0 + $0x10] sm:$0xf]
  %v55 = vld [vmem:[%s0 + $0x14] sm:$0xf]
  %v56 = vld [vmem:[%s0 + $0x18] sm:$0xf]
  %v57 = vld [vmem:[%s0 + $0x1c] sm:$0xf]
  %v58 = vld [vmem:[%s2] sm:$0xf]
  %v59 = vld [vmem:[%s2 + $0x4] sm:$0xf]
  %v68 = vunpack.c.l.b16 %v50
  %v69 = vunpack.c.l.b16 %v51
  %v70 = vunpack.c.l.b16 %v52
  %v71 = vunpack.c.l.b16 %v53
  %v72 = vunpack.c.l.b16 %v54
  %v73 = vunpack.c.l.b16 %v55
  %v74 = vunpack.c.l.b16 %v56
  %v75 = vunpack.c.l.b16 %v57
  %v76 = vpack.c.b16 %v69, %v68
  %v77 = vpack.c.b16 %v71, %v70
  %v78 = vpack.c.b16 %v73, %v72
  %v79 = vpack.c.b16 %v75, %v74
  %v82 = vunpack.c.l.b16 %v58
  %v83 = vunpack.c.l.b16 %v59
  %v84 = vpack.c.b16 %v83, %v82
  %vm86 = vcmask 130048
  %v88 = vsel %vm86, %v76, 0
  %v91 = vsel %vm86, %v77, 0
  %v94 = vsel %vm86, %v78, 0
  %v97 = vsel %vm86, %v79, 0
  %99 = vmatprep.subr.bf16.mxu0 0
  %100 = vmatpush1.bf16.msra.mxu0 0
  %101 = vmatprep.subr.bf16.mxu0 0
  %102 = vmatpush1.bf16.msra.mxu0 0
  %103 = vmatprep.subr.bf16.mxu0 0
  %104 = vmatpush1.bf16.msra.mxu0 0
  %105 = vmatprep.subr.bf16.mxu0 0
  %106 = vmatpush1.bf16.msra.mxu0 0
  %107 = vmatprep.subr.bf16.mxu0 0
  %108 = vmatpush1.bf16.msra.mxu0 0
  %109 = vmatprep.subr.bf16.mxu0 0
  %110 = vmatpush1.bf16.msra.mxu0 0
  %111 = vmatprep.subr.bf16.mxu0 0
  %112 = vmatpush1.bf16.msra.mxu0 0
  %113 = vmatprep.subr.bf16.mxu0 0
  %114 = vmatpush1.bf16.msra.mxu0 %v84
  %115 = vmatprep.subr.bf16.mxu0 0
  %116 = vmatpush2.bf16.msra.mxu0 0
  %117 = vmatprep.subr.bf16.mxu0 0
  %118 = vmatpush2.bf16.msra.mxu0 0
  %119 = vmatprep.subr.bf16.mxu0 0
  %120 = vmatpush2.bf16.msra.mxu0 0
  %121 = vmatprep.subr.bf16.mxu0 0
  %122 = vmatpush2.bf16.msra.mxu0 0
  %123 = vmatprep.subr.bf16.mxu0 0
  %124 = vmatpush2.bf16.msra.mxu0 0
  %125 = vmatprep.subr.bf16.mxu0 0
  %126 = vmatpush2.bf16.msra.mxu0 0
  %127 = vmatprep.subr.bf16.mxu0 0
  %128 = vmatpush2.bf16.msra.mxu0 0
  %129 = vmatprep.subr.bf16.mxu0 0
  %130 = vmatpush2.bf16.msra.mxu0 0
  %131 = vmatprep.mubr.bf16.mxu0 0
  %132 = vmatmul.mubr.bf16.gmra.mxu0 %v88
  %v133 = vpop.f32.mrf.mxu0
  %v134 = vadd.f32 0.0, %v133
  %v135 = vpop.f32.mrf.mxu0
  %v136 = vpop.f32.mrf.mxu0
  %v137 = vadd.f32 0.0, %v136
  %v138 = vpop.f32.mrf.mxu0
  %139 = vmatprep.mubr.bf16.mxu0 0
  %140 = vmatmul.mubr.bf16.gmra.mxu0 %v91
  %v141 = vpop.f32.mrf.mxu0
  %v142 = vadd.f32 0.0, %v141
  %v143 = vpop.f32.mrf.mxu0
  %v144 = vpop.f32.mrf.mxu0
  %v145 = vadd.f32 0.0, %v144
  %v146 = vpop.f32.mrf.mxu0
  %147 = vmatprep.mubr.bf16.mxu0 0
  %148 = vmatmul.mubr.bf16.gmra.mxu0 %v94
  %v149 = vpop.f32.mrf.mxu0
  %v150 = vadd.f32 0.0, %v149
  %v151 = vpop.f32.mrf.mxu0
  %v152 = vpop.f32.mrf.mxu0
  %v153 = vadd.f32 0.0, %v152
  %v154 = vpop.f32.mrf.mxu0
  %155 = vmatprep.mubr.bf16.mxu0 0
  %156 = vmatmul.mubr.bf16.gmra.mxu0 %v97
  %v157 = vpop.f32.mrf.mxu0
  %v158 = vadd.f32 0.0, %v157
  %v159 = vpop.f32.mrf.mxu0
  %v160 = vpop.f32.mrf.mxu0
  %v161 = vadd.f32 0.0, %v160
  %v162 = vpop.f32.mrf.mxu0
  %163 = vdwg.mxu0
  %164 = vst [vmem:[#allocation2] sm:$0xff] %v134
  %165 = vst [vmem:[#allocation2 + $0x8] sm:$0xff] %v137
  %166 = vst [vmem:[#allocation2 + $0x10] sm:$0xff] %v142
  %167 = vst [vmem:[#allocation2 + $0x18] sm:$0xff] %v145
  %168 = vst [vmem:[#allocation2 + $0x20] sm:$0xff] %v150
  %169 = vst [vmem:[#allocation2 + $0x28] sm:$0xff] %v153
  %170 = vst [vmem:[#allocation2 + $0x30] sm:$0xff] %v158
  %171 = vst [vmem:[#allocation2 + $0x38] sm:$0xff] %v161
  %v172 = vld [vmem:[%s3] sm:$0xf]
  %v173 = vld [vmem:[%s3 + $0x4] sm:$0xf]
  %v174 = vld [vmem:[%s3 + $0x8] sm:$0xf]
  %v175 = vld [vmem:[%s3 + $0xc] sm:$0xf]
  %v176 = vld [vmem:[%s4] sm:$0x1]
  %v177 = vld [vmem:[#allocation2] sm:$0xff]
  %v182 = vunpack.c.l.b16 %v172
  %v183 = vunpack.c.l.b16 %v173
  %v184 = vunpack.c.l.b16 %v174
  %v185 = vunpack.c.l.b16 %v175
  %v186 = vpack.c.b16 %v183, %v182
  %v187 = vpack.c.b16 %v185, %v184
  %vm190 = vcmask 261120
  %v192 = vsel %vm190, 0, 0
  %194 = vmatprep.subr.bf16.mxu0 0
  %195 = vmatpush1.bf16.msra.mxu0 0
  %196 = vmatprep.subr.bf16.mxu0 0
  %197 = vmatpush1.bf16.msra.mxu0 0
  %198 = vmatprep.subr.bf16.mxu0 0
  %199 = vmatpush1.bf16.msra.mxu0 0
  %200 = vmatprep.subr.bf16.mxu0 0
  %201 = vmatpush1.bf16.msra.mxu0 0
  %202 = vmatprep.subr.bf16.mxu0 0
  %203 = vmatpush1.bf16.msra.mxu0 0
  %204 = vmatprep.subr.bf16.mxu0 0
  %205 = vmatpush1.bf16.msra.mxu0 0
  %206 = vmatprep.subr.bf16.mxu0 0
  %207 = vmatpush1.bf16.msra.mxu0 %v187
  %208 = vmatprep.subr.bf16.mxu0 0
  %209 = vmatpush1.bf16.msra.mxu0 %v186
  %210 = vmatprep.subr.bf16.mxu0 0
  %211 = vmatpush2.bf16.msra.mxu0 0
  %212 = vmatprep.subr.bf16.mxu0 0
  %213 = vmatpush2.bf16.msra.mxu0 0
  %214 = vmatprep.subr.bf16.mxu0 0
  %215 = vmatpush2.bf16.msra.mxu0 0
  %216 = vmatprep.subr.bf16.mxu0 0
  %217 = vmatpush2.bf16.msra.mxu0 0
  %218 = vmatprep.subr.bf16.mxu0 0
  %219 = vmatpush2.bf16.msra.mxu0 0
  %220 = vmatprep.subr.bf16.mxu0 0
  %221 = vmatpush2.bf16.msra.mxu0 0
  %222 = vmatprep.subr.bf16.mxu0 0
  %223 = vmatpush2.bf16.msra.mxu0 0
  %224 = vmatprep.subr.bf16.mxu0 0
  %225 = vmatpush2.bf16.msra.mxu0 0
  %226 = vmatprep.mubr.bf16.mxu0 0
  %227 = vmatmul.mubr.bf16.gmra.mxu0 %v192
  %v228 = vpop.f32.mrf.mxu0
  %v229 = vadd.f32 0.0, %v228
  %v230 = vpop.f32.mrf.mxu0
  %v231 = vpop.f32.mrf.mxu0
  %v232 = vpop.f32.mrf.mxu0
  %233 = vdwg.mxu0
  %v234 = vadd.f32 %v177, %v229
  %v236 = vlaneseq
  %v237 = vshrl.u32 %v236, 7
  %v238 = vsub.s32 0, %v237
  %v239 = vrot.slane %v176, %v238
  %v241 = vadd.f32 %v234, %v239
  %v242 = vxor.u32 %v241, 2147483648
  %v243 = vmul.f32 %v242, 1.442695
  %v244 = vpow.pop %v243
  %v245 = vadd.f32 %v244, 1.0
  %v246 = vrcp.pop %v245
  %v247 = vmul.f32 1.0, %v246
  %v248 = vtanh.pop %v241
  %v249 = vmul.f32 %v247, 0.0
  %251 = vrot.lane.b32.xlu0 %v248, 64
  %v252 = vpop.permute.xlu0 %251
  %v254 = vmul.f32 %v247, %v252
  %256 = vrot.lane.b32.xlu0 %v254, 32
  %v257 = vpop.permute.xlu0 %256
  %v259 = vadd.f32 %v249, %v257
  %v260 = vtanh.pop %v259
  %262 = vrot.lane.b32.xlu0 %v260, 64
  %v263 = vpop.permute.xlu0 %262
  %v265 = vmul.f32 %v247, %v263
  %s266 = scalar_lea.vmem [#allocation2], 8
  %v267 = vld [vmem:[%s266] sm:$0xff]
  %v268 = vpack.c.bf16 %v265, %v265
  %270 = vrot.lane.b32.xlu0 %v268, 32
  %v271 = vpop.permute.xlu0 %270
  %v273 = vsel %vm190, %v271, 0
  %275 = vmatprep.subr.bf16.mxu0 0
  %276 = vmatpush1.bf16.msra.mxu0 0
  %277 = vmatprep.subr.bf16.mxu0 0
  %278 = vmatpush1.bf16.msra.mxu0 0
  %279 = vmatprep.subr.bf16.mxu0 0
  %280 = vmatpush1.bf16.msra.mxu0 0
  %281 = vmatprep.subr.bf16.mxu0 0
  %282 = vmatpush1.bf16.msra.mxu0 0
  %283 = vmatprep.subr.bf16.mxu0 0
  %284 = vmatpush1.bf16.msra.mxu0 0
  %285 = vmatprep.subr.bf16.mxu0 0
  %286 = vmatpush1.bf16.msra.mxu0 0
  %287 = vmatprep.subr.bf16.mxu0 0
  %288 = vmatpush1.bf16.msra.mxu0 %v187
  %289 = vmatprep.subr.bf16.mxu0 0
  %290 = vmatpush1.bf16.msra.mxu0 %v186
  %291 = vmatprep.subr.bf16.mxu0 0
  %292 = vmatpush2.bf16.msra.mxu0 0
  %293 = vmatprep.subr.bf16.mxu0 0
  %294 = vmatpush2.bf16.msra.mxu0 0
  %295 = vmatprep.subr.bf16.mxu0 0
  %296 = vmatpush2.bf16.msra.mxu0 0
  %297 = vmatprep.subr.bf16.mxu0 0
  %298 = vmatpush2.bf16.msra.mxu0 0
  %299 = vmatprep.subr.bf16.mxu0 0
  %300 = vmatpush2.bf16.msra.mxu0 0
  %301 = vmatprep.subr.bf16.mxu0 0
  %302 = vmatpush2.bf16.msra.mxu0 0
  %303 = vmatprep.subr.bf16.mxu0 0
  %304 = vmatpush2.bf16.msra.mxu0 0
  %305 = vmatprep.subr.bf16.mxu0 0
  %306 = vmatpush2.bf16.msra.mxu0 0
  %307 = vmatprep.mubr.bf16.mxu0 0
  %308 = vmatmul.mubr.bf16.gmra.mxu0 %v273
  %v309 = vpop.f32.mrf.mxu0
  %v310 = vadd.f32 0.0, %v309
  %v311 = vpop.f32.mrf.mxu0
  %v312 = vpop.f32.mrf.mxu0
  %v313 = vpop.f32.mrf.mxu0
  %314 = vdwg.mxu0
  %v315 = vadd.f32 %v267, %v310
  %v316 = vadd.f32 %v315, %v239
  %v317 = vxor.u32 %v316, 2147483648
  %v318 = vmul.f32 %v317, 1.442695
  %v319 = vpow.pop %v318
  %v320 = vadd.f32 %v319, 1.0
  %v321 = vrcp.pop %v320
  %v322 = vmul.f32 1.0, %v321
  %v323 = vtanh.pop %v316
  %v324 = vmul.f32 %v322, %v259
  %326 = vrot.lane.b32.xlu0 %v323, 64
  %v327 = vpop.permute.xlu0 %326
  %v329 = vmul.f32 %v322, %v327
  %331 = vrot.lane.b32.xlu0 %v329, 32
  %v332 = vpop.permute.xlu0 %331
  %v334 = vadd.f32 %v324, %v332
  %v335 = vtanh.pop %v334
  %337 = vrot.lane.b32.xlu0 %v335, 64
  %v338 = vpop.permute.xlu0 %337
  %v340 = vmul.f32 %v322, %v338
  %s341 = scalar_lea.vmem [#allocation2], 16
  %v342 = vld [vmem:[%s341] sm:$0xff]
  %v343 = vpack.c.bf16 %v340, %v340
  %345 = vrot.lane.b32.xlu0 %v343, 32
  %v346 = vpop.permute.xlu0 %345
  %v348 = vsel %vm190, %v346, 0
  %350 = vmatprep.subr.bf16.mxu0 0
  %351 = vmatpush1.bf16.msra.mxu0 0
  %352 = vmatprep.subr.bf16.mxu0 0
  %353 = vmatpush1.bf16.msra.mxu0 0
  %354 = vmatprep.subr.bf16.mxu0 0
  %355 = vmatpush1.bf16.msra.mxu0 0
  %356 = vmatprep.subr.bf16.mxu0 0
  %357 = vmatpush1.bf16.msra.mxu0 0
  %358 = vmatprep.subr.bf16.mxu0 0
  %359 = vmatpush1.bf16.msra.mxu0 0
  %360 = vmatprep.subr.bf16.mxu0 0
  %361 = vmatpush1.bf16.msra.mxu0 0
  %362 = vmatprep.subr.bf16.mxu0 0
  %363 = vmatpush1.bf16.msra.mxu0 %v187
  %364 = vmatprep.subr.bf16.mxu0 0
  %365 = vmatpush1.bf16.msra.mxu0 %v186
  %366 = vmatprep.subr.bf16.mxu0 0
  %367 = vmatpush2.bf16.msra.mxu0 0
  %368 = vmatprep.subr.bf16.mxu0 0
  %369 = vmatpush2.bf16.msra.mxu0 0
  %370 = vmatprep.subr.bf16.mxu0 0
  %371 = vmatpush2.bf16.msra.mxu0 0
  %372 = vmatprep.subr.bf16.mxu0 0
  %373 = vmatpush2.bf16.msra.mxu0 0
  %374 = vmatprep.subr.bf16.mxu0 0
  %375 = vmatpush2.bf16.msra.mxu0 0
  %376 = vmatprep.subr.bf16.mxu0 0
  %377 = vmatpush2.bf16.msra.mxu0 0
  %378 = vmatprep.subr.bf16.mxu0 0
  %379 = vmatpush2.bf16.msra.mxu0 0
  %380 = vmatprep.subr.bf16.mxu0 0
  %381 = vmatpush2.bf16.msra.mxu0 0
  %382 = vmatprep.mubr.bf16.mxu0 0
  %383 = vmatmul.mubr.bf16.gmra.mxu0 %v348
  %v384 = vpop.f32.mrf.mxu0
  %v385 = vadd.f32 0.0, %v384
  %v386 = vpop.f32.mrf.mxu0
  %v387 = vpop.f32.mrf.mxu0
  %v388 = vpop.f32.mrf.mxu0
  %389 = vdwg.mxu0
  %v390 = vadd.f32 %v342, %v385
  %v391 = vadd.f32 %v390, %v239
  %v392 = vxor.u32 %v391, 2147483648
  %v393 = vmul.f32 %v392, 1.442695
  %v394 = vpow.pop %v393
  %v395 = vadd.f32 %v394, 1.0
  %v396 = vrcp.pop %v395
  %v397 = vmul.f32 1.0, %v396
  %v398 = vtanh.pop %v391
  %v399 = vmul.f32 %v397, %v334
  %401 = vrot.lane.b32.xlu0 %v398, 64
  %v402 = vpop.permute.xlu0 %401
  %v404 = vmul.f32 %v397, %v402
  %406 = vrot.lane.b32.xlu0 %v404, 32
  %v407 = vpop.permute.xlu0 %406
  %v409 = vadd.f32 %v399, %v407
  %v410 = vtanh.pop %v409
  %412 = vrot.lane.b32.xlu0 %v410, 64
  %v413 = vpop.permute.xlu0 %412
  %v415 = vmul.f32 %v397, %v413
  %s416 = scalar_lea.vmem [#allocation2], 24
  %v417 = vld [vmem:[%s416] sm:$0xff]
  %v418 = vpack.c.bf16 %v415, %v415
  %420 = vrot.lane.b32.xlu0 %v418, 32
  %v421 = vpop.permute.xlu0 %420
  %v423 = vsel %vm190, %v421, 0
  %425 = vmatprep.subr.bf16.mxu0 0
  %426 = vmatpush1.bf16.msra.mxu0 0
  %427 = vmatprep.subr.bf16.mxu0 0
  %428 = vmatpush1.bf16.msra.mxu0 0
  %429 = vmatprep.subr.bf16.mxu0 0
  %430 = vmatpush1.bf16.msra.mxu0 0
  %431 = vmatprep.subr.bf16.mxu0 0
  %432 = vmatpush1.bf16.msra.mxu0 0
  %433 = vmatprep.subr.bf16.mxu0 0
  %434 = vmatpush1.bf16.msra.mxu0 0
  %435 = vmatprep.subr.bf16.mxu0 0
  %436 = vmatpush1.bf16.msra.mxu0 0
  %437 = vmatprep.subr.bf16.mxu0 0
  %438 = vmatpush1.bf16.msra.mxu0 %v187
  %439 = vmatprep.subr.bf16.mxu0 0
  %440 = vmatpush1.bf16.msra.mxu0 %v186
  %441 = vmatprep.subr.bf16.mxu0 0
  %442 = vmatpush2.bf16.msra.mxu0 0
  %443 = vmatprep.subr.bf16.mxu0 0
  %444 = vmatpush2.bf16.msra.mxu0 0
  %445 = vmatprep.subr.bf16.mxu0 0
  %446 = vmatpush2.bf16.msra.mxu0 0
  %447 = vmatprep.subr.bf16.mxu0 0
  %448 = vmatpush2.bf16.msra.mxu0 0
  %449 = vmatprep.subr.bf16.mxu0 0
  %450 = vmatpush2.bf16.msra.mxu0 0
  %451 = vmatprep.subr.bf16.mxu0 0
  %452 = vmatpush2.bf16.msra.mxu0 0
  %453 = vmatprep.subr.bf16.mxu0 0
  %454 = vmatpush2.bf16.msra.mxu0 0
  %455 = vmatprep.subr.bf16.mxu0 0
  %456 = vmatpush2.bf16.msra.mxu0 0
  %457 = vmatprep.mubr.bf16.mxu0 0
  %458 = vmatmul.mubr.bf16.gmra.mxu0 %v423
  %v459 = vpop.f32.mrf.mxu0
  %v460 = vadd.f32 0.0, %v459
  %v461 = vpop.f32.mrf.mxu0
  %v462 = vpop.f32.mrf.mxu0
  %v463 = vpop.f32.mrf.mxu0
  %464 = vdwg.mxu0
  %v465 = vadd.f32 %v417, %v460
  %v466 = vadd.f32 %v465, %v239
  %v467 = vxor.u32 %v466, 2147483648
  %v468 = vmul.f32 %v467, 1.442695
  %v469 = vpow.pop %v468
  %v470 = vadd.f32 %v469, 1.0
  %v471 = vrcp.pop %v470
  %v472 = vmul.f32 1.0, %v471
  %v473 = vtanh.pop %v466
  %v474 = vmul.f32 %v472, %v409
  %476 = vrot.lane.b32.xlu0 %v473, 64
  %v477 = vpop.permute.xlu0 %476
  %v479 = vmul.f32 %v472, %v477
  %481 = vrot.lane.b32.xlu0 %v479, 32
  %v482 = vpop.permute.xlu0 %481
  %v484 = vadd.f32 %v474, %v482
  %v485 = vtanh.pop %v484
  %487 = vrot.lane.b32.xlu0 %v485, 64
  %v488 = vpop.permute.xlu0 %487
  %v490 = vmul.f32 %v472, %v488
  %s491 = scalar_lea.vmem [#allocation2], 32
  %v492 = vld [vmem:[%s491] sm:$0xff]
  %v493 = vpack.c.bf16 %v490, %v490
  %495 = vrot.lane.b32.xlu0 %v493, 32
  %v496 = vpop.permute.xlu0 %495
  %v498 = vsel %vm190, %v496, 0
  %500 = vmatprep.subr.bf16.mxu0 0
  %501 = vmatpush1.bf16.msra.mxu0 0
  %502 = vmatprep.subr.bf16.mxu0 0
  %503 = vmatpush1.bf16.msra.mxu0 0
  %504 = vmatprep.subr.bf16.mxu0 0
  %505 = vmatpush1.bf16.msra.mxu0 0
  %506 = vmatprep.subr.bf16.mxu0 0
  %507 = vmatpush1.bf16.msra.mxu0 0
  %508 = vmatprep.subr.bf16.mxu0 0
  %509 = vmatpush1.bf16.msra.mxu0 0
  %510 = vmatprep.subr.bf16.mxu0 0
  %511 = vmatpush1.bf16.msra.mxu0 0
  %512 = vmatprep.subr.bf16.mxu0 0
  %513 = vmatpush1.bf16.msra.mxu0 %v187
  %514 = vmatprep.subr.bf16.mxu0 0
  %515 = vmatpush1.bf16.msra.mxu0 %v186
  %516 = vmatprep.subr.bf16.mxu0 0
  %517 = vmatpush2.bf16.msra.mxu0 0
  %518 = vmatprep.subr.bf16.mxu0 0
  %519 = vmatpush2.bf16.msra.mxu0 0
  %520 = vmatprep.subr.bf16.mxu0 0
  %521 = vmatpush2.bf16.msra.mxu0 0
  %522 = vmatprep.subr.bf16.mxu0 0
  %523 = vmatpush2.bf16.msra.mxu0 0
  %524 = vmatprep.subr.bf16.mxu0 0
  %525 = vmatpush2.bf16.msra.mxu0 0
  %526 = vmatprep.subr.bf16.mxu0 0
  %527 = vmatpush2.bf16.msra.mxu0 0
  %528 = vmatprep.subr.bf16.mxu0 0
  %529 = vmatpush2.bf16.msra.mxu0 0
  %530 = vmatprep.subr.bf16.mxu0 0
  %531 = vmatpush2.bf16.msra.mxu0 0
  %532 = vmatprep.mubr.bf16.mxu0 0
  %533 = vmatmul.mubr.bf16.gmra.mxu0 %v498
  %v534 = vpop.f32.mrf.mxu0
  %v535 = vadd.f32 0.0, %v534
  %v536 = vpop.f32.mrf.mxu0
  %v537 = vpop.f32.mrf.mxu0
  %v538 = vpop.f32.mrf.mxu0
  %539 = vdwg.mxu0
  %v540 = vadd.f32 %v492, %v535
  %v541 = vadd.f32 %v540, %v239
  %v542 = vxor.u32 %v541, 2147483648
  %v543 = vmul.f32 %v542, 1.442695
  %v544 = vpow.pop %v543
  %v545 = vadd.f32 %v544, 1.0
  %v546 = vrcp.pop %v545
  %v547 = vmul.f32 1.0, %v546
  %v548 = vtanh.pop %v541
  %v549 = vmul.f32 %v547, %v484
  %551 = vrot.lane.b32.xlu0 %v548, 64
  %v552 = vpop.permute.xlu0 %551
  %v554 = vmul.f32 %v547, %v552
  %556 = vrot.lane.b32.xlu0 %v554, 32
  %v557 = vpop.permute.xlu0 %556
  %v559 = vadd.f32 %v549, %v557
  %v560 = vtanh.pop %v559
  %562 = vrot.lane.b32.xlu0 %v560, 64
  %v563 = vpop.permute.xlu0 %562
  %v565 = vmul.f32 %v547, %v563
  %s566 = scalar_lea.vmem [#allocation2], 40
  %v567 = vld [vmem:[%s566] sm:$0xff]
  %v568 = vpack.c.bf16 %v565, %v565
  %570 = vrot.lane.b32.xlu0 %v568, 32
  %v571 = vpop.permute.xlu0 %570
  %v573 = vsel %vm190, %v571, 0
  %575 = vmatprep.subr.bf16.mxu0 0
  %576 = vmatpush1.bf16.msra.mxu0 0
  %577 = vmatprep.subr.bf16.mxu0 0
  %578 = vmatpush1.bf16.msra.mxu0 0
  %579 = vmatprep.subr.bf16.mxu0 0
  %580 = vmatpush1.bf16.msra.mxu0 0
  %581 = vmatprep.subr.bf16.mxu0 0
  %582 = vmatpush1.bf16.msra.mxu0 0
  %583 = vmatprep.subr.bf16.mxu0 0
  %584 = vmatpush1.bf16.msra.mxu0 0
  %585 = vmatprep.subr.bf16.mxu0 0
  %586 = vmatpush1.bf16.msra.mxu0 0
  %587 = vmatprep.subr.bf16.mxu0 0
  %588 = vmatpush1.bf16.msra.mxu0 %v187
  %589 = vmatprep.subr.bf16.mxu0 0
  %590 = vmatpush1.bf16.msra.mxu0 %v186
  %591 = vmatprep.subr.bf16.mxu0 0
  %592 = vmatpush2.bf16.msra.mxu0 0
  %593 = vmatprep.subr.bf16.mxu0 0
  %594 = vmatpush2.bf16.msra.mxu0 0
  %595 = vmatprep.subr.bf16.mxu0 0
  %596 = vmatpush2.bf16.msra.mxu0 0
  %597 = vmatprep.subr.bf16.mxu0 0
  %598 = vmatpush2.bf16.msra.mxu0 0
  %599 = vmatprep.subr.bf16.mxu0 0
  %600 = vmatpush2.bf16.msra.mxu0 0
  %601 = vmatprep.subr.bf16.mxu0 0
  %602 = vmatpush2.bf16.msra.mxu0 0
  %603 = vmatprep.subr.bf16.mxu0 0
  %604 = vmatpush2.bf16.msra.mxu0 0
  %605 = vmatprep.subr.bf16.mxu0 0
  %606 = vmatpush2.bf16.msra.mxu0 0
  %607 = vmatprep.mubr.bf16.mxu0 0
  %608 = vmatmul.mubr.bf16.gmra.mxu0 %v573
  %v609 = vpop.f32.mrf.mxu0
  %v610 = vadd.f32 0.0, %v609
  %v611 = vpop.f32.mrf.mxu0
  %v612 = vpop.f32.mrf.mxu0
  %v613 = vpop.f32.mrf.mxu0
  %614 = vdwg.mxu0
  %v615 = vadd.f32 %v567, %v610
  %v616 = vadd.f32 %v615, %v239
  %v617 = vxor.u32 %v616, 2147483648
  %v618 = vmul.f32 %v617, 1.442695
  %v619 = vpow.pop %v618
  %v620 = vadd.f32 %v619, 1.0
  %v621 = vrcp.pop %v620
  %v622 = vmul.f32 1.0, %v621
  %v623 = vtanh.pop %v616
  %v624 = vmul.f32 %v622, %v559
  %626 = vrot.lane.b32.xlu0 %v623, 64
  %v627 = vpop.permute.xlu0 %626
  %v629 = vmul.f32 %v622, %v627
  %631 = vrot.lane.b32.xlu0 %v629, 32
  %v632 = vpop.permute.xlu0 %631
  %v634 = vadd.f32 %v624, %v632
  %v635 = vtanh.pop %v634
  %637 = vrot.lane.b32.xlu0 %v635, 64
  %v638 = vpop.permute.xlu0 %637
  %v640 = vmul.f32 %v622, %v638
  %s641 = scalar_lea.vmem [#allocation2], 48
  %v642 = vld [vmem:[%s641] sm:$0xff]
  %v643 = vpack.c.bf16 %v640, %v640
  %645 = vrot.lane.b32.xlu0 %v643, 32
  %v646 = vpop.permute.xlu0 %645
  %v648 = vsel %vm190, %v646, 0
  %650 = vmatprep.subr.bf16.mxu0 0
  %651 = vmatpush1.bf16.msra.mxu0 0
  %652 = vmatprep.subr.bf16.mxu0 0
  %653 = vmatpush1.bf16.msra.mxu0 0
  %654 = vmatprep.subr.bf16.mxu0 0
  %655 = vmatpush1.bf16.msra.mxu0 0
  %656 = vmatprep.subr.bf16.mxu0 0
  %657 = vmatpush1.bf16.msra.mxu0 0
  %658 = vmatprep.subr.bf16.mxu0 0
  %659 = vmatpush1.bf16.msra.mxu0 0
  %660 = vmatprep.subr.bf16.mxu0 0
  %661 = vmatpush1.bf16.msra.mxu0 0
  %662 = vmatprep.subr.bf16.mxu0 0
  %663 = vmatpush1.bf16.msra.mxu0 %v187
  %664 = vmatprep.subr.bf16.mxu0 0
  %665 = vmatpush1.bf16.msra.mxu0 %v186
  %666 = vmatprep.subr.bf16.mxu0 0
  %667 = vmatpush2.bf16.msra.mxu0 0
  %668 = vmatprep.subr.bf16.mxu0 0
  %669 = vmatpush2.bf16.msra.mxu0 0
  %670 = vmatprep.subr.bf16.mxu0 0
  %671 = vmatpush2.bf16.msra.mxu0 0
  %672 = vmatprep.subr.bf16.mxu0 0
  %673 = vmatpush2.bf16.msra.mxu0 0
  %674 = vmatprep.subr.bf16.mxu0 0
  %675 = vmatpush2.bf16.msra.mxu0 0
  %676 = vmatprep.subr.bf16.mxu0 0
  %677 = vmatpush2.bf16.msra.mxu0 0
  %678 = vmatprep.subr.bf16.mxu0 0
  %679 = vmatpush2.bf16.msra.mxu0 0
  %680 = vmatprep.subr.bf16.mxu0 0
  %681 = vmatpush2.bf16.msra.mxu0 0
  %682 = vmatprep.mubr.bf16.mxu0 0
  %683 = vmatmul.mubr.bf16.gmra.mxu0 %v648
  %v684 = vpop.f32.mrf.mxu0
  %v685 = vadd.f32 0.0, %v684
  %v686 = vpop.f32.mrf.mxu0
  %v687 = vpop.f32.mrf.mxu0
  %v688 = vpop.f32.mrf.mxu0
  %689 = vdwg.mxu0
  %v690 = vadd.f32 %v642, %v685
  %v691 = vadd.f32 %v690, %v239
  %v692 = vxor.u32 %v691, 2147483648
  %v693 = vmul.f32 %v692, 1.442695
  %v694 = vpow.pop %v693
  %v695 = vadd.f32 %v694, 1.0
  %v696 = vrcp.pop %v695
  %v697 = vmul.f32 1.0, %v696
  %v698 = vtanh.pop %v691
  %v699 = vmul.f32 %v697, %v634
  %701 = vrot.lane.b32.xlu0 %v698, 64
  %v702 = vpop.permute.xlu0 %701
  %v704 = vmul.f32 %v697, %v702
  %706 = vrot.lane.b32.xlu0 %v704, 32
  %v707 = vpop.permute.xlu0 %706
  %v709 = vadd.f32 %v699, %v707
  %v710 = vtanh.pop %v709
  %712 = vrot.lane.b32.xlu0 %v710, 64
  %v713 = vpop.permute.xlu0 %712
  %v715 = vmul.f32 %v697, %v713
  %s716 = scalar_lea.vmem [#allocation2], 56
  %v717 = vld [vmem:[%s716] sm:$0xff]
  %v718 = vpack.c.bf16 %v715, %v715
  %720 = vrot.lane.b32.xlu0 %v718, 32
  %v721 = vpop.permute.xlu0 %720
  %v723 = vsel %vm190, %v721, 0
  %725 = vmatprep.subr.bf16.mxu0 0
  %726 = vmatpush1.bf16.msra.mxu0 0
  %727 = vmatprep.subr.bf16.mxu0 0
  %728 = vmatpush1.bf16.msra.mxu0 0
  %729 = vmatprep.subr.bf16.mxu0 0
  %730 = vmatpush1.bf16.msra.mxu0 0
  %731 = vmatprep.subr.bf16.mxu0 0
  %732 = vmatpush1.bf16.msra.mxu0 0
  %733 = vmatprep.subr.bf16.mxu0 0
  %734 = vmatpush1.bf16.msra.mxu0 0
  %735 = vmatprep.subr.bf16.mxu0 0
  %736 = vmatpush1.bf16.msra.mxu0 0
  %737 = vmatprep.subr.bf16.mxu0 0
  %738 = vmatpush1.bf16.msra.mxu0 %v187
  %739 = vmatprep.subr.bf16.mxu0 0
  %740 = vmatpush1.bf16.msra.mxu0 %v186
  %741 = vmatprep.subr.bf16.mxu0 0
  %742 = vmatpush2.bf16.msra.mxu0 0
  %743 = vmatprep.subr.bf16.mxu0 0
  %744 = vmatpush2.bf16.msra.mxu0 0
  %745 = vmatprep.subr.bf16.mxu0 0
  %746 = vmatpush2.bf16.msra.mxu0 0
  %747 = vmatprep.subr.bf16.mxu0 0
  %748 = vmatpush2.bf16.msra.mxu0 0
  %749 = vmatprep.subr.bf16.mxu0 0
  %750 = vmatpush2.bf16.msra.mxu0 0
  %751 = vmatprep.subr.bf16.mxu0 0
  %752 = vmatpush2.bf16.msra.mxu0 0
  %753 = vmatprep.subr.bf16.mxu0 0
  %754 = vmatpush2.bf16.msra.mxu0 0
  %755 = vmatprep.subr.bf16.mxu0 0
  %756 = vmatpush2.bf16.msra.mxu0 0
  %757 = vmatprep.mubr.bf16.mxu0 0
  %758 = vmatmul.mubr.bf16.gmra.mxu0 %v723
  %v759 = vpop.f32.mrf.mxu0
  %v760 = vadd.f32 0.0, %v759
  %v761 = vpop.f32.mrf.mxu0
  %v762 = vpop.f32.mrf.mxu0
  %v763 = vpop.f32.mrf.mxu0
  %764 = vdwg.mxu0
  %v765 = vadd.f32 %v717, %v760
  %v766 = vadd.f32 %v765, %v239
  %v767 = vxor.u32 %v766, 2147483648
  %v768 = vmul.f32 %v767, 1.442695
  %v769 = vpow.pop %v768
  %v770 = vadd.f32 %v769, 1.0
  %v771 = vrcp.pop %v770
  %v772 = vmul.f32 1.0, %v771
  %v773 = vtanh.pop %v766
  %v774 = vmul.f32 %v772, %v709
  %776 = vrot.lane.b32.xlu0 %v773, 64
  %v777 = vpop.permute.xlu0 %776
  %v779 = vmul.f32 %v772, %v777
  %781 = vrot.lane.b32.xlu0 %v779, 32
  %v782 = vpop.permute.xlu0 %781
  %v784 = vadd.f32 %v774, %v782
  %v785 = vtanh.pop %v784
  %787 = vrot.lane.b32.xlu0 %v785, 64
  %v788 = vpop.permute.xlu0 %787
  %v790 = vmul.f32 %v772, %v788
  %v791 = vld [vmem:[%s1] sm:$0xf]
  %v792 = vld [vmem:[%s5] sm:$0xf]
  %v793 = vld [vmem:[%s5 + $0x4] sm:$0xf]
  %v794 = vld [vmem:[%s5 + $0x8] sm:$0xf]
  %v795 = vld [vmem:[%s5 + $0xc] sm:$0xf]
  %v796 = vld [vmem:[%s5 + $0x10] sm:$0xf]
  %v797 = vld [vmem:[%s5 + $0x14] sm:$0xf]
  %v798 = vld [vmem:[%s5 + $0x18] sm:$0xf]
  %v799 = vld [vmem:[%s5 + $0x1c] sm:$0xf]
  %v800 = vld [vmem:[%s6] sm:$0x1]
  %v802 = vlaneseq
  %v803 = vshrl.u32 %v802, 7
  %v804 = vsub.s32 0, %v803
  %v805 = vrot.slane %v800, %v804
  %v815 = vunpack.c.l.b16 %v792
  %v816 = vunpack.c.l.b16 %v793
  %v817 = vunpack.c.l.b16 %v794
  %v818 = vunpack.c.l.b16 %v795
  %v819 = vunpack.c.l.b16 %v796
  %v820 = vunpack.c.l.b16 %v797
  %v821 = vunpack.c.l.b16 %v798
  %v822 = vunpack.c.l.b16 %v799
  %v823 = vpack.c.b16 %v816, %v815
  %v824 = vpack.c.b16 %v818, %v817
  %v825 = vpack.c.b16 %v820, %v819
  %v826 = vpack.c.b16 %v822, %v821
  %vm831 = vcmask 523264
  %v833 = vsel %vm831, %v791, 0
  %835 = vmatprep.subr.bf16.mxu0 0
  %836 = vmatpush1.bf16.msra.mxu0 0
  %837 = vmatprep.subr.bf16.mxu0 0
  %838 = vmatpush1.bf16.msra.mxu0 0
  %839 = vmatprep.subr.bf16.mxu0 0
  %840 = vmatpush1.bf16.msra.mxu0 0
  %841 = vmatprep.subr.bf16.mxu0 0
  %842 = vmatpush1.bf16.msra.mxu0 0
  %843 = vmatprep.subr.bf16.mxu0 0
  %844 = vmatpush1.bf16.msra.mxu0 %v826
  %845 = vmatprep.subr.bf16.mxu0 0
  %846 = vmatpush1.bf16.msra.mxu0 %v825
  %847 = vmatprep.subr.bf16.mxu0 0
  %848 = vmatpush1.bf16.msra.mxu0 %v824
  %849 = vmatprep.subr.bf16.mxu0 0
  %850 = vmatpush1.bf16.msra.mxu0 %v823
  %851 = vmatprep.subr.bf16.mxu0 0
  %852 = vmatpush2.bf16.msra.mxu0 0
  %853 = vmatprep.subr.bf16.mxu0 0
  %854 = vmatpush2.bf16.msra.mxu0 0
  %855 = vmatprep.subr.bf16.mxu0 0
  %856 = vmatpush2.bf16.msra.mxu0 0
  %857 = vmatprep.subr.bf16.mxu0 0
  %858 = vmatpush2.bf16.msra.mxu0 0
  %859 = vmatprep.subr.bf16.mxu0 0
  %860 = vmatpush2.bf16.msra.mxu0 0
  %861 = vmatprep.subr.bf16.mxu0 0
  %862 = vmatpush2.bf16.msra.mxu0 0
  %863 = vmatprep.subr.bf16.mxu0 0
  %864 = vmatpush2.bf16.msra.mxu0 0
  %865 = vmatprep.subr.bf16.mxu0 0
  %866 = vmatpush2.bf16.msra.mxu0 0
  %867 = vmatprep.mubr.bf16.mxu0 0
  %868 = vmatmul.mubr.bf16.gmra.mxu0 %v833
  %v869 = vpop.f32.mrf.mxu0
  %v870 = vadd.f32 %v805, %v869
  %v871 = vpop.f32.mrf.mxu0
  %v872 = vpop.f32.mrf.mxu0
  %v873 = vpop.f32.mrf.mxu0
  %874 = vdwg.mxu0
  %v875 = vmax.f32 %v870, 0.0
  %v876 = vpack.c.bf16 %v790, %v790
  %v877 = vpack.c.bf16 %v875, %v875
  %v878 = vld [vmem:[%s7] sm:$0xff]
  %v879 = vld [vmem:[%s7 + $0x8] sm:$0xff]
  %v880 = vld [vmem:[%s7 + $0x10] sm:$0xff]
  %v881 = vld [vmem:[%s7 + $0x18] sm:$0xff]
  %v882 = vld [vmem:[%s8] sm:$0xff]
  %v883 = vld [vmem:[%s8 + $0x8] sm:$0xff]
  %v884 = vld [vmem:[%s8 + $0x10] sm:$0xff]
  %v885 = vld [vmem:[%s8 + $0x18] sm:$0xff]
  %v890 = vunpack.c.l.b16 %v882
  %v891 = vunpack.c.h.b16 %v882
  %v892 = vunpack.c.l.b16 %v883
  %v893 = vunpack.c.h.b16 %v883
  %v894 = vunpack.c.l.b16 %v884
  %v895 = vunpack.c.h.b16 %v884
  %v896 = vunpack.c.l.b16 %v885
  %v897 = vunpack.c.h.b16 %v885
  %v898 = vpack.c.b16 %v892, %v890
  %v899 = vpack.c.b16 %v893, %v891
  %v900 = vpack.c.b16 %v896, %v894
  %v901 = vpack.c.b16 %v897, %v895
  %v907 = vsel %vm190, %v877, 0
  %909 = vmatprep.subr.bf16.mxu0 0
  %910 = vmatpush1.bf16.msra.mxu0 0
  %911 = vmatprep.subr.bf16.mxu0 0
  %912 = vmatpush1.bf16.msra.mxu0 0
  %913 = vmatprep.subr.bf16.mxu0 0
  %914 = vmatpush1.bf16.msra.mxu0 0
  %915 = vmatprep.subr.bf16.mxu0 0
  %916 = vmatpush1.bf16.msra.mxu0 0
  %917 = vmatprep.subr.bf16.mxu0 0
  %918 = vmatpush1.bf16.msra.mxu0 0
  %919 = vmatprep.subr.bf16.mxu0 0
  %920 = vmatpush1.bf16.msra.mxu0 0
  %921 = vmatprep.subr.bf16.mxu0 %v901
  %922 = vmatpush1.bf16.msra.mxu0 %v900
  %923 = vmatprep.subr.bf16.mxu0 %v899
  %924 = vmatpush1.bf16.msra.mxu0 %v898
  %925 = vmatprep.subr.bf16.mxu0 0
  %926 = vmatpush2.bf16.msra.mxu0 0
  %927 = vmatprep.subr.bf16.mxu0 0
  %928 = vmatpush2.bf16.msra.mxu0 0
  %929 = vmatprep.subr.bf16.mxu0 0
  %930 = vmatpush2.bf16.msra.mxu0 0
  %931 = vmatprep.subr.bf16.mxu0 0
  %932 = vmatpush2.bf16.msra.mxu0 0
  %933 = vmatprep.subr.bf16.mxu0 0
  %934 = vmatpush2.bf16.msra.mxu0 0
  %935 = vmatprep.subr.bf16.mxu0 0
  %936 = vmatpush2.bf16.msra.mxu0 0
  %937 = vmatprep.subr.bf16.mxu0 0
  %938 = vmatpush2.bf16.msra.mxu0 0
  %939 = vmatprep.subr.bf16.mxu0 0
  %940 = vmatpush2.bf16.msra.mxu0 0
  %941 = vmatprep.mubr.bf16.mxu0 0
  %942 = vmatmul.mubr.bf16.gmra.mxu0 %v907
  %v943 = vpop.f32.mrf.mxu0
  %v944 = vadd.f32 0.0, %v943
  %v945 = vpop.f32.mrf.mxu0
  %v946 = vadd.f32 0.0, %v945
  %v947 = vpop.f32.mrf.mxu0
  %v948 = vpop.f32.mrf.mxu0
  %949 = vdwg.mxu0
  %951 = vrot.lane.b32.xlu0 %v876, 32
  %v952 = vpop.permute.xlu0 %951
  %v957 = vunpack.c.l.b16 %v878
  %v958 = vunpack.c.h.b16 %v878
  %v959 = vunpack.c.l.b16 %v879
  %v960 = vunpack.c.h.b16 %v879
  %v961 = vunpack.c.l.b16 %v880
  %v962 = vunpack.c.h.b16 %v880
  %v963 = vunpack.c.l.b16 %v881
  %v964 = vunpack.c.h.b16 %v881
  %v965 = vpack.c.b16 %v959, %v957
  %v966 = vpack.c.b16 %v960, %v958
  %v967 = vpack.c.b16 %v963, %v961
  %v968 = vpack.c.b16 %v964, %v962
  %v974 = vsel %vm190, %v952, 0
  %976 = vmatprep.subr.bf16.mxu0 0
  %977 = vmatpush1.bf16.msra.mxu0 0
  %978 = vmatprep.subr.bf16.mxu0 0
  %979 = vmatpush1.bf16.msra.mxu0 0
  %980 = vmatprep.subr.bf16.mxu0 0
  %981 = vmatpush1.bf16.msra.mxu0 0
  %982 = vmatprep.subr.bf16.mxu0 0
  %983 = vmatpush1.bf16.msra.mxu0 0
  %984 = vmatprep.subr.bf16.mxu0 0
  %985 = vmatpush1.bf16.msra.mxu0 0
  %986 = vmatprep.subr.bf16.mxu0 0
  %987 = vmatpush1.bf16.msra.mxu0 0
  %988 = vmatprep.subr.bf16.mxu0 %v968
  %989 = vmatpush1.bf16.msra.mxu0 %v967
  %990 = vmatprep.subr.bf16.mxu0 %v966
  %991 = vmatpush1.bf16.msra.mxu0 %v965
  %992 = vmatprep.subr.bf16.mxu0 0
  %993 = vmatpush2.bf16.msra.mxu0 0
  %994 = vmatprep.subr.bf16.mxu0 0
  %995 = vmatpush2.bf16.msra.mxu0 0
  %996 = vmatprep.subr.bf16.mxu0 0
  %997 = vmatpush2.bf16.msra.mxu0 0
  %998 = vmatprep.subr.bf16.mxu0 0
  %999 = vmatpush2.bf16.msra.mxu0 0
  %1000 = vmatprep.subr.bf16.mxu0 0
  %1001 = vmatpush2.bf16.msra.mxu0 0
  %1002 = vmatprep.subr.bf16.mxu0 0
  %1003 = vmatpush2.bf16.msra.mxu0 0
  %1004 = vmatprep.subr.bf16.mxu0 0
  %1005 = vmatpush2.bf16.msra.mxu0 0
  %1006 = vmatprep.subr.bf16.mxu0 0
  %1007 = vmatpush2.bf16.msra.mxu0 0
  %1008 = vmatprep.mubr.bf16.mxu0 0
  %1009 = vmatmul.mubr.bf16.gmra.mxu0 %v974
  %v1010 = vpop.f32.mrf.mxu0
  %v1011 = vadd.f32 %v944, %v1010
  %v1012 = vpop.f32.mrf.mxu0
  %v1013 = vadd.f32 %v946, %v1012
  %v1014 = vpop.f32.mrf.mxu0
  %v1015 = vpop.f32.mrf.mxu0
  %1016 = vdwg.mxu0
  %v1017 = vld [vmem:[%s9] sm:$0x3]
  %v1019 = vlaneseq
  %v1020 = vshrl.u32 %v1019, 7
  %v1021 = vsub.s32 0, %v1020
  %v1022 = vrot.slane %v1017, %v1021
  %v1023 = vlaneseq
  %v1024 = vshrl.u32 %v1023, 7
  %v1025 = vsub.s32 1, %v1024
  %v1026 = vrot.slane %v1017, %v1025
  %v1029 = vadd.f32 %v1011, %v1022
  %v1030 = vadd.f32 %v1013, %v1026
  %1031 = vst [vmem:[%s14] sm:$0xff] %v1029
  %v1032 = vmax.f32 %v1030, 0.0
  %v1033 = vld [vmem:[%s10] sm:$0xf]
  %v1034 = vld [vmem:[%s10 + $0x4] sm:$0xf]
  %v1035 = vld [vmem:[%s10 + $0x8] sm:$0xf]
  %v1036 = vld [vmem:[%s10 + $0xc] sm:$0xf]
  %v1037 = vld [vmem:[%s10 + $0x10] sm:$0xf]
  %v1038 = vld [vmem:[%s10 + $0x14] sm:$0xf]
  %v1039 = vld [vmem:[%s10 + $0x18] sm:$0xf]
  %v1040 = vld [vmem:[%s10 + $0x1c] sm:$0xf]
  %v1041 = vld [vmem:[%s10 + $0x20] sm:$0xf]
  %v1042 = vld [vmem:[%s10 + $0x24] sm:$0xf]
  %v1043 = vld [vmem:[%s10 + $0x28] sm:$0xf]
  %v1044 = vld [vmem:[%s10 + $0x2c] sm:$0xf]
  %v1045 = vld [vmem:[%s10 + $0x30] sm:$0xf]
  %v1046 = vld [vmem:[%s10 + $0x34] sm:$0xf]
  %v1047 = vld [vmem:[%s10 + $0x38] sm:$0xf]
  %v1048 = vld [vmem:[%s10 + $0x3c] sm:$0xf]
  %v1049 = vld [vmem:[%s11] sm:$0xf]
  %v1050 = vld [vmem:[%s11 + $0x4] sm:$0xf]
  %v1051 = vld [vmem:[%s11 + $0x8] sm:$0xf]
  %v1052 = vld [vmem:[%s11 + $0xc] sm:$0xf]
  %v1053 = vld [vmem:[%s12] sm:$0xf]
  %v1054 = vld [vmem:[%s12 + $0x4] sm:$0xf]
  %v1055 = vld [vmem:[%s12 + $0x8] sm:$0xf]
  %v1056 = vld [vmem:[%s12 + $0xc] sm:$0xf]
  %v1057 = vld [vmem:[%s13] sm:$0x1]
  %v1058 = vlaneseq
  %v1059 = vand.u32 %v1058, 127
  %vm1060 = vcmp.eq.s32.totalorder %v1059, 1
  %v1061 = vsel %vm1060, 1, 0
  %v1062 = vcvt.s32.f32 %v1061
  %v1063 = vpack.c.bf16 %v1062, %v1062
  %v1064 = vpack.c.bf16 %v1032, %v1032
  %v1069 = vunpack.c.l.b16 %v1049
  %v1070 = vunpack.c.l.b16 %v1050
  %v1071 = vunpack.c.l.b16 %v1051
  %v1072 = vunpack.c.l.b16 %v1052
  %v1073 = vpack.c.b16 %v1070, %v1069
  %v1074 = vpack.c.b16 %v1072, %v1071
  %v1078 = vsel %vm190, %v1064, 0
  %1080 = vmatprep.subr.bf16.mxu0 0
  %1081 = vmatpush1.bf16.msra.mxu0 0
  %1082 = vmatprep.subr.bf16.mxu0 0
  %1083 = vmatpush1.bf16.msra.mxu0 0
  %1084 = vmatprep.subr.bf16.mxu0 0
  %1085 = vmatpush1.bf16.msra.mxu0 0
  %1086 = vmatprep.subr.bf16.mxu0 0
  %1087 = vmatpush1.bf16.msra.mxu0 0
  %1088 = vmatprep.subr.bf16.mxu0 0
  %1089 = vmatpush1.bf16.msra.mxu0 0
  %1090 = vmatprep.subr.bf16.mxu0 0
  %1091 = vmatpush1.bf16.msra.mxu0 0
  %1092 = vmatprep.subr.bf16.mxu0 0
  %1093 = vmatpush1.bf16.msra.mxu0 %v1074
  %1094 = vmatprep.subr.bf16.mxu0 0
  %1095 = vmatpush1.bf16.msra.mxu0 %v1073
  %1096 = vmatprep.subr.bf16.mxu0 0
  %1097 = vmatpush2.bf16.msra.mxu0 0
  %1098 = vmatprep.subr.bf16.mxu0 0
  %1099 = vmatpush2.bf16.msra.mxu0 0
  %1100 = vmatprep.subr.bf16.mxu0 0
  %1101 = vmatpush2.bf16.msra.mxu0 0
  %1102 = vmatprep.subr.bf16.mxu0 0
  %1103 = vmatpush2.bf16.msra.mxu0 0
  %1104 = vmatprep.subr.bf16.mxu0 0
  %1105 = vmatpush2.bf16.msra.mxu0 0
  %1106 = vmatprep.subr.bf16.mxu0 0
  %1107 = vmatpush2.bf16.msra.mxu0 0
  %1108 = vmatprep.subr.bf16.mxu0 0
  %1109 = vmatpush2.bf16.msra.mxu0 0
  %1110 = vmatprep.subr.bf16.mxu0 0
  %1111 = vmatpush2.bf16.msra.mxu0 0
  %1112 = vmatprep.mubr.bf16.mxu0 0
  %1113 = vmatmul.mubr.bf16.gmra.mxu0 %v1078
  %v1114 = vpop.f32.mrf.mxu0
  %v1115 = vadd.f32 0.0, %v1114
  %v1116 = vpop.f32.mrf.mxu0
  %v1117 = vpop.f32.mrf.mxu0
  %v1118 = vpop.f32.mrf.mxu0
  %1119 = vdwg.mxu0
  %v1136 = vunpack.c.l.b16 %v1033
  %v1137 = vunpack.c.l.b16 %v1034
  %v1138 = vunpack.c.l.b16 %v1035
  %v1139 = vunpack.c.l.b16 %v1036
  %v1140 = vunpack.c.l.b16 %v1037
  %v1141 = vunpack.c.l.b16 %v1038
  %v1142 = vunpack.c.l.b16 %v1039
  %v1143 = vunpack.c.l.b16 %v1040
  %v1144 = vunpack.c.l.b16 %v1041
  %v1145 = vunpack.c.l.b16 %v1042
  %v1146 = vunpack.c.l.b16 %v1043
  %v1147 = vunpack.c.l.b16 %v1044
  %v1148 = vunpack.c.l.b16 %v1045
  %v1149 = vunpack.c.l.b16 %v1046
  %v1150 = vunpack.c.l.b16 %v1047
  %v1151 = vunpack.c.l.b16 %v1048
  %v1152 = vpack.c.b16 %v1137, %v1136
  %v1153 = vpack.c.b16 %v1139, %v1138
  %v1154 = vpack.c.b16 %v1141, %v1140
  %v1155 = vpack.c.b16 %v1143, %v1142
  %v1156 = vpack.c.b16 %v1145, %v1144
  %v1157 = vpack.c.b16 %v1147, %v1146
  %v1158 = vpack.c.b16 %v1149, %v1148
  %v1159 = vpack.c.b16 %v1151, %v1150
  %1168 = vmatprep.subr.bf16.mxu0 0
  %1169 = vmatpush1.bf16.msra.mxu0 %v1159
  %1170 = vmatprep.subr.bf16.mxu0 0
  %1171 = vmatpush1.bf16.msra.mxu0 %v1158
  %1172 = vmatprep.subr.bf16.mxu0 0
  %1173 = vmatpush1.bf16.msra.mxu0 %v1157
  %1174 = vmatprep.subr.bf16.mxu0 0
  %1175 = vmatpush1.bf16.msra.mxu0 %v1156
  %1176 = vmatprep.subr.bf16.mxu0 0
  %1177 = vmatpush1.bf16.msra.mxu0 %v1155
  %1178 = vmatprep.subr.bf16.mxu0 0
  %1179 = vmatpush1.bf16.msra.mxu0 %v1154
  %1180 = vmatprep.subr.bf16.mxu0 0
  %1181 = vmatpush1.bf16.msra.mxu0 %v1153
  %1182 = vmatprep.subr.bf16.mxu0 0
  %1183 = vmatpush1.bf16.msra.mxu0 %v1152
  %1184 = vmatprep.subr.bf16.mxu0 0
  %1185 = vmatpush2.bf16.msra.mxu0 0
  %1186 = vmatprep.subr.bf16.mxu0 0
  %1187 = vmatpush2.bf16.msra.mxu0 0
  %1188 = vmatprep.subr.bf16.mxu0 0
  %1189 = vmatpush2.bf16.msra.mxu0 0
  %1190 = vmatprep.subr.bf16.mxu0 0
  %1191 = vmatpush2.bf16.msra.mxu0 0
  %1192 = vmatprep.subr.bf16.mxu0 0
  %1193 = vmatpush2.bf16.msra.mxu0 0
  %1194 = vmatprep.subr.bf16.mxu0 0
  %1195 = vmatpush2.bf16.msra.mxu0 0
  %1196 = vmatprep.subr.bf16.mxu0 0
  %1197 = vmatpush2.bf16.msra.mxu0 0
  %1198 = vmatprep.subr.bf16.mxu0 0
  %1199 = vmatpush2.bf16.msra.mxu0 0
  %1200 = vmatprep.mubr.bf16.mxu0 0
  %1201 = vmatmul.mubr.bf16.gmra.mxu0 %v1063
  %v1202 = vpop.f32.mrf.mxu0
  %v1203 = vadd.f32 %v1115, %v1202
  %v1204 = vpop.f32.mrf.mxu0
  %v1205 = vpop.f32.mrf.mxu0
  %v1206 = vpop.f32.mrf.mxu0
  %1207 = vdwg.mxu0
  %v1208 = vxor.u32 %v1203, 2147483648
  %v1209 = vmul.f32 %v1208, 1.442695
  %v1210 = vpow.pop %v1209
  %v1211 = vadd.f32 %v1210, 1.0
  %v1212 = vrcp.pop %v1211
  %v1213 = vmul.f32 1.0, %v1212
  %v1214 = vtanh.pop %v1203
  %v1215 = vmul.f32 %v1213, 0.0
  %1217 = vrot.lane.b32.xlu0 %v1214, 64
  %v1218 = vpop.permute.xlu0 %1217
  %v1220 = vmul.f32 %v1213, %v1218
  %1222 = vrot.lane.b32.xlu0 %v1220, 32
  %v1223 = vpop.permute.xlu0 %1222
  %v1225 = vadd.f32 %v1215, %v1223
  %v1226 = vtanh.pop %v1225
  %1228 = vrot.lane.b32.xlu0 %v1226, 64
  %v1229 = vpop.permute.xlu0 %1228
  %v1231 = vmul.f32 %v1213, %v1229
  %v1232 = vpack.c.bf16 %v1231, %v1231
  %v1234 = vlaneseq
  %v1235 = vshrl.u32 %v1234, 7
  %v1236 = vsub.s32 0, %v1235
  %v1237 = vrot.slane %v1057, %v1236
  %1240 = vrot.lane.b32.xlu0 %v1232, 32
  %v1241 = vpop.permute.xlu0 %1240
  %v1246 = vunpack.c.l.b16 %v1053
  %v1247 = vunpack.c.l.b16 %v1054
  %v1248 = vunpack.c.l.b16 %v1055
  %v1249 = vunpack.c.l.b16 %v1056
  %v1250 = vpack.c.b16 %v1247, %v1246
  %v1251 = vpack.c.b16 %v1249, %v1248
  %v1255 = vsel %vm190, %v1241, 0
  %1257 = vmatprep.subr.bf16.mxu0 0
  %1258 = vmatpush1.bf16.msra.mxu0 0
  %1259 = vmatprep.subr.bf16.mxu0 0
  %1260 = vmatpush1.bf16.msra.mxu0 0
  %1261 = vmatprep.subr.bf16.mxu0 0
  %1262 = vmatpush1.bf16.msra.mxu0 0
  %1263 = vmatprep.subr.bf16.mxu0 0
  %1264 = vmatpush1.bf16.msra.mxu0 0
  %1265 = vmatprep.subr.bf16.mxu0 0
  %1266 = vmatpush1.bf16.msra.mxu0 0
  %1267 = vmatprep.subr.bf16.mxu0 0
  %1268 = vmatpush1.bf16.msra.mxu0 0
  %1269 = vmatprep.subr.bf16.mxu0 0
  %1270 = vmatpush1.bf16.msra.mxu0 %v1251
  %1271 = vmatprep.subr.bf16.mxu0 0
  %1272 = vmatpush1.bf16.msra.mxu0 %v1250
  %1273 = vmatprep.subr.bf16.mxu0 0
  %1274 = vmatpush2.bf16.msra.mxu0 0
  %1275 = vmatprep.subr.bf16.mxu0 0
  %1276 = vmatpush2.bf16.msra.mxu0 0
  %1277 = vmatprep.subr.bf16.mxu0 0
  %1278 = vmatpush2.bf16.msra.mxu0 0
  %1279 = vmatprep.subr.bf16.mxu0 0
  %1280 = vmatpush2.bf16.msra.mxu0 0
  %1281 = vmatprep.subr.bf16.mxu0 0
  %1282 = vmatpush2.bf16.msra.mxu0 0
  %1283 = vmatprep.subr.bf16.mxu0 0
  %1284 = vmatpush2.bf16.msra.mxu0 0
  %1285 = vmatprep.subr.bf16.mxu0 0
  %1286 = vmatpush2.bf16.msra.mxu0 0
  %1287 = vmatprep.subr.bf16.mxu0 0
  %1288 = vmatpush2.bf16.msra.mxu0 0
  %1289 = vmatprep.mubr.bf16.mxu0 0
  %1290 = vmatmul.mubr.bf16.gmra.mxu0 %v1255
  %v1291 = vpop.f32.mrf.mxu0
  %v1292 = vadd.f32 %v1237, %v1291
  %v1293 = vpop.f32.mrf.mxu0
  %v1294 = vpop.f32.mrf.mxu0
  %v1295 = vpop.f32.mrf.mxu0
  %1296 = vdwg.mxu0
  %1297 = vst [vmem:[%s15] sm:$0xff] %v1292
  %1298 = vmax.xlane.f32.xlu0 %v1292
  %v1299 = vpop.xlane.xlu0 %1298
  %vm1300 = vcmp.eq.f32.partialorder %v1292, %v1299
  %v1301 = vsel %vm1300, 1, 0
  %v1302 = vcvt.s32.f32 %v1301
  %v1303 = vpack.c.bf16 %v1302, %v1302
  %1304 = vmatprep.subr.bf16.mxu0 0
  %1305 = vmatpush1.bf16.msra.mxu0 0
  %1306 = vmatprep.subr.bf16.mxu0 0
  %1307 = vmatpush1.bf16.msra.mxu0 0
  %1308 = vmatprep.subr.bf16.mxu0 0
  %1309 = vmatpush1.bf16.msra.mxu0 0
  %1310 = vmatprep.subr.bf16.mxu0 0
  %1311 = vmatpush1.bf16.msra.mxu0 0
  %1312 = vmatprep.subr.bf16.mxu0 0
  %1313 = vmatpush1.bf16.msra.mxu0 0
  %1314 = vmatprep.subr.bf16.mxu0 0
  %1315 = vmatpush1.bf16.msra.mxu0 0
  %1316 = vmatprep.subr.bf16.mxu0 0
  %1317 = vmatpush1.bf16.msra.mxu0 %v1074
  %1318 = vmatprep.subr.bf16.mxu0 0
  %1319 = vmatpush1.bf16.msra.mxu0 %v1073
  %1320 = vmatprep.subr.bf16.mxu0 0
  %1321 = vmatpush2.bf16.msra.mxu0 0
  %1322 = vmatprep.subr.bf16.mxu0 0
  %1323 = vmatpush2.bf16.msra.mxu0 0
  %1324 = vmatprep.subr.bf16.mxu0 0
  %1325 = vmatpush2.bf16.msra.mxu0 0
  %1326 = vmatprep.subr.bf16.mxu0 0
  %1327 = vmatpush2.bf16.msra.mxu0 0
  %1328 = vmatprep.subr.bf16.mxu0 0
  %1329 = vmatpush2.bf16.msra.mxu0 0
  %1330 = vmatprep.subr.bf16.mxu0 0
  %1331 = vmatpush2.bf16.msra.mxu0 0
  %1332 = vmatprep.subr.bf16.mxu0 0
  %1333 = vmatpush2.bf16.msra.mxu0 0
  %1334 = vmatprep.subr.bf16.mxu0 0
  %1335 = vmatpush2.bf16.msra.mxu0 0
  %1336 = vmatprep.mubr.bf16.mxu0 0
  %1337 = vmatmul.mubr.bf16.gmra.mxu0 %v1255
  %v1338 = vpop.f32.mrf.mxu0
  %v1339 = vadd.f32 0.0, %v1338
  %v1340 = vpop.f32.mrf.mxu0
  %v1341 = vpop.f32.mrf.mxu0
  %v1342 = vpop.f32.mrf.mxu0
  %1343 = vdwg.mxu0
  %1344 = vmatprep.subr.bf16.mxu0 0
  %1345 = vmatpush1.bf16.msra.mxu0 %v1159
  %1346 = vmatprep.subr.bf16.mxu0 0
  %1347 = vmatpush1.bf16.msra.mxu0 %v1158
  %1348 = vmatprep.subr.bf16.mxu0 0
  %1349 = vmatpush1.bf16.msra.mxu0 %v1157
  %1350 = vmatprep.subr.bf16.mxu0 0
  %1351 = vmatpush1.bf16.msra.mxu0 %v1156
  %1352 = vmatprep.subr.bf16.mxu0 0
  %1353 = vmatpush1.bf16.msra.mxu0 %v1155
  %1354 = vmatprep.subr.bf16.mxu0 0
  %1355 = vmatpush1.bf16.msra.mxu0 %v1154
  %1356 = vmatprep.subr.bf16.mxu0 0
  %1357 = vmatpush1.bf16.msra.mxu0 %v1153
  %1358 = vmatprep.subr.bf16.mxu0 0
  %1359 = vmatpush1.bf16.msra.mxu0 %v1152
  %1360 = vmatprep.subr.bf16.mxu0 0
  %1361 = vmatpush2.bf16.msra.mxu0 0
  %1362 = vmatprep.subr.bf16.mxu0 0
  %1363 = vmatpush2.bf16.msra.mxu0 0
  %1364 = vmatprep.subr.bf16.mxu0 0
  %1365 = vmatpush2.bf16.msra.mxu0 0
  %1366 = vmatprep.subr.bf16.mxu0 0
  %1367 = vmatpush2.bf16.msra.mxu0 0
  %1368 = vmatprep.subr.bf16.mxu0 0
  %1369 = vmatpush2.bf16.msra.mxu0 0
  %1370 = vmatprep.subr.bf16.mxu0 0
  %1371 = vmatpush2.bf16.msra.mxu0 0
  %1372 = vmatprep.subr.bf16.mxu0 0
  %1373 = vmatpush2.bf16.msra.mxu0 0
  %1374 = vmatprep.subr.bf16.mxu0 0
  %1375 = vmatpush2.bf16.msra.mxu0 0
  %1376 = vmatprep.mubr.bf16.mxu0 0
  %1377 = vmatmul.mubr.bf16.gmra.mxu0 %v1303
  %v1378 = vpop.f32.mrf.mxu0
  %v1379 = vadd.f32 %v1339, %v1378
  %v1380 = vpop.f32.mrf.mxu0
  %v1381 = vpop.f32.mrf.mxu0
  %v1382 = vpop.f32.mrf.mxu0
  %1383 = vdwg.mxu0
  %v1384 = vxor.u32 %v1379, 2147483648
  %v1385 = vmul.f32 %v1384, 1.442695
  %v1386 = vpow.pop %v1385
  %v1387 = vadd.f32 %v1386, 1.0
  %v1388 = vrcp.pop %v1387
  %v1389 = vmul.f32 1.0, %v1388
  %v1390 = vtanh.pop %v1379
  %v1391 = vmul.f32 %v1389, %v1225
  %1393 = vrot.lane.b32.xlu0 %v1390, 64
  %v1394 = vpop.permute.xlu0 %1393
  %v1396 = vmul.f32 %v1389, %v1394
  %1398 = vrot.lane.b32.xlu0 %v1396, 32
  %v1399 = vpop.permute.xlu0 %1398
  %v1401 = vadd.f32 %v1391, %v1399
  %v1402 = vtanh.pop %v1401
  %1404 = vrot.lane.b32.xlu0 %v1402, 64
  %v1405 = vpop.permute.xlu0 %1404
  %v1407 = vmul.f32 %v1389, %v1405
  %v1408 = vpack.c.bf16 %v1407, %v1407
  %1410 = vrot.lane.b32.xlu0 %v1408, 32
  %v1411 = vpop.permute.xlu0 %1410
  %v1413 = vsel %vm190, %v1411, 0
  %1415 = vmatprep.subr.bf16.mxu0 0
  %1416 = vmatpush1.bf16.msra.mxu0 0
  %1417 = vmatprep.subr.bf16.mxu0 0
  %1418 = vmatpush1.bf16.msra.mxu0 0
  %1419 = vmatprep.subr.bf16.mxu0 0
  %1420 = vmatpush1.bf16.msra.mxu0 0
  %1421 = vmatprep.subr.bf16.mxu0 0
  %1422 = vmatpush1.bf16.msra.mxu0 0
  %1423 = vmatprep.subr.bf16.mxu0 0
  %1424 = vmatpush1.bf16.msra.mxu0 0
  %1425 = vmatprep.subr.bf16.mxu0 0
  %1426 = vmatpush1.bf16.msra.mxu0 0
  %1427 = vmatprep.subr.bf16.mxu0 0
  %1428 = vmatpush1.bf16.msra.mxu0 %v1251
  %1429 = vmatprep.subr.bf16.mxu0 0
  %1430 = vmatpush1.bf16.msra.mxu0 %v1250
  %1431 = vmatprep.subr.bf16.mxu0 0
  %1432 = vmatpush2.bf16.msra.mxu0 0
  %1433 = vmatprep.subr.bf16.mxu0 0
  %1434 = vmatpush2.bf16.msra.mxu0 0
  %1435 = vmatprep.subr.bf16.mxu0 0
  %1436 = vmatpush2.bf16.msra.mxu0 0
  %1437 = vmatprep.subr.bf16.mxu0 0
  %1438 = vmatpush2.bf16.msra.mxu0 0
  %1439 = vmatprep.subr.bf16.mxu0 0
  %1440 = vmatpush2.bf16.msra.mxu0 0
  %1441 = vmatprep.subr.bf16.mxu0 0
  %1442 = vmatpush2.bf16.msra.mxu0 0
  %1443 = vmatprep.subr.bf16.mxu0 0
  %1444 = vmatpush2.bf16.msra.mxu0 0
  %1445 = vmatprep.subr.bf16.mxu0 0
  %1446 = vmatpush2.bf16.msra.mxu0 0
  %1447 = vmatprep.mubr.bf16.mxu0 0
  %1448 = vmatmul.mubr.bf16.gmra.mxu0 %v1413
  %v1449 = vpop.f32.mrf.mxu0
  %v1450 = vadd.f32 %v1237, %v1449
  %v1451 = vpop.f32.mrf.mxu0
  %v1452 = vpop.f32.mrf.mxu0
  %v1453 = vpop.f32.mrf.mxu0
  %1454 = vdwg.mxu0
  %s1455 = scalar_lea.vmem %s15, 8
  %1456 = vst [vmem:[%s1455] sm:$0xff] %v1450
  %1457 = vmax.xlane.f32.xlu0 %v1450
  %v1458 = vpop.xlane.xlu0 %1457
  %vm1459 = vcmp.eq.f32.partialorder %v1450, %v1458
  %v1460 = vsel %vm1459, 1, 0
  %v1461 = vcvt.s32.f32 %v1460
  %v1462 = vpack.c.bf16 %v1461, %v1461
  %1463 = vmatprep.subr.bf16.mxu0 0
  %1464 = vmatpush1.bf16.msra.mxu0 0
  %1465 = vmatprep.subr.bf16.mxu0 0
  %1466 = vmatpush1.bf16.msra.mxu0 0
  %1467 = vmatprep.subr.bf16.mxu0 0
  %1468 = vmatpush1.bf16.msra.mxu0 0
  %1469 = vmatprep.subr.bf16.mxu0 0
  %1470 = vmatpush1.bf16.msra.mxu0 0
  %1471 = vmatprep.subr.bf16.mxu0 0
  %1472 = vmatpush1.bf16.msra.mxu0 0
  %1473 = vmatprep.subr.bf16.mxu0 0
  %1474 = vmatpush1.bf16.msra.mxu0 0
  %1475 = vmatprep.subr.bf16.mxu0 0
  %1476 = vmatpush1.bf16.msra.mxu0 %v1074
  %1477 = vmatprep.subr.bf16.mxu0 0
  %1478 = vmatpush1.bf16.msra.mxu0 %v1073
  %1479 = vmatprep.subr.bf16.mxu0 0
  %1480 = vmatpush2.bf16.msra.mxu0 0
  %1481 = vmatprep.subr.bf16.mxu0 0
  %1482 = vmatpush2.bf16.msra.mxu0 0
  %1483 = vmatprep.subr.bf16.mxu0 0
  %1484 = vmatpush2.bf16.msra.mxu0 0
  %1485 = vmatprep.subr.bf16.mxu0 0
  %1486 = vmatpush2.bf16.msra.mxu0 0
  %1487 = vmatprep.subr.bf16.mxu0 0
  %1488 = vmatpush2.bf16.msra.mxu0 0
  %1489 = vmatprep.subr.bf16.mxu0 0
  %1490 = vmatpush2.bf16.msra.mxu0 0
  %1491 = vmatprep.subr.bf16.mxu0 0
  %1492 = vmatpush2.bf16.msra.mxu0 0
  %1493 = vmatprep.subr.bf16.mxu0 0
  %1494 = vmatpush2.bf16.msra.mxu0 0
  %1495 = vmatprep.mubr.bf16.mxu0 0
  %1496 = vmatmul.mubr.bf16.gmra.mxu0 %v1413
  %v1497 = vpop.f32.mrf.mxu0
  %v1498 = vadd.f32 0.0, %v1497
  %v1499 = vpop.f32.mrf.mxu0
  %v1500 = vpop.f32.mrf.mxu0
  %v1501 = vpop.f32.mrf.mxu0
  %1502 = vdwg.mxu0
  %1503 = vmatprep.subr.bf16.mxu0 0
  %1504 = vmatpush1.bf16.msra.mxu0 %v1159
  %1505 = vmatprep.subr.bf16.mxu0 0
  %1506 = vmatpush1.bf16.msra.mxu0 %v1158
  %1507 = vmatprep.subr.bf16.mxu0 0
  %1508 = vmatpush1.bf16.msra.mxu0 %v1157
  %1509 = vmatprep.subr.bf16.mxu0 0
  %1510 = vmatpush1.bf16.msra.mxu0 %v1156
  %1511 = vmatprep.subr.bf16.mxu0 0
  %1512 = vmatpush1.bf16.msra.mxu0 %v1155
  %1513 = vmatprep.subr.bf16.mxu0 0
  %1514 = vmatpush1.bf16.msra.mxu0 %v1154
  %1515 = vmatprep.subr.bf16.mxu0 0
  %1516 = vmatpush1.bf16.msra.mxu0 %v1153
  %1517 = vmatprep.subr.bf16.mxu0 0
  %1518 = vmatpush1.bf16.msra.mxu0 %v1152
  %1519 = vmatprep.subr.bf16.mxu0 0
  %1520 = vmatpush2.bf16.msra.mxu0 0
  %1521 = vmatprep.subr.bf16.mxu0 0
  %1522 = vmatpush2.bf16.msra.mxu0 0
  %1523 = vmatprep.subr.bf16.mxu0 0
  %1524 = vmatpush2.bf16.msra.mxu0 0
  %1525 = vmatprep.subr.bf16.mxu0 0
  %1526 = vmatpush2.bf16.msra.mxu0 0
  %1527 = vmatprep.subr.bf16.mxu0 0
  %1528 = vmatpush2.bf16.msra.mxu0 0
  %1529 = vmatprep.subr.bf16.mxu0 0
  %1530 = vmatpush2.bf16.msra.mxu0 0
  %1531 = vmatprep.subr.bf16.mxu0 0
  %1532 = vmatpush2.bf16.msra.mxu0 0
  %1533 = vmatprep.subr.bf16.mxu0 0
  %1534 = vmatpush2.bf16.msra.mxu0 0
  %1535 = vmatprep.mubr.bf16.mxu0 0
  %1536 = vmatmul.mubr.bf16.gmra.mxu0 %v1462
  %v1537 = vpop.f32.mrf.mxu0
  %v1538 = vadd.f32 %v1498, %v1537
  %v1539 = vpop.f32.mrf.mxu0
  %v1540 = vpop.f32.mrf.mxu0
  %v1541 = vpop.f32.mrf.mxu0
  %1542 = vdwg.mxu0
  %v1543 = vxor.u32 %v1538, 2147483648
  %v1544 = vmul.f32 %v1543, 1.442695
  %v1545 = vpow.pop %v1544
  %v1546 = vadd.f32 %v1545, 1.0
  %v1547 = vrcp.pop %v1546
  %v1548 = vmul.f32 1.0, %v1547
  %v1549 = vtanh.pop %v1538
  %v1550 = vmul.f32 %v1548, %v1401
  %1552 = vrot.lane.b32.xlu0 %v1549, 64
  %v1553 = vpop.permute.xlu0 %1552
  %v1555 = vmul.f32 %v1548, %v1553
  %1557 = vrot.lane.b32.xlu0 %v1555, 32
  %v1558 = vpop.permute.xlu0 %1557
  %v1560 = vadd.f32 %v1550, %v1558
  %v1561 = vtanh.pop %v1560
  %1563 = vrot.lane.b32.xlu0 %v1561, 64
  %v1564 = vpop.permute.xlu0 %1563
  %v1566 = vmul.f32 %v1548, %v1564
  %v1567 = vpack.c.bf16 %v1566, %v1566
  %1569 = vrot.lane.b32.xlu0 %v1567, 32
  %v1570 = vpop.permute.xlu0 %1569
  %v1572 = vsel %vm190, %v1570, 0
  %1574 = vmatprep.subr.bf16.mxu0 0
  %1575 = vmatpush1.bf16.msra.mxu0 0
  %1576 = vmatprep.subr.bf16.mxu0 0
  %1577 = vmatpush1.bf16.msra.mxu0 0
  %1578 = vmatprep.subr.bf16.mxu0 0
  %1579 = vmatpush1.bf16.msra.mxu0 0
  %1580 = vmatprep.subr.bf16.mxu0 0
  %1581 = vmatpush1.bf16.msra.mxu0 0
  %1582 = vmatprep.subr.bf16.mxu0 0
  %1583 = vmatpush1.bf16.msra.mxu0 0
  %1584 = vmatprep.subr.bf16.mxu0 0
  %1585 = vmatpush1.bf16.msra.mxu0 0
  %1586 = vmatprep.subr.bf16.mxu0 0
  %1587 = vmatpush1.bf16.msra.mxu0 %v1251
  %1588 = vmatprep.subr.bf16.mxu0 0
  %1589 = vmatpush1.bf16.msra.mxu0 %v1250
  %1590 = vmatprep.subr.bf16.mxu0 0
  %1591 = vmatpush2.bf16.msra.mxu0 0
  %1592 = vmatprep.subr.bf16.mxu0 0
  %1593 = vmatpush2.bf16.msra.mxu0 0
  %1594 = vmatprep.subr.bf16.mxu0 0
  %1595 = vmatpush2.bf16.msra.mxu0 0
  %1596 = vmatprep.subr.bf16.mxu0 0
  %1597 = vmatpush2.bf16.msra.mxu0 0
  %1598 = vmatprep.subr.bf16.mxu0 0
  %1599 = vmatpush2.bf16.msra.mxu0 0
  %1600 = vmatprep.subr.bf16.mxu0 0
  %1601 = vmatpush2.bf16.msra.mxu0 0
  %1602 = vmatprep.subr.bf16.mxu0 0
  %1603 = vmatpush2.bf16.msra.mxu0 0
  %1604 = vmatprep.subr.bf16.mxu0 0
  %1605 = vmatpush2.bf16.msra.mxu0 0
  %1606 = vmatprep.mubr.bf16.mxu0 0
  %1607 = vmatmul.mubr.bf16.gmra.mxu0 %v1572
  %v1608 = vpop.f32.mrf.mxu0
  %v1609 = vadd.f32 %v1237, %v1608
  %v1610 = vpop.f32.mrf.mxu0
  %v1611 = vpop.f32.mrf.mxu0
  %v1612 = vpop.f32.mrf.mxu0
  %1613 = vdwg.mxu0
  %s1614 = scalar_lea.vmem %s15, 16
  %1615 = vst [vmem:[%s1614] sm:$0xff] %v1609
  %1616 = vmax.xlane.f32.xlu0 %v1609
  %v1617 = vpop.xlane.xlu0 %1616
  %vm1618 = vcmp.eq.f32.partialorder %v1609, %v1617
  %v1619 = vsel %vm1618, 1, 0
  %v1620 = vcvt.s32.f32 %v1619
  %v1621 = vpack.c.bf16 %v1620, %v1620
  %1622 = vmatprep.subr.bf16.mxu0 0
  %1623 = vmatpush1.bf16.msra.mxu0 0
  %1624 = vmatprep.subr.bf16.mxu0 0
  %1625 = vmatpush1.bf16.msra.mxu0 0
  %1626 = vmatprep.subr.bf16.mxu0 0
  %1627 = vmatpush1.bf16.msra.mxu0 0
  %1628 = vmatprep.subr.bf16.mxu0 0
  %1629 = vmatpush1.bf16.msra.mxu0 0
  %1630 = vmatprep.subr.bf16.mxu0 0
  %1631 = vmatpush1.bf16.msra.mxu0 0
  %1632 = vmatprep.subr.bf16.mxu0 0
  %1633 = vmatpush1.bf16.msra.mxu0 0
  %1634 = vmatprep.subr.bf16.mxu0 0
  %1635 = vmatpush1.bf16.msra.mxu0 %v1074
  %1636 = vmatprep.subr.bf16.mxu0 0
  %1637 = vmatpush1.bf16.msra.mxu0 %v1073
  %1638 = vmatprep.subr.bf16.mxu0 0
  %1639 = vmatpush2.bf16.msra.mxu0 0
  %1640 = vmatprep.subr.bf16.mxu0 0
  %1641 = vmatpush2.bf16.msra.mxu0 0
  %1642 = vmatprep.subr.bf16.mxu0 0
  %1643 = vmatpush2.bf16.msra.mxu0 0
  %1644 = vmatprep.subr.bf16.mxu0 0
  %1645 = vmatpush2.bf16.msra.mxu0 0
  %1646 = vmatprep.subr.bf16.mxu0 0
  %1647 = vmatpush2.bf16.msra.mxu0 0
  %1648 = vmatprep.subr.bf16.mxu0 0
  %1649 = vmatpush2.bf16.msra.mxu0 0
  %1650 = vmatprep.subr.bf16.mxu0 0
  %1651 = vmatpush2.bf16.msra.mxu0 0
  %1652 = vmatprep.subr.bf16.mxu0 0
  %1653 = vmatpush2.bf16.msra.mxu0 0
  %1654 = vmatprep.mubr.bf16.mxu0 0
  %1655 = vmatmul.mubr.bf16.gmra.mxu0 %v1572
  %v1656 = vpop.f32.mrf.mxu0
  %v1657 = vadd.f32 0.0, %v1656
  %v1658 = vpop.f32.mrf.mxu0
  %v1659 = vpop.f32.mrf.mxu0
  %v1660 = vpop.f32.mrf.mxu0
  %1661 = vdwg.mxu0
  %1662 = vmatprep.subr.bf16.mxu0 0
  %1663 = vmatpush1.bf16.msra.mxu0 %v1159
  %1664 = vmatprep.subr.bf16.mxu0 0
  %1665 = vmatpush1.bf16.msra.mxu0 %v1158
  %1666 = vmatprep.subr.bf16.mxu0 0
  %1667 = vmatpush1.bf16.msra.mxu0 %v1157
  %1668 = vmatprep.subr.bf16.mxu0 0
  %1669 = vmatpush1.bf16.msra.mxu0 %v1156
  %1670 = vmatprep.subr.bf16.mxu0 0
  %1671 = vmatpush1.bf16.msra.mxu0 %v1155
  %1672 = vmatprep.subr.bf16.mxu0 0
  %1673 = vmatpush1.bf16.msra.mxu0 %v1154
  %1674 = vmatprep.subr.bf16.mxu0 0
  %1675 = vmatpush1.bf16.msra.mxu0 %v1153
  %1676 = vmatprep.subr.bf16.mxu0 0
  %1677 = vmatpush1.bf16.msra.mxu0 %v1152
  %1678 = vmatprep.subr.bf16.mxu0 0
  %1679 = vmatpush2.bf16.msra.mxu0 0
  %1680 = vmatprep.subr.bf16.mxu0 0
  %1681 = vmatpush2.bf16.msra.mxu0 0
  %1682 = vmatprep.subr.bf16.mxu0 0
  %1683 = vmatpush2.bf16.msra.mxu0 0
  %1684 = vmatprep.subr.bf16.mxu0 0
  %1685 = vmatpush2.bf16.msra.mxu0 0
  %1686 = vmatprep.subr.bf16.mxu0 0
  %1687 = vmatpush2.bf16.msra.mxu0 0
  %1688 = vmatprep.subr.bf16.mxu0 0
  %1689 = vmatpush2.bf16.msra.mxu0 0
  %1690 = vmatprep.subr.bf16.mxu0 0
  %1691 = vmatpush2.bf16.msra.mxu0 0
  %1692 = vmatprep.subr.bf16.mxu0 0
  %1693 = vmatpush2.bf16.msra.mxu0 0
  %1694 = vmatprep.mubr.bf16.mxu0 0
  %1695 = vmatmul.mubr.bf16.gmra.mxu0 %v1621
  %v1696 = vpop.f32.mrf.mxu0
  %v1697 = vadd.f32 %v1657, %v1696
  %v1698 = vpop.f32.mrf.mxu0
  %v1699 = vpop.f32.mrf.mxu0
  %v1700 = vpop.f32.mrf.mxu0
  %1701 = vdwg.mxu0
  %v1702 = vxor.u32 %v1697, 2147483648
  %v1703 = vmul.f32 %v1702, 1.442695
  %v1704 = vpow.pop %v1703
  %v1705 = vadd.f32 %v1704, 1.0
  %v1706 = vrcp.pop %v1705
  %v1707 = vmul.f32 1.0, %v1706
  %v1708 = vtanh.pop %v1697
  %v1709 = vmul.f32 %v1707, %v1560
  %1711 = vrot.lane.b32.xlu0 %v1708, 64
  %v1712 = vpop.permute.xlu0 %1711
  %v1714 = vmul.f32 %v1707, %v1712
  %1716 = vrot.lane.b32.xlu0 %v1714, 32
  %v1717 = vpop.permute.xlu0 %1716
  %v1719 = vadd.f32 %v1709, %v1717
  %v1720 = vtanh.pop %v1719
  %1722 = vrot.lane.b32.xlu0 %v1720, 64
  %v1723 = vpop.permute.xlu0 %1722
  %v1725 = vmul.f32 %v1707, %v1723
  %v1726 = vpack.c.bf16 %v1725, %v1725
  %1728 = vrot.lane.b32.xlu0 %v1726, 32
  %v1729 = vpop.permute.xlu0 %1728
  %v1731 = vsel %vm190, %v1729, 0
  %1733 = vmatprep.subr.bf16.mxu0 0
  %1734 = vmatpush1.bf16.msra.mxu0 0
  %1735 = vmatprep.subr.bf16.mxu0 0
  %1736 = vmatpush1.bf16.msra.mxu0 0
  %1737 = vmatprep.subr.bf16.mxu0 0
  %1738 = vmatpush1.bf16.msra.mxu0 0
  %1739 = vmatprep.subr.bf16.mxu0 0
  %1740 = vmatpush1.bf16.msra.mxu0 0
  %1741 = vmatprep.subr.bf16.mxu0 0
  %1742 = vmatpush1.bf16.msra.mxu0 0
  %1743 = vmatprep.subr.bf16.mxu0 0
  %1744 = vmatpush1.bf16.msra.mxu0 0
  %1745 = vmatprep.subr.bf16.mxu0 0
  %1746 = vmatpush1.bf16.msra.mxu0 %v1251
  %1747 = vmatprep.subr.bf16.mxu0 0
  %1748 = vmatpush1.bf16.msra.mxu0 %v1250
  %1749 = vmatprep.subr.bf16.mxu0 0
  %1750 = vmatpush2.bf16.msra.mxu0 0
  %1751 = vmatprep.subr.bf16.mxu0 0
  %1752 = vmatpush2.bf16.msra.mxu0 0
  %1753 = vmatprep.subr.bf16.mxu0 0
  %1754 = vmatpush2.bf16.msra.mxu0 0
  %1755 = vmatprep.subr.bf16.mxu0 0
  %1756 = vmatpush2.bf16.msra.mxu0 0
  %1757 = vmatprep.subr.bf16.mxu0 0
  %1758 = vmatpush2.bf16.msra.mxu0 0
  %1759 = vmatprep.subr.bf16.mxu0 0
  %1760 = vmatpush2.bf16.msra.mxu0 0
  %1761 = vmatprep.subr.bf16.mxu0 0
  %1762 = vmatpush2.bf16.msra.mxu0 0
  %1763 = vmatprep.subr.bf16.mxu0 0
  %1764 = vmatpush2.bf16.msra.mxu0 0
  %1765 = vmatprep.mubr.bf16.mxu0 0
  %1766 = vmatmul.mubr.bf16.gmra.mxu0 %v1731
  %v1767 = vpop.f32.mrf.mxu0
  %v1768 = vadd.f32 %v1237, %v1767
  %v1769 = vpop.f32.mrf.mxu0
  %v1770 = vpop.f32.mrf.mxu0
  %v1771 = vpop.f32.mrf.mxu0
  %1772 = vdwg.mxu0
  %s1773 = scalar_lea.vmem %s15, 24
  %1774 = vst [vmem:[%s1773] sm:$0xff] %v1768
  %1775 = vmax.xlane.f32.xlu0 %v1768
  %v1776 = vpop.xlane.xlu0 %1775
  %vm1777 = vcmp.eq.f32.partialorder %v1768, %v1776
  %v1778 = vsel %vm1777, 1, 0
  %v1779 = vcvt.s32.f32 %v1778
  %v1780 = vpack.c.bf16 %v1779, %v1779
  %1781 = vmatprep.subr.bf16.mxu0 0
  %1782 = vmatpush1.bf16.msra.mxu0 0
  %1783 = vmatprep.subr.bf16.mxu0 0
  %1784 = vmatpush1.bf16.msra.mxu0 0
  %1785 = vmatprep.subr.bf16.mxu0 0
  %1786 = vmatpush1.bf16.msra.mxu0 0
  %1787 = vmatprep.subr.bf16.mxu0 0
  %1788 = vmatpush1.bf16.msra.mxu0 0
  %1789 = vmatprep.subr.bf16.mxu0 0
  %1790 = vmatpush1.bf16.msra.mxu0 0
  %1791 = vmatprep.subr.bf16.mxu0 0
  %1792 = vmatpush1.bf16.msra.mxu0 0
  %1793 = vmatprep.subr.bf16.mxu0 0
  %1794 = vmatpush1.bf16.msra.mxu0 %v1074
  %1795 = vmatprep.subr.bf16.mxu0 0
  %1796 = vmatpush1.bf16.msra.mxu0 %v1073
  %1797 = vmatprep.subr.bf16.mxu0 0
  %1798 = vmatpush2.bf16.msra.mxu0 0
  %1799 = vmatprep.subr.bf16.mxu0 0
  %1800 = vmatpush2.bf16.msra.mxu0 0
  %1801 = vmatprep.subr.bf16.mxu0 0
  %1802 = vmatpush2.bf16.msra.mxu0 0
  %1803 = vmatprep.subr.bf16.mxu0 0
  %1804 = vmatpush2.bf16.msra.mxu0 0
  %1805 = vmatprep.subr.bf16.mxu0 0
  %1806 = vmatpush2.bf16.msra.mxu0 0
  %1807 = vmatprep.subr.bf16.mxu0 0
  %1808 = vmatpush2.bf16.msra.mxu0 0
  %1809 = vmatprep.subr.bf16.mxu0 0
  %1810 = vmatpush2.bf16.msra.mxu0 0
  %1811 = vmatprep.subr.bf16.mxu0 0
  %1812 = vmatpush2.bf16.msra.mxu0 0
  %1813 = vmatprep.mubr.bf16.mxu0 0
  %1814 = vmatmul.mubr.bf16.gmra.mxu0 %v1731
  %v1815 = vpop.f32.mrf.mxu0
  %v1816 = vadd.f32 0.0, %v1815
  %v1817 = vpop.f32.mrf.mxu0
  %v1818 = vpop.f32.mrf.mxu0
  %v1819 = vpop.f32.mrf.mxu0
  %1820 = vdwg.mxu0
  %1821 = vmatprep.subr.bf16.mxu0 0
  %1822 = vmatpush1.bf16.msra.mxu0 %v1159
  %1823 = vmatprep.subr.bf16.mxu0 0
  %1824 = vmatpush1.bf16.msra.mxu0 %v1158
  %1825 = vmatprep.subr.bf16.mxu0 0
  %1826 = vmatpush1.bf16.msra.mxu0 %v1157
  %1827 = vmatprep.subr.bf16.mxu0 0
  %1828 = vmatpush1.bf16.msra.mxu0 %v1156
  %1829 = vmatprep.subr.bf16.mxu0 0
  %1830 = vmatpush1.bf16.msra.mxu0 %v1155
  %1831 = vmatprep.subr.bf16.mxu0 0
  %1832 = vmatpush1.bf16.msra.mxu0 %v1154
  %1833 = vmatprep.subr.bf16.mxu0 0
  %1834 = vmatpush1.bf16.msra.mxu0 %v1153
  %1835 = vmatprep.subr.bf16.mxu0 0
  %1836 = vmatpush1.bf16.msra.mxu0 %v1152
  %1837 = vmatprep.subr.bf16.mxu0 0
  %1838 = vmatpush2.bf16.msra.mxu0 0
  %1839 = vmatprep.subr.bf16.mxu0 0
  %1840 = vmatpush2.bf16.msra.mxu0 0
  %1841 = vmatprep.subr.bf16.mxu0 0
  %1842 = vmatpush2.bf16.msra.mxu0 0
  %1843 = vmatprep.subr.bf16.mxu0 0
  %1844 = vmatpush2.bf16.msra.mxu0 0
  %1845 = vmatprep.subr.bf16.mxu0 0
  %1846 = vmatpush2.bf16.msra.mxu0 0
  %1847 = vmatprep.subr.bf16.mxu0 0
  %1848 = vmatpush2.bf16.msra.mxu0 0
  %1849 = vmatprep.subr.bf16.mxu0 0
  %1850 = vmatpush2.bf16.msra.mxu0 0
  %1851 = vmatprep.subr.bf16.mxu0 0
  %1852 = vmatpush2.bf16.msra.mxu0 0
  %1853 = vmatprep.mubr.bf16.mxu0 0
  %1854 = vmatmul.mubr.bf16.gmra.mxu0 %v1780
  %v1855 = vpop.f32.mrf.mxu0
  %v1856 = vadd.f32 %v1816, %v1855
  %v1857 = vpop.f32.mrf.mxu0
  %v1858 = vpop.f32.mrf.mxu0
  %v1859 = vpop.f32.mrf.mxu0
  %1860 = vdwg.mxu0
  %v1861 = vxor.u32 %v1856, 2147483648
  %v1862 = vmul.f32 %v1861, 1.442695
  %v1863 = vpow.pop %v1862
  %v1864 = vadd.f32 %v1863, 1.0
  %v1865 = vrcp.pop %v1864
  %v1866 = vmul.f32 1.0, %v1865
  %v1867 = vtanh.pop %v1856
  %v1868 = vmul.f32 %v1866, %v1719
  %1870 = vrot.lane.b32.xlu0 %v1867, 64
  %v1871 = vpop.permute.xlu0 %1870
  %v1873 = vmul.f32 %v1866, %v1871
  %1875 = vrot.lane.b32.xlu0 %v1873, 32
  %v1876 = vpop.permute.xlu0 %1875
  %v1878 = vadd.f32 %v1868, %v1876
  %v1879 = vtanh.pop %v1878
  %1881 = vrot.lane.b32.xlu0 %v1879, 64
  %v1882 = vpop.permute.xlu0 %1881
  %v1884 = vmul.f32 %v1866, %v1882
  %v1885 = vpack.c.bf16 %v1884, %v1884
  %1887 = vrot.lane.b32.xlu0 %v1885, 32
  %v1888 = vpop.permute.xlu0 %1887
  %v1890 = vsel %vm190, %v1888, 0
  %1892 = vmatprep.subr.bf16.mxu0 0
  %1893 = vmatpush1.bf16.msra.mxu0 0
  %1894 = vmatprep.subr.bf16.mxu0 0
  %1895 = vmatpush1.bf16.msra.mxu0 0
  %1896 = vmatprep.subr.bf16.mxu0 0
  %1897 = vmatpush1.bf16.msra.mxu0 0
  %1898 = vmatprep.subr.bf16.mxu0 0
  %1899 = vmatpush1.bf16.msra.mxu0 0
  %1900 = vmatprep.subr.bf16.mxu0 0
  %1901 = vmatpush1.bf16.msra.mxu0 0
  %1902 = vmatprep.subr.bf16.mxu0 0
  %1903 = vmatpush1.bf16.msra.mxu0 0
  %1904 = vmatprep.subr.bf16.mxu0 0
  %1905 = vmatpush1.bf16.msra.mxu0 %v1251
  %1906 = vmatprep.subr.bf16.mxu0 0
  %1907 = vmatpush1.bf16.msra.mxu0 %v1250
  %1908 = vmatprep.subr.bf16.mxu0 0
  %1909 = vmatpush2.bf16.msra.mxu0 0
  %1910 = vmatprep.subr.bf16.mxu0 0
  %1911 = vmatpush2.bf16.msra.mxu0 0
  %1912 = vmatprep.subr.bf16.mxu0 0
  %1913 = vmatpush2.bf16.msra.mxu0 0
  %1914 = vmatprep.subr.bf16.mxu0 0
  %1915 = vmatpush2.bf16.msra.mxu0 0
  %1916 = vmatprep.subr.bf16.mxu0 0
  %1917 = vmatpush2.bf16.msra.mxu0 0
  %1918 = vmatprep.subr.bf16.mxu0 0
  %1919 = vmatpush2.bf16.msra.mxu0 0
  %1920 = vmatprep.subr.bf16.mxu0 0
  %1921 = vmatpush2.bf16.msra.mxu0 0
  %1922 = vmatprep.subr.bf16.mxu0 0
  %1923 = vmatpush2.bf16.msra.mxu0 0
  %1924 = vmatprep.mubr.bf16.mxu0 0
  %1925 = vmatmul.mubr.bf16.gmra.mxu0 %v1890
  %v1926 = vpop.f32.mrf.mxu0
  %v1927 = vadd.f32 %v1237, %v1926
  %v1928 = vpop.f32.mrf.mxu0
  %v1929 = vpop.f32.mrf.mxu0
  %v1930 = vpop.f32.mrf.mxu0
  %1931 = vdwg.mxu0
  %s1932 = scalar_lea.vmem %s15, 32
  %1933 = vst [vmem:[%s1932] sm:$0xff] %v1927
  %1934 = vmax.xlane.f32.xlu0 %v1927
  %v1935 = vpop.xlane.xlu0 %1934
  %vm1936 = vcmp.eq.f32.partialorder %v1927, %v1935
  %v1937 = vsel %vm1936, 1, 0
  %v1938 = vcvt.s32.f32 %v1937
  %v1939 = vpack.c.bf16 %v1938, %v1938
  %1940 = vmatprep.subr.bf16.mxu0 0
  %1941 = vmatpush1.bf16.msra.mxu0 0
  %1942 = vmatprep.subr.bf16.mxu0 0
  %1943 = vmatpush1.bf16.msra.mxu0 0
  %1944 = vmatprep.subr.bf16.mxu0 0
  %1945 = vmatpush1.bf16.msra.mxu0 0
  %1946 = vmatprep.subr.bf16.mxu0 0
  %1947 = vmatpush1.bf16.msra.mxu0 0
  %1948 = vmatprep.subr.bf16.mxu0 0
  %1949 = vmatpush1.bf16.msra.mxu0 0
  %1950 = vmatprep.subr.bf16.mxu0 0
  %1951 = vmatpush1.bf16.msra.mxu0 0
  %1952 = vmatprep.subr.bf16.mxu0 0
  %1953 = vmatpush1.bf16.msra.mxu0 %v1074
  %1954 = vmatprep.subr.bf16.mxu0 0
  %1955 = vmatpush1.bf16.msra.mxu0 %v1073
  %1956 = vmatprep.subr.bf16.mxu0 0
  %1957 = vmatpush2.bf16.msra.mxu0 0
  %1958 = vmatprep.subr.bf16.mxu0 0
  %1959 = vmatpush2.bf16.msra.mxu0 0
  %1960 = vmatprep.subr.bf16.mxu0 0
  %1961 = vmatpush2.bf16.msra.mxu0 0
  %1962 = vmatprep.subr.bf16.mxu0 0
  %1963 = vmatpush2.bf16.msra.mxu0 0
  %1964 = vmatprep.subr.bf16.mxu0 0
  %1965 = vmatpush2.bf16.msra.mxu0 0
  %1966 = vmatprep.subr.bf16.mxu0 0
  %1967 = vmatpush2.bf16.msra.mxu0 0
  %1968 = vmatprep.subr.bf16.mxu0 0
  %1969 = vmatpush2.bf16.msra.mxu0 0
  %1970 = vmatprep.subr.bf16.mxu0 0
  %1971 = vmatpush2.bf16.msra.mxu0 0
  %1972 = vmatprep.mubr.bf16.mxu0 0
  %1973 = vmatmul.mubr.bf16.gmra.mxu0 %v1890
  %v1974 = vpop.f32.mrf.mxu0
  %v1975 = vadd.f32 0.0, %v1974
  %v1976 = vpop.f32.mrf.mxu0
  %v1977 = vpop.f32.mrf.mxu0
  %v1978 = vpop.f32.mrf.mxu0
  %1979 = vdwg.mxu0
  %1980 = vmatprep.subr.bf16.mxu0 0
  %1981 = vmatpush1.bf16.msra.mxu0 %v1159
  %1982 = vmatprep.subr.bf16.mxu0 0
  %1983 = vmatpush1.bf16.msra.mxu0 %v1158
  %1984 = vmatprep.subr.bf16.mxu0 0
  %1985 = vmatpush1.bf16.msra.mxu0 %v1157
  %1986 = vmatprep.subr.bf16.mxu0 0
  %1987 = vmatpush1.bf16.msra.mxu0 %v1156
  %1988 = vmatprep.subr.bf16.mxu0 0
  %1989 = vmatpush1.bf16.msra.mxu0 %v1155
  %1990 = vmatprep.subr.bf16.mxu0 0
  %1991 = vmatpush1.bf16.msra.mxu0 %v1154
  %1992 = vmatprep.subr.bf16.mxu0 0
  %1993 = vmatpush1.bf16.msra.mxu0 %v1153
  %1994 = vmatprep.subr.bf16.mxu0 0
  %1995 = vmatpush1.bf16.msra.mxu0 %v1152
  %1996 = vmatprep.subr.bf16.mxu0 0
  %1997 = vmatpush2.bf16.msra.mxu0 0
  %1998 = vmatprep.subr.bf16.mxu0 0
  %1999 = vmatpush2.bf16.msra.mxu0 0
  %2000 = vmatprep.subr.bf16.mxu0 0
  %2001 = vmatpush2.bf16.msra.mxu0 0
  %2002 = vmatprep.subr.bf16.mxu0 0
  %2003 = vmatpush2.bf16.msra.mxu0 0
  %2004 = vmatprep.subr.bf16.mxu0 0
  %2005 = vmatpush2.bf16.msra.mxu0 0
  %2006 = vmatprep.subr.bf16.mxu0 0
  %2007 = vmatpush2.bf16.msra.mxu0 0
  %2008 = vmatprep.subr.bf16.mxu0 0
  %2009 = vmatpush2.bf16.msra.mxu0 0
  %2010 = vmatprep.subr.bf16.mxu0 0
  %2011 = vmatpush2.bf16.msra.mxu0 0
  %2012 = vmatprep.mubr.bf16.mxu0 0
  %2013 = vmatmul.mubr.bf16.gmra.mxu0 %v1939
  %v2014 = vpop.f32.mrf.mxu0
  %v2015 = vadd.f32 %v1975, %v2014
  %v2016 = vpop.f32.mrf.mxu0
  %v2017 = vpop.f32.mrf.mxu0
  %v2018 = vpop.f32.mrf.mxu0
  %2019 = vdwg.mxu0
  %v2020 = vxor.u32 %v2015, 2147483648
  %v2021 = vmul.f32 %v2020, 1.442695
  %v2022 = vpow.pop %v2021
  %v2023 = vadd.f32 %v2022, 1.0
  %v2024 = vrcp.pop %v2023
  %v2025 = vmul.f32 1.0, %v2024
  %v2026 = vtanh.pop %v2015
  %v2027 = vmul.f32 %v2025, %v1878
  %2029 = vrot.lane.b32.xlu0 %v2026, 64
  %v2030 = vpop.permute.xlu0 %2029
  %v2032 = vmul.f32 %v2025, %v2030
  %2034 = vrot.lane.b32.xlu0 %v2032, 32
  %v2035 = vpop.permute.xlu0 %2034
  %v2037 = vadd.f32 %v2027, %v2035
  %v2038 = vtanh.pop %v2037
  %2040 = vrot.lane.b32.xlu0 %v2038, 64
  %v2041 = vpop.permute.xlu0 %2040
  %v2043 = vmul.f32 %v2025, %v2041
  %v2044 = vpack.c.bf16 %v2043, %v2043
  %2046 = vrot.lane.b32.xlu0 %v2044, 32
  %v2047 = vpop.permute.xlu0 %2046
  %v2049 = vsel %vm190, %v2047, 0
  %2051 = vmatprep.subr.bf16.mxu0 0
  %2052 = vmatpush1.bf16.msra.mxu0 0
  %2053 = vmatprep.subr.bf16.mxu0 0
  %2054 = vmatpush1.bf16.msra.mxu0 0
  %2055 = vmatprep.subr.bf16.mxu0 0
  %2056 = vmatpush1.bf16.msra.mxu0 0
  %2057 = vmatprep.subr.bf16.mxu0 0
  %2058 = vmatpush1.bf16.msra.mxu0 0
  %2059 = vmatprep.subr.bf16.mxu0 0
  %2060 = vmatpush1.bf16.msra.mxu0 0
  %2061 = vmatprep.subr.bf16.mxu0 0
  %2062 = vmatpush1.bf16.msra.mxu0 0
  %2063 = vmatprep.subr.bf16.mxu0 0
  %2064 = vmatpush1.bf16.msra.mxu0 %v1251
  %2065 = vmatprep.subr.bf16.mxu0 0
  %2066 = vmatpush1.bf16.msra.mxu0 %v1250
  %2067 = vmatprep.subr.bf16.mxu0 0
  %2068 = vmatpush2.bf16.msra.mxu0 0
  %2069 = vmatprep.subr.bf16.mxu0 0
  %2070 = vmatpush2.bf16.msra.mxu0 0
  %2071 = vmatprep.subr.bf16.mxu0 0
  %2072 = vmatpush2.bf16.msra.mxu0 0
  %2073 = vmatprep.subr.bf16.mxu0 0
  %2074 = vmatpush2.bf16.msra.mxu0 0
  %2075 = vmatprep.subr.bf16.mxu0 0
  %2076 = vmatpush2.bf16.msra.mxu0 0
  %2077 = vmatprep.subr.bf16.mxu0 0
  %2078 = vmatpush2.bf16.msra.mxu0 0
  %2079 = vmatprep.subr.bf16.mxu0 0
  %2080 = vmatpush2.bf16.msra.mxu0 0
  %2081 = vmatprep.subr.bf16.mxu0 0
  %2082 = vmatpush2.bf16.msra.mxu0 0
  %2083 = vmatprep.mubr.bf16.mxu0 0
  %2084 = vmatmul.mubr.bf16.gmra.mxu0 %v2049
  %v2085 = vpop.f32.mrf.mxu0
  %v2086 = vadd.f32 %v1237, %v2085
  %v2087 = vpop.f32.mrf.mxu0
  %v2088 = vpop.f32.mrf.mxu0
  %v2089 = vpop.f32.mrf.mxu0
  %2090 = vdwg.mxu0
  %s2091 = scalar_lea.vmem %s15, 40
  %2092 = vst [vmem:[%s2091] sm:$0xff] %v2086
  %2093 = vmax.xlane.f32.xlu0 %v2086
  %v2094 = vpop.xlane.xlu0 %2093
  %vm2095 = vcmp.eq.f32.partialorder %v2086, %v2094
  %v2096 = vsel %vm2095, 1, 0
  %v2097 = vcvt.s32.f32 %v2096
  %v2098 = vpack.c.bf16 %v2097, %v2097
  %2099 = vmatprep.subr.bf16.mxu0 0
  %2100 = vmatpush1.bf16.msra.mxu0 0
  %2101 = vmatprep.subr.bf16.mxu0 0
  %2102 = vmatpush1.bf16.msra.mxu0 0
  %2103 = vmatprep.subr.bf16.mxu0 0
  %2104 = vmatpush1.bf16.msra.mxu0 0
  %2105 = vmatprep.subr.bf16.mxu0 0
  %2106 = vmatpush1.bf16.msra.mxu0 0
  %2107 = vmatprep.subr.bf16.mxu0 0
  %2108 = vmatpush1.bf16.msra.mxu0 0
  %2109 = vmatprep.subr.bf16.mxu0 0
  %2110 = vmatpush1.bf16.msra.mxu0 0
  %2111 = vmatprep.subr.bf16.mxu0 0
  %2112 = vmatpush1.bf16.msra.mxu0 %v1074
  %2113 = vmatprep.subr.bf16.mxu0 0
  %2114 = vmatpush1.bf16.msra.mxu0 %v1073
  %2115 = vmatprep.subr.bf16.mxu0 0
  %2116 = vmatpush2.bf16.msra.mxu0 0
  %2117 = vmatprep.subr.bf16.mxu0 0
  %2118 = vmatpush2.bf16.msra.mxu0 0
  %2119 = vmatprep.subr.bf16.mxu0 0
  %2120 = vmatpush2.bf16.msra.mxu0 0
  %2121 = vmatprep.subr.bf16.mxu0 0
  %2122 = vmatpush2.bf16.msra.mxu0 0
  %2123 = vmatprep.subr.bf16.mxu0 0
  %2124 = vmatpush2.bf16.msra.mxu0 0
  %2125 = vmatprep.subr.bf16.mxu0 0
  %2126 = vmatpush2.bf16.msra.mxu0 0
  %2127 = vmatprep.subr.bf16.mxu0 0
  %2128 = vmatpush2.bf16.msra.mxu0 0
  %2129 = vmatprep.subr.bf16.mxu0 0
  %2130 = vmatpush2.bf16.msra.mxu0 0
  %2131 = vmatprep.mubr.bf16.mxu0 0
  %2132 = vmatmul.mubr.bf16.gmra.mxu0 %v2049
  %v2133 = vpop.f32.mrf.mxu0
  %v2134 = vadd.f32 0.0, %v2133
  %v2135 = vpop.f32.mrf.mxu0
  %v2136 = vpop.f32.mrf.mxu0
  %v2137 = vpop.f32.mrf.mxu0
  %2138 = vdwg.mxu0
  %2139 = vmatprep.subr.bf16.mxu0 0
  %2140 = vmatpush1.bf16.msra.mxu0 %v1159
  %2141 = vmatprep.subr.bf16.mxu0 0
  %2142 = vmatpush1.bf16.msra.mxu0 %v1158
  %2143 = vmatprep.subr.bf16.mxu0 0
  %2144 = vmatpush1.bf16.msra.mxu0 %v1157
  %2145 = vmatprep.subr.bf16.mxu0 0
  %2146 = vmatpush1.bf16.msra.mxu0 %v1156
  %2147 = vmatprep.subr.bf16.mxu0 0
  %2148 = vmatpush1.bf16.msra.mxu0 %v1155
  %2149 = vmatprep.subr.bf16.mxu0 0
  %2150 = vmatpush1.bf16.msra.mxu0 %v1154
  %2151 = vmatprep.subr.bf16.mxu0 0
  %2152 = vmatpush1.bf16.msra.mxu0 %v1153
  %2153 = vmatprep.subr.bf16.mxu0 0
  %2154 = vmatpush1.bf16.msra.mxu0 %v1152
  %2155 = vmatprep.subr.bf16.mxu0 0
  %2156 = vmatpush2.bf16.msra.mxu0 0
  %2157 = vmatprep.subr.bf16.mxu0 0
  %2158 = vmatpush2.bf16.msra.mxu0 0
  %2159 = vmatprep.subr.bf16.mxu0 0
  %2160 = vmatpush2.bf16.msra.mxu0 0
  %2161 = vmatprep.subr.bf16.mxu0 0
  %2162 = vmatpush2.bf16.msra.mxu0 0
  %2163 = vmatprep.subr.bf16.mxu0 0
  %2164 = vmatpush2.bf16.msra.mxu0 0
  %2165 = vmatprep.subr.bf16.mxu0 0
  %2166 = vmatpush2.bf16.msra.mxu0 0
  %2167 = vmatprep.subr.bf16.mxu0 0
  %2168 = vmatpush2.bf16.msra.mxu0 0
  %2169 = vmatprep.subr.bf16.mxu0 0
  %2170 = vmatpush2.bf16.msra.mxu0 0
  %2171 = vmatprep.mubr.bf16.mxu0 0
  %2172 = vmatmul.mubr.bf16.gmra.mxu0 %v2098
  %v2173 = vpop.f32.mrf.mxu0
  %v2174 = vadd.f32 %v2134, %v2173
  %v2175 = vpop.f32.mrf.mxu0
  %v2176 = vpop.f32.mrf.mxu0
  %v2177 = vpop.f32.mrf.mxu0
  %2178 = vdwg.mxu0
  %v2179 = vxor.u32 %v2174, 2147483648
  %v2180 = vmul.f32 %v2179, 1.442695
  %v2181 = vpow.pop %v2180
  %v2182 = vadd.f32 %v2181, 1.0
  %v2183 = vrcp.pop %v2182
  %v2184 = vmul.f32 1.0, %v2183
  %v2185 = vtanh.pop %v2174
  %v2186 = vmul.f32 %v2184, %v2037
  %2188 = vrot.lane.b32.xlu0 %v2185, 64
  %v2189 = vpop.permute.xlu0 %2188
  %v2191 = vmul.f32 %v2184, %v2189
  %2193 = vrot.lane.b32.xlu0 %v2191, 32
  %v2194 = vpop.permute.xlu0 %2193
  %v2196 = vadd.f32 %v2186, %v2194
  %v2197 = vtanh.pop %v2196
  %2199 = vrot.lane.b32.xlu0 %v2197, 64
  %v2200 = vpop.permute.xlu0 %2199
  %v2202 = vmul.f32 %v2184, %v2200
  %v2203 = vpack.c.bf16 %v2202, %v2202
  %2205 = vrot.lane.b32.xlu0 %v2203, 32
  %v2206 = vpop.permute.xlu0 %2205
  %v2208 = vsel %vm190, %v2206, 0
  %2210 = vmatprep.subr.bf16.mxu0 0
  %2211 = vmatpush1.bf16.msra.mxu0 0
  %2212 = vmatprep.subr.bf16.mxu0 0
  %2213 = vmatpush1.bf16.msra.mxu0 0
  %2214 = vmatprep.subr.bf16.mxu0 0
  %2215 = vmatpush1.bf16.msra.mxu0 0
  %2216 = vmatprep.subr.bf16.mxu0 0
  %2217 = vmatpush1.bf16.msra.mxu0 0
  %2218 = vmatprep.subr.bf16.mxu0 0
  %2219 = vmatpush1.bf16.msra.mxu0 0
  %2220 = vmatprep.subr.bf16.mxu0 0
  %2221 = vmatpush1.bf16.msra.mxu0 0
  %2222 = vmatprep.subr.bf16.mxu0 0
  %2223 = vmatpush1.bf16.msra.mxu0 %v1251
  %2224 = vmatprep.subr.bf16.mxu0 0
  %2225 = vmatpush1.bf16.msra.mxu0 %v1250
  %2226 = vmatprep.subr.bf16.mxu0 0
  %2227 = vmatpush2.bf16.msra.mxu0 0
  %2228 = vmatprep.subr.bf16.mxu0 0
  %2229 = vmatpush2.bf16.msra.mxu0 0
  %2230 = vmatprep.subr.bf16.mxu0 0
  %2231 = vmatpush2.bf16.msra.mxu0 0
  %2232 = vmatprep.subr.bf16.mxu0 0
  %2233 = vmatpush2.bf16.msra.mxu0 0
  %2234 = vmatprep.subr.bf16.mxu0 0
  %2235 = vmatpush2.bf16.msra.mxu0 0
  %2236 = vmatprep.subr.bf16.mxu0 0
  %2237 = vmatpush2.bf16.msra.mxu0 0
  %2238 = vmatprep.subr.bf16.mxu0 0
  %2239 = vmatpush2.bf16.msra.mxu0 0
  %2240 = vmatprep.subr.bf16.mxu0 0
  %2241 = vmatpush2.bf16.msra.mxu0 0
  %2242 = vmatprep.mubr.bf16.mxu0 0
  %2243 = vmatmul.mubr.bf16.gmra.mxu0 %v2208
  %v2244 = vpop.f32.mrf.mxu0
  %v2245 = vadd.f32 %v1237, %v2244
  %v2246 = vpop.f32.mrf.mxu0
  %v2247 = vpop.f32.mrf.mxu0
  %v2248 = vpop.f32.mrf.mxu0
  %2249 = vdwg.mxu0
  %s2250 = scalar_lea.vmem %s15, 48
  %2251 = vst [vmem:[%s2250] sm:$0xff] %v2245
  %2252 = vmax.xlane.f32.xlu0 %v2245
  %v2253 = vpop.xlane.xlu0 %2252
  %vm2254 = vcmp.eq.f32.partialorder %v2245, %v2253
  %v2255 = vsel %vm2254, 1, 0
  %v2256 = vcvt.s32.f32 %v2255
  %v2257 = vpack.c.bf16 %v2256, %v2256
  %2258 = vmatprep.subr.bf16.mxu0 0
  %2259 = vmatpush1.bf16.msra.mxu0 0
  %2260 = vmatprep.subr.bf16.mxu0 0
  %2261 = vmatpush1.bf16.msra.mxu0 0
  %2262 = vmatprep.subr.bf16.mxu0 0
  %2263 = vmatpush1.bf16.msra.mxu0 0
  %2264 = vmatprep.subr.bf16.mxu0 0
  %2265 = vmatpush1.bf16.msra.mxu0 0
  %2266 = vmatprep.subr.bf16.mxu0 0
  %2267 = vmatpush1.bf16.msra.mxu0 0
  %2268 = vmatprep.subr.bf16.mxu0 0
  %2269 = vmatpush1.bf16.msra.mxu0 0
  %2270 = vmatprep.subr.bf16.mxu0 0
  %2271 = vmatpush1.bf16.msra.mxu0 %v1074
  %2272 = vmatprep.subr.bf16.mxu0 0
  %2273 = vmatpush1.bf16.msra.mxu0 %v1073
  %2274 = vmatprep.subr.bf16.mxu0 0
  %2275 = vmatpush2.bf16.msra.mxu0 0
  %2276 = vmatprep.subr.bf16.mxu0 0
  %2277 = vmatpush2.bf16.msra.mxu0 0
  %2278 = vmatprep.subr.bf16.mxu0 0
  %2279 = vmatpush2.bf16.msra.mxu0 0
  %2280 = vmatprep.subr.bf16.mxu0 0
  %2281 = vmatpush2.bf16.msra.mxu0 0
  %2282 = vmatprep.subr.bf16.mxu0 0
  %2283 = vmatpush2.bf16.msra.mxu0 0
  %2284 = vmatprep.subr.bf16.mxu0 0
  %2285 = vmatpush2.bf16.msra.mxu0 0
  %2286 = vmatprep.subr.bf16.mxu0 0
  %2287 = vmatpush2.bf16.msra.mxu0 0
  %2288 = vmatprep.subr.bf16.mxu0 0
  %2289 = vmatpush2.bf16.msra.mxu0 0
  %2290 = vmatprep.mubr.bf16.mxu0 0
  %2291 = vmatmul.mubr.bf16.gmra.mxu0 %v2208
  %v2292 = vpop.f32.mrf.mxu0
  %v2293 = vadd.f32 0.0, %v2292
  %v2294 = vpop.f32.mrf.mxu0
  %v2295 = vpop.f32.mrf.mxu0
  %v2296 = vpop.f32.mrf.mxu0
  %2297 = vdwg.mxu0
  %2298 = vmatprep.subr.bf16.mxu0 0
  %2299 = vmatpush1.bf16.msra.mxu0 %v1159
  %2300 = vmatprep.subr.bf16.mxu0 0
  %2301 = vmatpush1.bf16.msra.mxu0 %v1158
  %2302 = vmatprep.subr.bf16.mxu0 0
  %2303 = vmatpush1.bf16.msra.mxu0 %v1157
  %2304 = vmatprep.subr.bf16.mxu0 0
  %2305 = vmatpush1.bf16.msra.mxu0 %v1156
  %2306 = vmatprep.subr.bf16.mxu0 0
  %2307 = vmatpush1.bf16.msra.mxu0 %v1155
  %2308 = vmatprep.subr.bf16.mxu0 0
  %2309 = vmatpush1.bf16.msra.mxu0 %v1154
  %2310 = vmatprep.subr.bf16.mxu0 0
  %2311 = vmatpush1.bf16.msra.mxu0 %v1153
  %2312 = vmatprep.subr.bf16.mxu0 0
  %2313 = vmatpush1.bf16.msra.mxu0 %v1152
  %2314 = vmatprep.subr.bf16.mxu0 0
  %2315 = vmatpush2.bf16.msra.mxu0 0
  %2316 = vmatprep.subr.bf16.mxu0 0
  %2317 = vmatpush2.bf16.msra.mxu0 0
  %2318 = vmatprep.subr.bf16.mxu0 0
  %2319 = vmatpush2.bf16.msra.mxu0 0
  %2320 = vmatprep.subr.bf16.mxu0 0
  %2321 = vmatpush2.bf16.msra.mxu0 0
  %2322 = vmatprep.subr.bf16.mxu0 0
  %2323 = vmatpush2.bf16.msra.mxu0 0
  %2324 = vmatprep.subr.bf16.mxu0 0
  %2325 = vmatpush2.bf16.msra.mxu0 0
  %2326 = vmatprep.subr.bf16.mxu0 0
  %2327 = vmatpush2.bf16.msra.mxu0 0
  %2328 = vmatprep.subr.bf16.mxu0 0
  %2329 = vmatpush2.bf16.msra.mxu0 0
  %2330 = vmatprep.mubr.bf16.mxu0 0
  %2331 = vmatmul.mubr.bf16.gmra.mxu0 %v2257
  %v2332 = vpop.f32.mrf.mxu0
  %v2333 = vadd.f32 %v2293, %v2332
  %v2334 = vpop.f32.mrf.mxu0
  %v2335 = vpop.f32.mrf.mxu0
  %v2336 = vpop.f32.mrf.mxu0
  %2337 = vdwg.mxu0
  %v2338 = vxor.u32 %v2333, 2147483648
  %v2339 = vmul.f32 %v2338, 1.442695
  %v2340 = vpow.pop %v2339
  %v2341 = vadd.f32 %v2340, 1.0
  %v2342 = vrcp.pop %v2341
  %v2343 = vmul.f32 1.0, %v2342
  %v2344 = vtanh.pop %v2333
  %v2345 = vmul.f32 %v2343, %v2196
  %2347 = vrot.lane.b32.xlu0 %v2344, 64
  %v2348 = vpop.permute.xlu0 %2347
  %v2350 = vmul.f32 %v2343, %v2348
  %2352 = vrot.lane.b32.xlu0 %v2350, 32
  %v2353 = vpop.permute.xlu0 %2352
  %v2355 = vadd.f32 %v2345, %v2353
  %v2356 = vtanh.pop %v2355
  %2358 = vrot.lane.b32.xlu0 %v2356, 64
  %v2359 = vpop.permute.xlu0 %2358
  %v2361 = vmul.f32 %v2343, %v2359
  %v2362 = vpack.c.bf16 %v2361, %v2361
  %2364 = vrot.lane.b32.xlu0 %v2362, 32
  %v2365 = vpop.permute.xlu0 %2364
  %v2367 = vsel %vm190, %v2365, 0
  %2369 = vmatprep.subr.bf16.mxu0 0
  %2370 = vmatpush1.bf16.msra.mxu0 0
  %2371 = vmatprep.subr.bf16.mxu0 0
  %2372 = vmatpush1.bf16.msra.mxu0 0
  %2373 = vmatprep.subr.bf16.mxu0 0
  %2374 = vmatpush1.bf16.msra.mxu0 0
  %2375 = vmatprep.subr.bf16.mxu0 0
  %2376 = vmatpush1.bf16.msra.mxu0 0
  %2377 = vmatprep.subr.bf16.mxu0 0
  %2378 = vmatpush1.bf16.msra.mxu0 0
  %2379 = vmatprep.subr.bf16.mxu0 0
  %2380 = vmatpush1.bf16.msra.mxu0 0
  %2381 = vmatprep.subr.bf16.mxu0 0
  %2382 = vmatpush1.bf16.msra.mxu0 %v1251
  %2383 = vmatprep.subr.bf16.mxu0 0
  %2384 = vmatpush1.bf16.msra.mxu0 %v1250
  %2385 = vmatprep.subr.bf16.mxu0 0
  %2386 = vmatpush2.bf16.msra.mxu0 0
  %2387 = vmatprep.subr.bf16.mxu0 0
  %2388 = vmatpush2.bf16.msra.mxu0 0
  %2389 = vmatprep.subr.bf16.mxu0 0
  %2390 = vmatpush2.bf16.msra.mxu0 0
  %2391 = vmatprep.subr.bf16.mxu0 0
  %2392 = vmatpush2.bf16.msra.mxu0 0
  %2393 = vmatprep.subr.bf16.mxu0 0
  %2394 = vmatpush2.bf16.msra.mxu0 0
  %2395 = vmatprep.subr.bf16.mxu0 0
  %2396 = vmatpush2.bf16.msra.mxu0 0
  %2397 = vmatprep.subr.bf16.mxu0 0
  %2398 = vmatpush2.bf16.msra.mxu0 0
  %2399 = vmatprep.subr.bf16.mxu0 0
  %2400 = vmatpush2.bf16.msra.mxu0 0
  %2401 = vmatprep.mubr.bf16.mxu0 0
  %2402 = vmatmul.mubr.bf16.gmra.mxu0 %v2367
  %v2403 = vpop.f32.mrf.mxu0
  %v2404 = vadd.f32 %v1237, %v2403
  %v2405 = vpop.f32.mrf.mxu0
  %v2406 = vpop.f32.mrf.mxu0
  %v2407 = vpop.f32.mrf.mxu0
  %2408 = vdwg.mxu0
  %s2409 = scalar_lea.vmem %s15, 56
  %2410 = vst [vmem:[%s2409] sm:$0xff] %v2404
  // Predicated region
  $region58: #{vqa_forward.1} parent=0 // pred_check
    _
  $region59: #{vqa_forward.1} parent=0 // pred_check_branch
    %2412 = sbr.rel (0) target = $region61
  $region60: #{vqa_forward.1} parent=0 // pred_region
    _
  $region61: #{vqa_forward.1} parent=0 // pred_fallthru
    _
  // Predicated region
  $region62: #{vqa_forward.1} parent=0 // pred_check
    _
  $region63: #{vqa_forward.1} parent=0 // pred_check_branch
    %2414 = sbr.rel (0) target = $region65
  $region64: #{vqa_forward.1} parent=0 // pred_region
    _
  $region65: #{vqa_forward.1} parent=0 // pred_fallthru
    _
  // Predicated region
  $region66: #{vqa_forward.1} parent=0 // pred_check
    _
  $region67: #{vqa_forward.1} parent=0 // pred_check_branch
    %2416 = sbr.rel (0) target = $region69
  $region68: #{vqa_forward.1} parent=0 // pred_region
    _
  $region69: #{vqa_forward.1} parent=0 // pred_fallthru
    _
  // Predicated region
  $region70: #{vqa_forward.1} parent=0 // pred_check
    _
  $region71: #{vqa_forward.1} parent=0 // pred_check_branch
    %2418 = sbr.rel (0) target = $region73
  $region72: #{vqa_forward.1} parent=0 // pred_region
    _
  $region73: #{vqa_forward.1} parent=0 // pred_fallthru
    _

</llo_original>
